<compile_context>
chip_gen: v7x
topology: tpu7x:2x2x1
jax: 0.10.0
libtpu: 0.0.40
codegen_flags: <defaults>
</compile_context>

<pallas_src>
import functools

import jax
import jax.numpy as jnp
import numpy as np
from jax.experimental import pallas as pl
from jax.experimental.pallas import tpu as pltpu  # noqa: F401  (TPU backend)

BN_EPS = 1e-5


# ----------------------------- Pallas kernel ------------------------------- #
def _encoder_kernel(x2d_ref, xp_ref, p1_ref, w2_ref, bn2_ref, w3_ref, bn3_ref,
                    o_ref, *, Mu, M3):
    """Whole Encoder forward in a single kernel invocation.

    x2d_ref : (N*H, W)        raw input pixels (layer-1 BN batch stats)
    xp_ref  : (Mu + 9*M3, 9)  3x3/stride-2 patches of the raw input.
                              rows 0:Mu          unique layer-2 output positions
                              rows Mu + t*M3 ... layer-3 tap t's positions
    p1_ref  : (3, C1)   rows = conv1 1x1 weight, BN1 gamma, BN1 beta
    w2_ref  : (9, C1, C2)  conv2 weight per tap (kh*3+kw, cin, cout)
    bn2_ref : (2, C2)   rows = BN2 gamma, beta
    w3_ref  : (9, C2, C3)
    bn3_ref : (2, C3)
    o_ref   : (M3, C3)  output rows ordered (n, oh, ow)

    Conv biases are omitted: training-mode BatchNorm cancels them exactly.
    """
    f32 = jnp.float32

    # ---- layer 1: 1x1 conv + train-BN + ReLU folded to a per-channel affine.
    x2d = x2d_ref[...]
    mean_x = jnp.mean(x2d, keepdims=True)                         # (1, 1)
    var_x = jnp.mean(x2d * x2d, keepdims=True) - mean_x * mean_x  # biased
    p1 = p1_ref[...]
    w1, g1, be1 = p1[0:1, :], p1[1:2, :], p1[2:3, :]              # (1, C1) each
    inv1 = jax.lax.rsqrt(var_x * w1 * w1 + BN_EPS)
    scale1 = w1 * inv1 * g1                                       # (1, C1)
    shift1 = be1 - mean_x * scale1                                # (1, C1)

    # ---- layer 2: 3x3/s2 conv as 9 tap matmuls (VPU affine+ReLU, then MXU).
    xp = xp_ref[...]                                              # (Mtot, 9)
    acc2 = None
    for t in range(9):
        y1_t = jnp.maximum(xp[:, t:t + 1] * scale1 + shift1, 0.0)   # (Mtot, C1)
        part = jnp.dot(y1_t, w2_ref[t], preferred_element_type=f32)  # (Mtot, C2)
        acc2 = part if acc2 is None else acc2 + part

    # BN2 batch stats over the Mu unique output positions only (single pass).
    a2u = acc2[0:Mu, :]
    mu2 = jnp.mean(a2u, axis=0, keepdims=True)
    var2 = jnp.mean(a2u * a2u, axis=0, keepdims=True) - mu2 * mu2
    bn2 = bn2_ref[...]
    g2, be2 = bn2[0:1, :], bn2[1:2, :]
    y2 = jnp.maximum(
        (acc2[Mu:, :] - mu2) * jax.lax.rsqrt(var2 + BN_EPS) * g2 + be2, 0.0)

    # ---- layer 3: 3x3/s2 conv; each tap is a contiguous row block of y2.
    acc3 = None
    for t in range(9):
        part = jnp.dot(y2[t * M3:(t + 1) * M3, :], w3_ref[t],
                       preferred_element_type=f32)                # (M3, C3)
        acc3 = part if acc3 is None else acc3 + part

    mu3 = jnp.mean(acc3, axis=0, keepdims=True)
    var3 = jnp.mean(acc3 * acc3, axis=0, keepdims=True) - mu3 * mu3
    bn3 = bn3_ref[...]
    g3, be3 = bn3[0:1, :], bn3[1:2, :]
    o_ref[...] = jnp.maximum(
        (acc3 - mu3) * jax.lax.rsqrt(var3 + BN_EPS) * g3 + be3, 0.0)


def _full_spec(shape):
    nd = len(shape)
    return pl.BlockSpec(shape, lambda i, _nd=nd: (0,) * _nd)


def _fused_encoder(x2d, xp, p1, w2k, bn2, w3k, bn3, Mu, M3):
    C3 = w3k.shape[-1]
    kernel = functools.partial(_encoder_kernel, Mu=Mu, M3=M3)
    return pl.pallas_call(
        kernel,
        out_shape=jax.ShapeDtypeStruct((M3, C3), jnp.float32),
        grid=(1,),
        in_specs=[_full_spec(a.shape)
                  for a in (x2d, xp, p1, w2k, bn2, w3k, bn3)],
        out_specs=_full_spec((M3, C3)),
    )(x2d, xp, p1, w2k, bn2, w3k, bn3)


# ------------------------------ JAX glue ----------------------------------- #
def _patch_row_indices(N, H, W):
    """Constant (numpy) gather indices building the fused kernel's patch matrix."""
    H2, W2 = (H - 3) // 2 + 1, (W - 3) // 2 + 1      # layer-2 output grid
    H3, W3 = (H2 - 3) // 2 + 1, (W2 - 3) // 2 + 1    # layer-3 output grid

    def flat(n, h, w):
        return n * H * W + h * W + w

    rows = []
    # Unique layer-2 output positions (for BN2 stats), raster order (n, h2, w2).
    for n in range(N):
        for h2 in range(H2):
            for w2 in range(W2):
                rows.append([flat(n, 2 * h2 + kh, 2 * w2 + kw)
                             for kh in range(3) for kw in range(3)])
    # Duplicated positions grouped by layer-3 tap: block t = kh3*3+kw3 holds the
    # layer-2 positions feeding that tap, ordered (n, oh3, ow3).
    for kh3 in range(3):
        for kw3 in range(3):
            for n in range(N):
                for oh in range(H3):
                    for ow in range(W3):
                        h2, w2 = 2 * oh + kh3, 2 * ow + kw3
                        rows.append([flat(n, 2 * h2 + kh, 2 * w2 + kw)
                                     for kh in range(3) for kw in range(3)])
    return np.asarray(rows, dtype=np.int32), (H2, W2, H3, W3)


def init_params(key):
    """Deterministic synthetic parameters. Conv weights stored as (kh, kw, Cin, Cout)."""
    shapes = [  # (k, Cin, Cout)
        (1, 1, 16),
        (3, 16, 32),
        (3, 32, 64),
    ]
    params = []
    for (k, cin, cout) in shapes:
        key, k1, k2, k3, k4 = jax.random.split(key, 5)
        w = 0.1 * jax.random.normal(k1, (k, k, cin, cout), jnp.float32)
        b = 0.1 * jax.random.normal(k2, (cout,), jnp.float32)
        g = 1.0 + 0.1 * jax.random.normal(k3, (cout,), jnp.float32)
        be = 0.1 * jax.random.normal(k4, (cout,), jnp.float32)
        params.append((w, b, g, be))
    return params


def encoder_forward(x_nchw, params):
    x = x_nchw.astype(jnp.float32)
    N, _, H, W = x.shape
    idx, (H2, W2, H3, W3) = _patch_row_indices(N, H, W)
    Mu, M3 = N * H2 * W2, N * H3 * W3

    (w1, _b1, g1, be1), (w2, _b2, g2, be2), (w3, _b3, g3, be3) = params
    C1, C2, C3 = w1.shape[-1], w2.shape[-1], w3.shape[-1]

    x_flat = x.reshape(N * H * W)
    xp = x_flat[idx]                         # (Mu + 9*M3, 9): one constant gather
    x2d = x.reshape(N * H, W)

    p1 = jnp.stack([w1.reshape(C1), g1, be1], axis=0)        # (3, C1)
    w2k = w2.reshape(9, C1, C2)                              # taps (kh*3+kw)
    bn2 = jnp.stack([g2, be2], axis=0)                       # (2, C2)
    w3k = w3.reshape(9, C2, C3)
    bn3 = jnp.stack([g3, be3], axis=0)                       # (2, C3)

    out = _fused_encoder(x2d, xp, p1, w2k, bn2, w3k, bn3, Mu, M3)  # (M3, C3)
    out = out.reshape(N, H3, W3, C3)
    return jnp.transpose(out, (0, 3, 1, 2))                  # -> NCHW


# -------------------------- pure-JAX reference ------------------------------ #
def ref_forward(x_nchw, params):
    x = x_nchw.astype(jnp.float32)
    for (w, b, g, be), stride in zip(params, (1, 2, 2)):
        y = jax.lax.conv_general_dilated(
            x, w, window_strides=(stride, stride), padding="VALID",
            dimension_numbers=("NCHW", "HWIO", "NCHW"))
        y = y + b.reshape(1, -1, 1, 1)
        mean = jnp.mean(y, axis=(0, 2, 3), keepdims=True)
        var = jnp.mean((y - mean) ** 2, axis=(0, 2, 3), keepdims=True)
        y = (y - mean) * jax.lax.rsqrt(var + BN_EPS) * g.reshape(1, -1, 1, 1) \
            + be.reshape(1, -1, 1, 1)
        x = jnp.maximum(y, 0.0)
    return x


if __name__ == "__main__":
    key = jax.random.PRNGKey(0)
    key, kx = jax.random.split(key)
    x = jax.random.normal(kx, (2, 1, 16, 16), jnp.float32)  # NCHW, like the torch module
    params = init_params(key)

    out = jax.jit(encoder_forward)(x, params)
    out = jax.block_until_ready(out)
    assert out.shape == (2, 64, 3, 3), out.shape

    ref = jax.block_until_ready(ref_forward(x, params))
    np.testing.assert_allclose(np.asarray(out), np.asarray(ref), rtol=1e-3, atol=1e-3)

    print("KERNEL_OK")
</pallas_src>

<mosaic_0001>
module attributes {stable_mosaic.version = 11 : i64} {
  func.func @_encoder_kernel(%arg0: i32, %arg1: memref<32x16xf32, #tpu.memory_space<vmem>>, %arg2: memref<260x9xf32, #tpu.memory_space<vmem>>, %arg3: memref<3x16xf32, #tpu.memory_space<vmem>>, %arg4: memref<9x16x32xf32, #tpu.memory_space<vmem>>, %arg5: memref<2x32xf32, #tpu.memory_space<vmem>>, %arg6: memref<9x32x64xf32, #tpu.memory_space<vmem>>, %arg7: memref<2x64xf32, #tpu.memory_space<vmem>>, %arg8: memref<18x64xf32, #tpu.memory_space<vmem>>) attributes {dimension_semantics = [#tpu.dimension_semantics<arbitrary>], iteration_bounds = array<i64: 1>, scalar_prefetch = 0 : i64, scratch_operands = 0 : i64, tpu.core_type = #tpu.core_type<tc>, window_params = [{pipeline_mode = #tpu.pipeline_mode<synchronous>, transform_indices = @transform_0, window_bounds = array<i64: 32, 16>}, {pipeline_mode = #tpu.pipeline_mode<synchronous>, transform_indices = @transform_1, window_bounds = array<i64: 260, 9>}, {pipeline_mode = #tpu.pipeline_mode<synchronous>, transform_indices = @transform_2, window_bounds = array<i64: 3, 16>}, {pipeline_mode = #tpu.pipeline_mode<synchronous>, transform_indices = @transform_3, window_bounds = array<i64: 9, 16, 32>}, {pipeline_mode = #tpu.pipeline_mode<synchronous>, transform_indices = @transform_4, window_bounds = array<i64: 2, 32>}, {pipeline_mode = #tpu.pipeline_mode<synchronous>, transform_indices = @transform_5, window_bounds = array<i64: 9, 32, 64>}, {pipeline_mode = #tpu.pipeline_mode<synchronous>, transform_indices = @transform_6, window_bounds = array<i64: 2, 64>}, {pipeline_mode = #tpu.pipeline_mode<synchronous>, transform_indices = @transform_7, window_bounds = array<i64: 18, 64>}]} {
    %c0 = arith.constant 0 : index
    %c0_0 = arith.constant 0 : index
    %0 = vector.load %arg1[%c0, %c0_0] : memref<32x16xf32, #tpu.memory_space<vmem>>, vector<32x16xf32>
    %1 = vector.shape_cast %0 : vector<32x16xf32> to vector<1x32x16xf32>
    %cst = arith.constant dense<0.000000e+00> : vector<1xf32>
    %2 = vector.multi_reduction <add>, %1, %cst [1, 2] : vector<1x32x16xf32> to vector<1xf32>
    %3 = vector.shape_cast %2 : vector<1xf32> to vector<1x1x1xf32>
    %4 = vector.extract %3[0, 0, 0] : f32 from vector<1x1x1xf32>
    %5 = vector.broadcast %4 : f32 to vector<1x1xf32>
    %cst_1 = arith.constant 5.120000e+02 : f32
    %6 = vector.broadcast %cst_1 : f32 to vector<1x1xf32>
    %7 = arith.divf %5, %6 : vector<1x1xf32>
    %8 = arith.mulf %0, %0 : vector<32x16xf32>
    %9 = vector.shape_cast %8 : vector<32x16xf32> to vector<1x32x16xf32>
    %cst_2 = arith.constant dense<0.000000e+00> : vector<1xf32>
    %10 = vector.multi_reduction <add>, %9, %cst_2 [1, 2] : vector<1x32x16xf32> to vector<1xf32>
    %11 = vector.shape_cast %10 : vector<1xf32> to vector<1x1x1xf32>
    %12 = vector.extract %11[0, 0, 0] : f32 from vector<1x1x1xf32>
    %13 = vector.broadcast %12 : f32 to vector<1x1xf32>
    %cst_3 = arith.constant 5.120000e+02 : f32
    %14 = vector.broadcast %cst_3 : f32 to vector<1x1xf32>
    %15 = arith.divf %13, %14 : vector<1x1xf32>
    %16 = arith.mulf %7, %7 : vector<1x1xf32>
    %17 = arith.subf %15, %16 : vector<1x1xf32>
    %c0_4 = arith.constant 0 : index
    %c0_5 = arith.constant 0 : index
    %18 = vector.load %arg3[%c0_4, %c0_5] : memref<3x16xf32, #tpu.memory_space<vmem>>, vector<3x16xf32>
    %19 = vector.extract_strided_slice %18 {offsets = [0, 0], sizes = [1, 16], strides = [1, 1]} : vector<3x16xf32> to vector<1x16xf32>
    %20 = vector.extract_strided_slice %18 {offsets = [1, 0], sizes = [1, 16], strides = [1, 1]} : vector<3x16xf32> to vector<1x16xf32>
    %21 = vector.extract_strided_slice %18 {offsets = [2, 0], sizes = [1, 16], strides = [1, 1]} : vector<3x16xf32> to vector<1x16xf32>
    %22 = vector.broadcast %17 : vector<1x1xf32> to vector<1x16xf32>
    %23 = arith.mulf %22, %19 : vector<1x16xf32>
    %24 = arith.mulf %23, %19 : vector<1x16xf32>
    %cst_6 = arith.constant 9.99999974E-6 : f32
    %25 = vector.broadcast %cst_6 : f32 to vector<1x16xf32>
    %26 = arith.addf %24, %25 : vector<1x16xf32>
    %27 = math.rsqrt %26 : vector<1x16xf32>
    %28 = arith.mulf %19, %27 : vector<1x16xf32>
    %29 = arith.mulf %28, %20 : vector<1x16xf32>
    %30 = vector.broadcast %7 : vector<1x1xf32> to vector<1x16xf32>
    %31 = arith.mulf %30, %29 : vector<1x16xf32>
    %32 = arith.subf %21, %31 : vector<1x16xf32>
    %c0_7 = arith.constant 0 : index
    %c0_8 = arith.constant 0 : index
    %33 = vector.load %arg2[%c0_7, %c0_8] : memref<260x9xf32, #tpu.memory_space<vmem>>, vector<260x9xf32>
    %34 = vector.extract_strided_slice %33 {offsets = [0, 0], sizes = [260, 1], strides = [1, 1]} : vector<260x9xf32> to vector<260x1xf32>
    %35 = vector.broadcast %34 : vector<260x1xf32> to vector<260x16xf32>
    %36 = vector.broadcast %29 : vector<1x16xf32> to vector<260x16xf32>
    %37 = arith.mulf %35, %36 : vector<260x16xf32>
    %38 = vector.broadcast %32 : vector<1x16xf32> to vector<260x16xf32>
    %39 = arith.addf %37, %38 : vector<260x16xf32>
    %cst_9 = arith.constant 0.000000e+00 : f32
    %40 = vector.broadcast %cst_9 : f32 to vector<260x16xf32>
    %41 = arith.maximumf %39, %40 : vector<260x16xf32>
    %c0_10 = arith.constant 0 : index
    %c0_11 = arith.constant 0 : index
    %c0_12 = arith.constant 0 : index
    %42 = vector.load %arg4[%c0_10, %c0_11, %c0_12] : memref<9x16x32xf32, #tpu.memory_space<vmem>>, vector<1x16x32xf32>
    %43 = vector.shape_cast %42 : vector<1x16x32xf32> to vector<16x32xf32>
    %cst_13 = arith.constant dense<0.000000e+00> : vector<260x32xf32>
    %44 = tpu.matmul %41, %43, %cst_13 {dimension_numbers = #tpu.dot_dimension_numbers<[1], [0], [0], [1], [0, 0, 1, 1], [], []>} : vector<260x16xf32>, vector<16x32xf32>, vector<260x32xf32> -> vector<260x32xf32>
    %45 = vector.extract_strided_slice %33 {offsets = [0, 1], sizes = [260, 1], strides = [1, 1]} : vector<260x9xf32> to vector<260x1xf32>
    %46 = vector.broadcast %45 : vector<260x1xf32> to vector<260x16xf32>
    %47 = vector.broadcast %29 : vector<1x16xf32> to vector<260x16xf32>
    %48 = arith.mulf %46, %47 : vector<260x16xf32>
    %49 = vector.broadcast %32 : vector<1x16xf32> to vector<260x16xf32>
    %50 = arith.addf %48, %49 : vector<260x16xf32>
    %cst_14 = arith.constant 0.000000e+00 : f32
    %51 = vector.broadcast %cst_14 : f32 to vector<260x16xf32>
    %52 = arith.maximumf %50, %51 : vector<260x16xf32>
    %c1 = arith.constant 1 : index
    %c0_15 = arith.constant 0 : index
    %c0_16 = arith.constant 0 : index
    %53 = vector.load %arg4[%c1, %c0_15, %c0_16] : memref<9x16x32xf32, #tpu.memory_space<vmem>>, vector<1x16x32xf32>
    %54 = vector.shape_cast %53 : vector<1x16x32xf32> to vector<16x32xf32>
    %cst_17 = arith.constant dense<0.000000e+00> : vector<260x32xf32>
    %55 = tpu.matmul %52, %54, %cst_17 {dimension_numbers = #tpu.dot_dimension_numbers<[1], [0], [0], [1], [0, 0, 1, 1], [], []>} : vector<260x16xf32>, vector<16x32xf32>, vector<260x32xf32> -> vector<260x32xf32>
    %56 = arith.addf %44, %55 : vector<260x32xf32>
    %57 = vector.extract_strided_slice %33 {offsets = [0, 2], sizes = [260, 1], strides = [1, 1]} : vector<260x9xf32> to vector<260x1xf32>
    %58 = vector.broadcast %57 : vector<260x1xf32> to vector<260x16xf32>
    %59 = vector.broadcast %29 : vector<1x16xf32> to vector<260x16xf32>
    %60 = arith.mulf %58, %59 : vector<260x16xf32>
    %61 = vector.broadcast %32 : vector<1x16xf32> to vector<260x16xf32>
    %62 = arith.addf %60, %61 : vector<260x16xf32>
    %cst_18 = arith.constant 0.000000e+00 : f32
    %63 = vector.broadcast %cst_18 : f32 to vector<260x16xf32>
    %64 = arith.maximumf %62, %63 : vector<260x16xf32>
    %c2 = arith.constant 2 : index
    %c0_19 = arith.constant 0 : index
    %c0_20 = arith.constant 0 : index
    %65 = vector.load %arg4[%c2, %c0_19, %c0_20] : memref<9x16x32xf32, #tpu.memory_space<vmem>>, vector<1x16x32xf32>
    %66 = vector.shape_cast %65 : vector<1x16x32xf32> to vector<16x32xf32>
    %cst_21 = arith.constant dense<0.000000e+00> : vector<260x32xf32>
    %67 = tpu.matmul %64, %66, %cst_21 {dimension_numbers = #tpu.dot_dimension_numbers<[1], [0], [0], [1], [0, 0, 1, 1], [], []>} : vector<260x16xf32>, vector<16x32xf32>, vector<260x32xf32> -> vector<260x32xf32>
    %68 = arith.addf %56, %67 : vector<260x32xf32>
    %69 = vector.extract_strided_slice %33 {offsets = [0, 3], sizes = [260, 1], strides = [1, 1]} : vector<260x9xf32> to vector<260x1xf32>
    %70 = vector.broadcast %69 : vector<260x1xf32> to vector<260x16xf32>
    %71 = vector.broadcast %29 : vector<1x16xf32> to vector<260x16xf32>
    %72 = arith.mulf %70, %71 : vector<260x16xf32>
    %73 = vector.broadcast %32 : vector<1x16xf32> to vector<260x16xf32>
    %74 = arith.addf %72, %73 : vector<260x16xf32>
    %cst_22 = arith.constant 0.000000e+00 : f32
    %75 = vector.broadcast %cst_22 : f32 to vector<260x16xf32>
    %76 = arith.maximumf %74, %75 : vector<260x16xf32>
    %c3 = arith.constant 3 : index
    %c0_23 = arith.constant 0 : index
    %c0_24 = arith.constant 0 : index
    %77 = vector.load %arg4[%c3, %c0_23, %c0_24] : memref<9x16x32xf32, #tpu.memory_space<vmem>>, vector<1x16x32xf32>
    %78 = vector.shape_cast %77 : vector<1x16x32xf32> to vector<16x32xf32>
    %cst_25 = arith.constant dense<0.000000e+00> : vector<260x32xf32>
    %79 = tpu.matmul %76, %78, %cst_25 {dimension_numbers = #tpu.dot_dimension_numbers<[1], [0], [0], [1], [0, 0, 1, 1], [], []>} : vector<260x16xf32>, vector<16x32xf32>, vector<260x32xf32> -> vector<260x32xf32>
    %80 = arith.addf %68, %79 : vector<260x32xf32>
    %81 = vector.extract_strided_slice %33 {offsets = [0, 4], sizes = [260, 1], strides = [1, 1]} : vector<260x9xf32> to vector<260x1xf32>
    %82 = vector.broadcast %81 : vector<260x1xf32> to vector<260x16xf32>
    %83 = vector.broadcast %29 : vector<1x16xf32> to vector<260x16xf32>
    %84 = arith.mulf %82, %83 : vector<260x16xf32>
    %85 = vector.broadcast %32 : vector<1x16xf32> to vector<260x16xf32>
    %86 = arith.addf %84, %85 : vector<260x16xf32>
    %cst_26 = arith.constant 0.000000e+00 : f32
    %87 = vector.broadcast %cst_26 : f32 to vector<260x16xf32>
    %88 = arith.maximumf %86, %87 : vector<260x16xf32>
    %c4 = arith.constant 4 : index
    %c0_27 = arith.constant 0 : index
    %c0_28 = arith.constant 0 : index
    %89 = vector.load %arg4[%c4, %c0_27, %c0_28] : memref<9x16x32xf32, #tpu.memory_space<vmem>>, vector<1x16x32xf32>
    %90 = vector.shape_cast %89 : vector<1x16x32xf32> to vector<16x32xf32>
    %cst_29 = arith.constant dense<0.000000e+00> : vector<260x32xf32>
    %91 = tpu.matmul %88, %90, %cst_29 {dimension_numbers = #tpu.dot_dimension_numbers<[1], [0], [0], [1], [0, 0, 1, 1], [], []>} : vector<260x16xf32>, vector<16x32xf32>, vector<260x32xf32> -> vector<260x32xf32>
    %92 = arith.addf %80, %91 : vector<260x32xf32>
    %93 = vector.extract_strided_slice %33 {offsets = [0, 5], sizes = [260, 1], strides = [1, 1]} : vector<260x9xf32> to vector<260x1xf32>
    %94 = vector.broadcast %93 : vector<260x1xf32> to vector<260x16xf32>
    %95 = vector.broadcast %29 : vector<1x16xf32> to vector<260x16xf32>
    %96 = arith.mulf %94, %95 : vector<260x16xf32>
    %97 = vector.broadcast %32 : vector<1x16xf32> to vector<260x16xf32>
    %98 = arith.addf %96, %97 : vector<260x16xf32>
    %cst_30 = arith.constant 0.000000e+00 : f32
    %99 = vector.broadcast %cst_30 : f32 to vector<260x16xf32>
    %100 = arith.maximumf %98, %99 : vector<260x16xf32>
    %c5 = arith.constant 5 : index
    %c0_31 = arith.constant 0 : index
    %c0_32 = arith.constant 0 : index
    %101 = vector.load %arg4[%c5, %c0_31, %c0_32] : memref<9x16x32xf32, #tpu.memory_space<vmem>>, vector<1x16x32xf32>
    %102 = vector.shape_cast %101 : vector<1x16x32xf32> to vector<16x32xf32>
    %cst_33 = arith.constant dense<0.000000e+00> : vector<260x32xf32>
    %103 = tpu.matmul %100, %102, %cst_33 {dimension_numbers = #tpu.dot_dimension_numbers<[1], [0], [0], [1], [0, 0, 1, 1], [], []>} : vector<260x16xf32>, vector<16x32xf32>, vector<260x32xf32> -> vector<260x32xf32>
    %104 = arith.addf %92, %103 : vector<260x32xf32>
    %105 = vector.extract_strided_slice %33 {offsets = [0, 6], sizes = [260, 1], strides = [1, 1]} : vector<260x9xf32> to vector<260x1xf32>
    %106 = vector.broadcast %105 : vector<260x1xf32> to vector<260x16xf32>
    %107 = vector.broadcast %29 : vector<1x16xf32> to vector<260x16xf32>
    %108 = arith.mulf %106, %107 : vector<260x16xf32>
    %109 = vector.broadcast %32 : vector<1x16xf32> to vector<260x16xf32>
    %110 = arith.addf %108, %109 : vector<260x16xf32>
    %cst_34 = arith.constant 0.000000e+00 : f32
    %111 = vector.broadcast %cst_34 : f32 to vector<260x16xf32>
    %112 = arith.maximumf %110, %111 : vector<260x16xf32>
    %c6 = arith.constant 6 : index
    %c0_35 = arith.constant 0 : index
    %c0_36 = arith.constant 0 : index
    %113 = vector.load %arg4[%c6, %c0_35, %c0_36] : memref<9x16x32xf32, #tpu.memory_space<vmem>>, vector<1x16x32xf32>
    %114 = vector.shape_cast %113 : vector<1x16x32xf32> to vector<16x32xf32>
    %cst_37 = arith.constant dense<0.000000e+00> : vector<260x32xf32>
    %115 = tpu.matmul %112, %114, %cst_37 {dimension_numbers = #tpu.dot_dimension_numbers<[1], [0], [0], [1], [0, 0, 1, 1], [], []>} : vector<260x16xf32>, vector<16x32xf32>, vector<260x32xf32> -> vector<260x32xf32>
    %116 = arith.addf %104, %115 : vector<260x32xf32>
    %117 = vector.extract_strided_slice %33 {offsets = [0, 7], sizes = [260, 1], strides = [1, 1]} : vector<260x9xf32> to vector<260x1xf32>
    %118 = vector.broadcast %117 : vector<260x1xf32> to vector<260x16xf32>
    %119 = vector.broadcast %29 : vector<1x16xf32> to vector<260x16xf32>
    %120 = arith.mulf %118, %119 : vector<260x16xf32>
    %121 = vector.broadcast %32 : vector<1x16xf32> to vector<260x16xf32>
    %122 = arith.addf %120, %121 : vector<260x16xf32>
    %cst_38 = arith.constant 0.000000e+00 : f32
    %123 = vector.broadcast %cst_38 : f32 to vector<260x16xf32>
    %124 = arith.maximumf %122, %123 : vector<260x16xf32>
    %c7 = arith.constant 7 : index
    %c0_39 = arith.constant 0 : index
    %c0_40 = arith.constant 0 : index
    %125 = vector.load %arg4[%c7, %c0_39, %c0_40] : memref<9x16x32xf32, #tpu.memory_space<vmem>>, vector<1x16x32xf32>
    %126 = vector.shape_cast %125 : vector<1x16x32xf32> to vector<16x32xf32>
    %cst_41 = arith.constant dense<0.000000e+00> : vector<260x32xf32>
    %127 = tpu.matmul %124, %126, %cst_41 {dimension_numbers = #tpu.dot_dimension_numbers<[1], [0], [0], [1], [0, 0, 1, 1], [], []>} : vector<260x16xf32>, vector<16x32xf32>, vector<260x32xf32> -> vector<260x32xf32>
    %128 = arith.addf %116, %127 : vector<260x32xf32>
    %129 = vector.extract_strided_slice %33 {offsets = [0, 8], sizes = [260, 1], strides = [1, 1]} : vector<260x9xf32> to vector<260x1xf32>
    %130 = vector.broadcast %129 : vector<260x1xf32> to vector<260x16xf32>
    %131 = vector.broadcast %29 : vector<1x16xf32> to vector<260x16xf32>
    %132 = arith.mulf %130, %131 : vector<260x16xf32>
    %133 = vector.broadcast %32 : vector<1x16xf32> to vector<260x16xf32>
    %134 = arith.addf %132, %133 : vector<260x16xf32>
    %cst_42 = arith.constant 0.000000e+00 : f32
    %135 = vector.broadcast %cst_42 : f32 to vector<260x16xf32>
    %136 = arith.maximumf %134, %135 : vector<260x16xf32>
    %c8 = arith.constant 8 : index
    %c0_43 = arith.constant 0 : index
    %c0_44 = arith.constant 0 : index
    %137 = vector.load %arg4[%c8, %c0_43, %c0_44] : memref<9x16x32xf32, #tpu.memory_space<vmem>>, vector<1x16x32xf32>
    %138 = vector.shape_cast %137 : vector<1x16x32xf32> to vector<16x32xf32>
    %cst_45 = arith.constant dense<0.000000e+00> : vector<260x32xf32>
    %139 = tpu.matmul %136, %138, %cst_45 {dimension_numbers = #tpu.dot_dimension_numbers<[1], [0], [0], [1], [0, 0, 1, 1], [], []>} : vector<260x16xf32>, vector<16x32xf32>, vector<260x32xf32> -> vector<260x32xf32>
    %140 = arith.addf %128, %139 : vector<260x32xf32>
    %141 = vector.extract_strided_slice %140 {offsets = [0, 0], sizes = [98, 32], strides = [1, 1]} : vector<260x32xf32> to vector<98x32xf32>
    %cst_46 = arith.constant dense<0.000000e+00> : vector<32xf32>
    %142 = vector.multi_reduction <add>, %141, %cst_46 [0] : vector<98x32xf32> to vector<32xf32>
    %143 = vector.shape_cast %142 : vector<32xf32> to vector<1x32xf32>
    %cst_47 = arith.constant 9.800000e+01 : f32
    %144 = vector.broadcast %cst_47 : f32 to vector<1x32xf32>
    %145 = arith.divf %143, %144 : vector<1x32xf32>
    %146 = arith.mulf %141, %141 : vector<98x32xf32>
    %cst_48 = arith.constant dense<0.000000e+00> : vector<32xf32>
    %147 = vector.multi_reduction <add>, %146, %cst_48 [0] : vector<98x32xf32> to vector<32xf32>
    %148 = vector.shape_cast %147 : vector<32xf32> to vector<1x32xf32>
    %cst_49 = arith.constant 9.800000e+01 : f32
    %149 = vector.broadcast %cst_49 : f32 to vector<1x32xf32>
    %150 = arith.divf %148, %149 : vector<1x32xf32>
    %151 = arith.mulf %145, %145 : vector<1x32xf32>
    %152 = arith.subf %150, %151 : vector<1x32xf32>
    %c0_50 = arith.constant 0 : index
    %c0_51 = arith.constant 0 : index
    %153 = vector.load %arg5[%c0_50, %c0_51] : memref<2x32xf32, #tpu.memory_space<vmem>>, vector<2x32xf32>
    %154 = vector.extract_strided_slice %153 {offsets = [0, 0], sizes = [1, 32], strides = [1, 1]} : vector<2x32xf32> to vector<1x32xf32>
    %155 = vector.extract_strided_slice %153 {offsets = [1, 0], sizes = [1, 32], strides = [1, 1]} : vector<2x32xf32> to vector<1x32xf32>
    %156 = vector.extract_strided_slice %140 {offsets = [98, 0], sizes = [162, 32], strides = [1, 1]} : vector<260x32xf32> to vector<162x32xf32>
    %157 = vector.broadcast %145 : vector<1x32xf32> to vector<162x32xf32>
    %158 = arith.subf %156, %157 : vector<162x32xf32>
    %cst_52 = arith.constant 9.99999974E-6 : f32
    %159 = vector.broadcast %cst_52 : f32 to vector<1x32xf32>
    %160 = arith.addf %152, %159 : vector<1x32xf32>
    %161 = math.rsqrt %160 : vector<1x32xf32>
    %162 = vector.broadcast %161 : vector<1x32xf32> to vector<162x32xf32>
    %163 = arith.mulf %158, %162 : vector<162x32xf32>
    %164 = vector.broadcast %154 : vector<1x32xf32> to vector<162x32xf32>
    %165 = arith.mulf %163, %164 : vector<162x32xf32>
    %166 = vector.broadcast %155 : vector<1x32xf32> to vector<162x32xf32>
    %167 = arith.addf %165, %166 : vector<162x32xf32>
    %cst_53 = arith.constant 0.000000e+00 : f32
    %168 = vector.broadcast %cst_53 : f32 to vector<162x32xf32>
    %169 = arith.maximumf %167, %168 : vector<162x32xf32>
    %170 = vector.extract_strided_slice %169 {offsets = [0, 0], sizes = [18, 32], strides = [1, 1]} : vector<162x32xf32> to vector<18x32xf32>
    %c0_54 = arith.constant 0 : index
    %c0_55 = arith.constant 0 : index
    %c0_56 = arith.constant 0 : index
    %171 = vector.load %arg6[%c0_54, %c0_55, %c0_56] : memref<9x32x64xf32, #tpu.memory_space<vmem>>, vector<1x32x64xf32>
    %172 = vector.shape_cast %171 : vector<1x32x64xf32> to vector<32x64xf32>
    %cst_57 = arith.constant dense<0.000000e+00> : vector<18x64xf32>
    %173 = tpu.matmul %170, %172, %cst_57 {dimension_numbers = #tpu.dot_dimension_numbers<[1], [0], [0], [1], [0, 0, 1, 1], [], []>} : vector<18x32xf32>, vector<32x64xf32>, vector<18x64xf32> -> vector<18x64xf32>
    %174 = vector.extract_strided_slice %169 {offsets = [18, 0], sizes = [18, 32], strides = [1, 1]} : vector<162x32xf32> to vector<18x32xf32>
    %c1_58 = arith.constant 1 : index
    %c0_59 = arith.constant 0 : index
    %c0_60 = arith.constant 0 : index
    %175 = vector.load %arg6[%c1_58, %c0_59, %c0_60] : memref<9x32x64xf32, #tpu.memory_space<vmem>>, vector<1x32x64xf32>
    %176 = vector.shape_cast %175 : vector<1x32x64xf32> to vector<32x64xf32>
    %cst_61 = arith.constant dense<0.000000e+00> : vector<18x64xf32>
    %177 = tpu.matmul %174, %176, %cst_61 {dimension_numbers = #tpu.dot_dimension_numbers<[1], [0], [0], [1], [0, 0, 1, 1], [], []>} : vector<18x32xf32>, vector<32x64xf32>, vector<18x64xf32> -> vector<18x64xf32>
    %178 = arith.addf %173, %177 : vector<18x64xf32>
    %179 = vector.extract_strided_slice %169 {offsets = [36, 0], sizes = [18, 32], strides = [1, 1]} : vector<162x32xf32> to vector<18x32xf32>
    %c2_62 = arith.constant 2 : index
    %c0_63 = arith.constant 0 : index
    %c0_64 = arith.constant 0 : index
    %180 = vector.load %arg6[%c2_62, %c0_63, %c0_64] : memref<9x32x64xf32, #tpu.memory_space<vmem>>, vector<1x32x64xf32>
    %181 = vector.shape_cast %180 : vector<1x32x64xf32> to vector<32x64xf32>
    %cst_65 = arith.constant dense<0.000000e+00> : vector<18x64xf32>
    %182 = tpu.matmul %179, %181, %cst_65 {dimension_numbers = #tpu.dot_dimension_numbers<[1], [0], [0], [1], [0, 0, 1, 1], [], []>} : vector<18x32xf32>, vector<32x64xf32>, vector<18x64xf32> -> vector<18x64xf32>
    %183 = arith.addf %178, %182 : vector<18x64xf32>
    %184 = vector.extract_strided_slice %169 {offsets = [54, 0], sizes = [18, 32], strides = [1, 1]} : vector<162x32xf32> to vector<18x32xf32>
    %c3_66 = arith.constant 3 : index
    %c0_67 = arith.constant 0 : index
    %c0_68 = arith.constant 0 : index
    %185 = vector.load %arg6[%c3_66, %c0_67, %c0_68] : memref<9x32x64xf32, #tpu.memory_space<vmem>>, vector<1x32x64xf32>
    %186 = vector.shape_cast %185 : vector<1x32x64xf32> to vector<32x64xf32>
    %cst_69 = arith.constant dense<0.000000e+00> : vector<18x64xf32>
    %187 = tpu.matmul %184, %186, %cst_69 {dimension_numbers = #tpu.dot_dimension_numbers<[1], [0], [0], [1], [0, 0, 1, 1], [], []>} : vector<18x32xf32>, vector<32x64xf32>, vector<18x64xf32> -> vector<18x64xf32>
    %188 = arith.addf %183, %187 : vector<18x64xf32>
    %189 = vector.extract_strided_slice %169 {offsets = [72, 0], sizes = [18, 32], strides = [1, 1]} : vector<162x32xf32> to vector<18x32xf32>
    %c4_70 = arith.constant 4 : index
    %c0_71 = arith.constant 0 : index
    %c0_72 = arith.constant 0 : index
    %190 = vector.load %arg6[%c4_70, %c0_71, %c0_72] : memref<9x32x64xf32, #tpu.memory_space<vmem>>, vector<1x32x64xf32>
    %191 = vector.shape_cast %190 : vector<1x32x64xf32> to vector<32x64xf32>
    %cst_73 = arith.constant dense<0.000000e+00> : vector<18x64xf32>
    %192 = tpu.matmul %189, %191, %cst_73 {dimension_numbers = #tpu.dot_dimension_numbers<[1], [0], [0], [1], [0, 0, 1, 1], [], []>} : vector<18x32xf32>, vector<32x64xf32>, vector<18x64xf32> -> vector<18x64xf32>
    %193 = arith.addf %188, %192 : vector<18x64xf32>
    %194 = vector.extract_strided_slice %169 {offsets = [90, 0], sizes = [18, 32], strides = [1, 1]} : vector<162x32xf32> to vector<18x32xf32>
    %c5_74 = arith.constant 5 : index
    %c0_75 = arith.constant 0 : index
    %c0_76 = arith.constant 0 : index
    %195 = vector.load %arg6[%c5_74, %c0_75, %c0_76] : memref<9x32x64xf32, #tpu.memory_space<vmem>>, vector<1x32x64xf32>
    %196 = vector.shape_cast %195 : vector<1x32x64xf32> to vector<32x64xf32>
    %cst_77 = arith.constant dense<0.000000e+00> : vector<18x64xf32>
    %197 = tpu.matmul %194, %196, %cst_77 {dimension_numbers = #tpu.dot_dimension_numbers<[1], [0], [0], [1], [0, 0, 1, 1], [], []>} : vector<18x32xf32>, vector<32x64xf32>, vector<18x64xf32> -> vector<18x64xf32>
    %198 = arith.addf %193, %197 : vector<18x64xf32>
    %199 = vector.extract_strided_slice %169 {offsets = [108, 0], sizes = [18, 32], strides = [1, 1]} : vector<162x32xf32> to vector<18x32xf32>
    %c6_78 = arith.constant 6 : index
    %c0_79 = arith.constant 0 : index
    %c0_80 = arith.constant 0 : index
    %200 = vector.load %arg6[%c6_78, %c0_79, %c0_80] : memref<9x32x64xf32, #tpu.memory_space<vmem>>, vector<1x32x64xf32>
    %201 = vector.shape_cast %200 : vector<1x32x64xf32> to vector<32x64xf32>
    %cst_81 = arith.constant dense<0.000000e+00> : vector<18x64xf32>
    %202 = tpu.matmul %199, %201, %cst_81 {dimension_numbers = #tpu.dot_dimension_numbers<[1], [0], [0], [1], [0, 0, 1, 1], [], []>} : vector<18x32xf32>, vector<32x64xf32>, vector<18x64xf32> -> vector<18x64xf32>
    %203 = arith.addf %198, %202 : vector<18x64xf32>
    %204 = vector.extract_strided_slice %169 {offsets = [126, 0], sizes = [18, 32], strides = [1, 1]} : vector<162x32xf32> to vector<18x32xf32>
    %c7_82 = arith.constant 7 : index
    %c0_83 = arith.constant 0 : index
    %c0_84 = arith.constant 0 : index
    %205 = vector.load %arg6[%c7_82, %c0_83, %c0_84] : memref<9x32x64xf32, #tpu.memory_space<vmem>>, vector<1x32x64xf32>
    %206 = vector.shape_cast %205 : vector<1x32x64xf32> to vector<32x64xf32>
    %cst_85 = arith.constant dense<0.000000e+00> : vector<18x64xf32>
    %207 = tpu.matmul %204, %206, %cst_85 {dimension_numbers = #tpu.dot_dimension_numbers<[1], [0], [0], [1], [0, 0, 1, 1], [], []>} : vector<18x32xf32>, vector<32x64xf32>, vector<18x64xf32> -> vector<18x64xf32>
    %208 = arith.addf %203, %207 : vector<18x64xf32>
    %209 = vector.extract_strided_slice %169 {offsets = [144, 0], sizes = [18, 32], strides = [1, 1]} : vector<162x32xf32> to vector<18x32xf32>
    %c8_86 = arith.constant 8 : index
    %c0_87 = arith.constant 0 : index
    %c0_88 = arith.constant 0 : index
    %210 = vector.load %arg6[%c8_86, %c0_87, %c0_88] : memref<9x32x64xf32, #tpu.memory_space<vmem>>, vector<1x32x64xf32>
    %211 = vector.shape_cast %210 : vector<1x32x64xf32> to vector<32x64xf32>
    %cst_89 = arith.constant dense<0.000000e+00> : vector<18x64xf32>
    %212 = tpu.matmul %209, %211, %cst_89 {dimension_numbers = #tpu.dot_dimension_numbers<[1], [0], [0], [1], [0, 0, 1, 1], [], []>} : vector<18x32xf32>, vector<32x64xf32>, vector<18x64xf32> -> vector<18x64xf32>
    %213 = arith.addf %208, %212 : vector<18x64xf32>
    %cst_90 = arith.constant dense<0.000000e+00> : vector<64xf32>
    %214 = vector.multi_reduction <add>, %213, %cst_90 [0] : vector<18x64xf32> to vector<64xf32>
    %215 = vector.shape_cast %214 : vector<64xf32> to vector<1x64xf32>
    %cst_91 = arith.constant 1.800000e+01 : f32
    %216 = vector.broadcast %cst_91 : f32 to vector<1x64xf32>
    %217 = arith.divf %215, %216 : vector<1x64xf32>
    %218 = arith.mulf %213, %213 : vector<18x64xf32>
    %cst_92 = arith.constant dense<0.000000e+00> : vector<64xf32>
    %219 = vector.multi_reduction <add>, %218, %cst_92 [0] : vector<18x64xf32> to vector<64xf32>
    %220 = vector.shape_cast %219 : vector<64xf32> to vector<1x64xf32>
    %cst_93 = arith.constant 1.800000e+01 : f32
    %221 = vector.broadcast %cst_93 : f32 to vector<1x64xf32>
    %222 = arith.divf %220, %221 : vector<1x64xf32>
    %223 = arith.mulf %217, %217 : vector<1x64xf32>
    %224 = arith.subf %222, %223 : vector<1x64xf32>
    %c0_94 = arith.constant 0 : index
    %c0_95 = arith.constant 0 : index
    %225 = vector.load %arg7[%c0_94, %c0_95] : memref<2x64xf32, #tpu.memory_space<vmem>>, vector<2x64xf32>
    %226 = vector.extract_strided_slice %225 {offsets = [0, 0], sizes = [1, 64], strides = [1, 1]} : vector<2x64xf32> to vector<1x64xf32>
    %227 = vector.extract_strided_slice %225 {offsets = [1, 0], sizes = [1, 64], strides = [1, 1]} : vector<2x64xf32> to vector<1x64xf32>
    %228 = vector.broadcast %217 : vector<1x64xf32> to vector<18x64xf32>
    %229 = arith.subf %213, %228 : vector<18x64xf32>
    %cst_96 = arith.constant 9.99999974E-6 : f32
    %230 = vector.broadcast %cst_96 : f32 to vector<1x64xf32>
    %231 = arith.addf %224, %230 : vector<1x64xf32>
    %232 = math.rsqrt %231 : vector<1x64xf32>
    %233 = vector.broadcast %232 : vector<1x64xf32> to vector<18x64xf32>
    %234 = arith.mulf %229, %233 : vector<18x64xf32>
    %235 = vector.broadcast %226 : vector<1x64xf32> to vector<18x64xf32>
    %236 = arith.mulf %234, %235 : vector<18x64xf32>
    %237 = vector.broadcast %227 : vector<1x64xf32> to vector<18x64xf32>
    %238 = arith.addf %236, %237 : vector<18x64xf32>
    %cst_97 = arith.constant 0.000000e+00 : f32
    %239 = vector.broadcast %cst_97 : f32 to vector<18x64xf32>
    %240 = arith.maximumf %238, %239 : vector<18x64xf32>
    %c0_98 = arith.constant 0 : index
    %c0_99 = arith.constant 0 : index
    %241 = vector.load %arg8[%c0_98, %c0_99] : memref<18x64xf32, #tpu.memory_space<vmem>>, vector<18x64xf32>
    tpu.vector_store %arg8[%c0_98, %c0_99], %240 {strides = array<i32>} : memref<18x64xf32, #tpu.memory_space<vmem>>, vector<18x64xf32>,
    return
  }
  func.func @transform_0(%arg0: i32) -> (i32, i32) {
    %c0_i32 = arith.constant 0 : i32
    %c0_i32_0 = arith.constant 0 : i32
    %c0_i32_1 = arith.constant 0 : i32
    return %c0_i32, %c0_i32_0 : i32, i32
  }
  func.func @transform_1(%arg0: i32) -> (i32, i32) {
    %c0_i32 = arith.constant 0 : i32
    %c0_i32_0 = arith.constant 0 : i32
    %c0_i32_1 = arith.constant 0 : i32
    return %c0_i32, %c0_i32_0 : i32, i32
  }
  func.func @transform_2(%arg0: i32) -> (i32, i32) {
    %c0_i32 = arith.constant 0 : i32
    %c0_i32_0 = arith.constant 0 : i32
    %c0_i32_1 = arith.constant 0 : i32
    return %c0_i32, %c0_i32_0 : i32, i32
  }
  func.func @transform_3(%arg0: i32) -> (i32, i32, i32) {
    %c0_i32 = arith.constant 0 : i32
    %c0_i32_0 = arith.constant 0 : i32
    %c0_i32_1 = arith.constant 0 : i32
    %c0_i32_2 = arith.constant 0 : i32
    return %c0_i32, %c0_i32_0, %c0_i32_1 : i32, i32, i32
  }
  func.func @transform_4(%arg0: i32) -> (i32, i32) {
    %c0_i32 = arith.constant 0 : i32
    %c0_i32_0 = arith.constant 0 : i32
    %c0_i32_1 = arith.constant 0 : i32
    return %c0_i32, %c0_i32_0 : i32, i32
  }
  func.func @transform_5(%arg0: i32) -> (i32, i32, i32) {
    %c0_i32 = arith.constant 0 : i32
    %c0_i32_0 = arith.constant 0 : i32
    %c0_i32_1 = arith.constant 0 : i32
    %c0_i32_2 = arith.constant 0 : i32
    return %c0_i32, %c0_i32_0, %c0_i32_1 : i32, i32, i32
  }
  func.func @transform_6(%arg0: i32) -> (i32, i32) {
    %c0_i32 = arith.constant 0 : i32
    %c0_i32_0 = arith.constant 0 : i32
    %c0_i32_1 = arith.constant 0 : i32
    return %c0_i32, %c0_i32_0 : i32, i32
  }
  func.func @transform_7(%arg0: i32) -> (i32, i32) {
    %c0_i32 = arith.constant 0 : i32
    %c0_i32_0 = arith.constant 0 : i32
    %c0_i32_1 = arith.constant 0 : i32
    return %c0_i32, %c0_i32_0 : i32, i32
  }
}

</mosaic_0001>

<llo_original>
// kernel: encoder_forward.1
$region0: #{encoder_forward.1}
  #allocation0 [shape = 'u32[]', space=smem, size = 0x4, offset = 0x4, fixed_abs, tag = 'smem constant byte address 0x4 - core index']
  #allocation1 [shape = 'u32[144,128]{1,0:T(1,128)}', space=vmem, size = 0x12000, scoped, tag = 'internal scratch']
  %s0 = inlined_call_operand.vmem [shape: f32[32,16], index: 0, kind: input, shape index: {}]
  %s1 = inlined_call_operand.vmem [shape: f32[260,9], index: 1, kind: input, shape index: {}]
  %s2 = inlined_call_operand.vmem [shape: f32[3,16], index: 2, kind: input, shape index: {}]
  %s3 = inlined_call_operand.vmem [shape: f32[9,16,32], index: 3, kind: input, shape index: {}]
  %s4 = inlined_call_operand.vmem [shape: f32[2,32], index: 4, kind: input, shape index: {}]
  %s5 = inlined_call_operand.vmem [shape: f32[9,32,64], index: 5, kind: input, shape index: {}]
  %s6 = inlined_call_operand.vmem [shape: f32[2,64], index: 6, kind: input, shape index: {}]
  %s7 = inlined_call_operand.vmem [shape: f32[18,64], index: 7, kind: output, shape index: {}]
  %s8 = sld [smem:[#allocation0]]
  $region38: #{encoder_forward.1} parent=0
    _
  %s10 = ssub.s32 1, %s8
  %s11 = scalar_select 0, %s10, %s8
  // Predicated region
  $region2: #{encoder_forward.1} parent=0 // pred_check
    _
  $region3: #{encoder_forward.1} parent=0 // pred_check_branch
    %13 = sbr.rel (0) target = $region5
  $region4: #{encoder_forward.1} parent=0 // pred_region
    _
  $region5: #{encoder_forward.1} parent=0 // pred_fallthru
    _
  // Predicated region
  $region6: #{encoder_forward.1} parent=0 // pred_check
    _
  $region7: #{encoder_forward.1} parent=0 // pred_check_branch
    %15 = sbr.rel (0) target = $region9
  $region8: #{encoder_forward.1} parent=0 // pred_region
    _
  $region9: #{encoder_forward.1} parent=0 // pred_fallthru
    _
  // Predicated region
  $region10: #{encoder_forward.1} parent=0 // pred_check
    _
  $region11: #{encoder_forward.1} parent=0 // pred_check_branch
    %17 = sbr.rel (0) target = $region13
  $region12: #{encoder_forward.1} parent=0 // pred_region
    _
  $region13: #{encoder_forward.1} parent=0 // pred_fallthru
    _
  // Predicated region
  $region14: #{encoder_forward.1} parent=0 // pred_check
    _
  $region15: #{encoder_forward.1} parent=0 // pred_check_branch
    %19 = sbr.rel (0) target = $region17
  $region16: #{encoder_forward.1} parent=0 // pred_region
    _
  $region17: #{encoder_forward.1} parent=0 // pred_fallthru
    _
  // Predicated region
  $region18: #{encoder_forward.1} parent=0 // pred_check
    _
  $region19: #{encoder_forward.1} parent=0 // pred_check_branch
    %21 = sbr.rel (0) target = $region21
  $region20: #{encoder_forward.1} parent=0 // pred_region
    _
  $region21: #{encoder_forward.1} parent=0 // pred_fallthru
    _
  // Predicated region
  $region22: #{encoder_forward.1} parent=0 // pred_check
    _
  $region23: #{encoder_forward.1} parent=0 // pred_check_branch
    %23 = sbr.rel (0) target = $region25
  $region24: #{encoder_forward.1} parent=0 // pred_region
    _
  $region25: #{encoder_forward.1} parent=0 // pred_fallthru
    _
  // Predicated region
  $region26: #{encoder_forward.1} parent=0 // pred_check
    _
  $region27: #{encoder_forward.1} parent=0 // pred_check_branch
    %25 = sbr.rel (0) target = $region29
  $region28: #{encoder_forward.1} parent=0 // pred_region
    _
  $region29: #{encoder_forward.1} parent=0 // pred_fallthru
    _
  %v26 = vld [vmem:[%s0] sm:$0xff]
  %v27 = vld [vmem:[%s0 + $0x8] sm:$0xff]
  %v28 = vld [vmem:[%s0 + $0x10] sm:$0xff]
  %v29 = vld [vmem:[%s0 + $0x18] sm:$0xff]
  %vm30 = vcmask 130048
  %v31 = vsel %vm30, %v26, 0.0
  %v32 = vsel %vm30, %v27, 0.0
  %v33 = vadd.f32 %v31, %v32
  %v34 = vsel %vm30, %v28, 0.0
  %v35 = vadd.f32 %v33, %v34
  %v36 = vsel %vm30, %v29, 0.0
  %v37 = vadd.f32 %v35, %v36
  %38 = vadd.xlane.f32.xlu0 %v37
  %v39 = vpop.xlane.xlu0 %38
  %v40 = vrot.slane %v39, 4
  %v41 = vadd.f32 %v39, %v40
  %v42 = vrot.slane %v41, 2
  %v43 = vadd.f32 %v41, %v42
  %v44 = vrot.slane %v43, 1
  %v45 = vadd.f32 %v43, %v44
  %s46 = vtos %v45
  %v47 = vstv %s46
  %v48 = vrcp.pop 512.0
  %v49 = vmul.f32 %v47, %v48
  %v50 = vmul.f32 %v26, %v26
  %v51 = vmul.f32 %v27, %v27
  %v52 = vmul.f32 %v28, %v28
  %v53 = vmul.f32 %v29, %v29
  %v54 = vsel %vm30, %v50, 0.0
  %v55 = vsel %vm30, %v51, 0.0
  %v56 = vadd.f32 %v54, %v55
  %v57 = vsel %vm30, %v52, 0.0
  %v58 = vadd.f32 %v56, %v57
  %v59 = vsel %vm30, %v53, 0.0
  %v60 = vadd.f32 %v58, %v59
  %61 = vadd.xlane.f32.xlu0 %v60
  %v62 = vpop.xlane.xlu0 %61
  %v63 = vrot.slane %v62, 4
  %v64 = vadd.f32 %v62, %v63
  %v65 = vrot.slane %v64, 2
  %v66 = vadd.f32 %v64, %v65
  %v67 = vrot.slane %v66, 1
  %v68 = vadd.f32 %v66, %v67
  %s69 = vtos %v68
  %v70 = vstv %s69
  %v71 = vmul.f32 %v70, %v48
  %v72 = vmul.f32 %v49, %v49
  %v73 = vsub.f32 %v71, %v72
  %v74 = vld [vmem:[%s2] sm:$0x7]
  %v75 = vmul.f32 %v73, %v74
  %v76 = vmul.f32 %v75, %v74
  %v77 = vadd.f32 %v76, 1e-05
  %v78 = vrsqrt.pop %v77
  %v79 = vmul.f32 %v74, %v78
  %v81 = vrot.slane %v74, 1
  %v83 = vmul.f32 %v79, %v81
  %v84 = vmul.f32 %v49, %v83
  %v86 = vrot.slane %v84, 6
  %v88 = vsub.f32 %v74, %v86
  %v89 = vld [vmem:[%s1] sm:$0xff]
  %v90 = vld [vmem:[%s1 + $0x8] sm:$0xff]
  %v91 = vld [vmem:[%s1 + $0x10] sm:$0xff]
  %v92 = vld [vmem:[%s1 + $0x18] sm:$0xff]
  %v93 = vld [vmem:[%s1 + $0x20] sm:$0xff]
  %v94 = vld [vmem:[%s1 + $0x28] sm:$0xff]
  %v95 = vld [vmem:[%s1 + $0x30] sm:$0xff]
  %v96 = vld [vmem:[%s1 + $0x38] sm:$0xff]
  %v97 = vld [vmem:[%s1 + $0x40] sm:$0xff]
  %v98 = vld [vmem:[%s1 + $0x48] sm:$0xff]
  %v99 = vld [vmem:[%s1 + $0x50] sm:$0xff]
  %v100 = vld [vmem:[%s1 + $0x58] sm:$0xff]
  %v101 = vld [vmem:[%s1 + $0x60] sm:$0xff]
  %v102 = vld [vmem:[%s1 + $0x68] sm:$0xff]
  %v103 = vld [vmem:[%s1 + $0x70] sm:$0xff]
  %v104 = vld [vmem:[%s1 + $0x78] sm:$0xff]
  %v105 = vld [vmem:[%s1 + $0x80] sm:$0xff]
  %v106 = vld [vmem:[%s1 + $0x88] sm:$0xff]
  %v107 = vld [vmem:[%s1 + $0x90] sm:$0xff]
  %v108 = vld [vmem:[%s1 + $0x98] sm:$0xff]
  %v109 = vld [vmem:[%s1 + $0xa0] sm:$0xff]
  %v110 = vld [vmem:[%s1 + $0xa8] sm:$0xff]
  %v111 = vld [vmem:[%s1 + $0xb0] sm:$0xff]
  %v112 = vld [vmem:[%s1 + $0xb8] sm:$0xff]
  %v113 = vld [vmem:[%s1 + $0xc0] sm:$0xff]
  %v114 = vld [vmem:[%s1 + $0xc8] sm:$0xff]
  %v115 = vld [vmem:[%s1 + $0xd0] sm:$0xff]
  %v116 = vld [vmem:[%s1 + $0xd8] sm:$0xff]
  %v117 = vld [vmem:[%s1 + $0xe0] sm:$0xff]
  %v118 = vld [vmem:[%s1 + $0xe8] sm:$0xff]
  %v119 = vld [vmem:[%s1 + $0xf0] sm:$0xff]
  %v120 = vld [vmem:[%s1 + $0xf8] sm:$0xff]
  %v121 = vld [vmem:[%s1 + $0x100] sm:$0xf]
  %123 = vset.pattern.permute.xlu0 0
  %124 = vperm.xlu0 %123, %v89
  %v125 = vpop.permute.xlu0 %124
  %128 = vset.pattern.permute.xlu0 0
  %129 = vperm.xlu0 %128, %v90
  %v130 = vpop.permute.xlu0 %129
  %133 = vset.pattern.permute.xlu0 0
  %134 = vperm.xlu0 %133, %v91
  %v135 = vpop.permute.xlu0 %134
  %138 = vset.pattern.permute.xlu0 0
  %139 = vperm.xlu0 %138, %v92
  %v140 = vpop.permute.xlu0 %139
  %143 = vset.pattern.permute.xlu0 0
  %144 = vperm.xlu0 %143, %v93
  %v145 = vpop.permute.xlu0 %144
  %148 = vset.pattern.permute.xlu0 0
  %149 = vperm.xlu0 %148, %v94
  %v150 = vpop.permute.xlu0 %149
  %153 = vset.pattern.permute.xlu0 0
  %154 = vperm.xlu0 %153, %v95
  %v155 = vpop.permute.xlu0 %154
  %158 = vset.pattern.permute.xlu0 0
  %159 = vperm.xlu0 %158, %v96
  %v160 = vpop.permute.xlu0 %159
  %163 = vset.pattern.permute.xlu0 0
  %164 = vperm.xlu0 %163, %v97
  %v165 = vpop.permute.xlu0 %164
  %168 = vset.pattern.permute.xlu0 0
  %169 = vperm.xlu0 %168, %v98
  %v170 = vpop.permute.xlu0 %169
  %173 = vset.pattern.permute.xlu0 0
  %174 = vperm.xlu0 %173, %v99
  %v175 = vpop.permute.xlu0 %174
  %178 = vset.pattern.permute.xlu0 0
  %179 = vperm.xlu0 %178, %v100
  %v180 = vpop.permute.xlu0 %179
  %183 = vset.pattern.permute.xlu0 0
  %184 = vperm.xlu0 %183, %v101
  %v185 = vpop.permute.xlu0 %184
  %188 = vset.pattern.permute.xlu0 0
  %189 = vperm.xlu0 %188, %v102
  %v190 = vpop.permute.xlu0 %189
  %193 = vset.pattern.permute.xlu0 0
  %194 = vperm.xlu0 %193, %v103
  %v195 = vpop.permute.xlu0 %194
  %198 = vset.pattern.permute.xlu0 0
  %199 = vperm.xlu0 %198, %v104
  %v200 = vpop.permute.xlu0 %199
  %203 = vset.pattern.permute.xlu0 0
  %204 = vperm.xlu0 %203, %v105
  %v205 = vpop.permute.xlu0 %204
  %208 = vset.pattern.permute.xlu0 0
  %209 = vperm.xlu0 %208, %v106
  %v210 = vpop.permute.xlu0 %209
  %213 = vset.pattern.permute.xlu0 0
  %214 = vperm.xlu0 %213, %v107
  %v215 = vpop.permute.xlu0 %214
  %218 = vset.pattern.permute.xlu0 0
  %219 = vperm.xlu0 %218, %v108
  %v220 = vpop.permute.xlu0 %219
  %223 = vset.pattern.permute.xlu0 0
  %224 = vperm.xlu0 %223, %v109
  %v225 = vpop.permute.xlu0 %224
  %228 = vset.pattern.permute.xlu0 0
  %229 = vperm.xlu0 %228, %v110
  %v230 = vpop.permute.xlu0 %229
  %233 = vset.pattern.permute.xlu0 0
  %234 = vperm.xlu0 %233, %v111
  %v235 = vpop.permute.xlu0 %234
  %238 = vset.pattern.permute.xlu0 0
  %239 = vperm.xlu0 %238, %v112
  %v240 = vpop.permute.xlu0 %239
  %243 = vset.pattern.permute.xlu0 0
  %244 = vperm.xlu0 %243, %v113
  %v245 = vpop.permute.xlu0 %244
  %248 = vset.pattern.permute.xlu0 0
  %249 = vperm.xlu0 %248, %v114
  %v250 = vpop.permute.xlu0 %249
  %253 = vset.pattern.permute.xlu0 0
  %254 = vperm.xlu0 %253, %v115
  %v255 = vpop.permute.xlu0 %254
  %258 = vset.pattern.permute.xlu0 0
  %259 = vperm.xlu0 %258, %v116
  %v260 = vpop.permute.xlu0 %259
  %263 = vset.pattern.permute.xlu0 0
  %264 = vperm.xlu0 %263, %v117
  %v265 = vpop.permute.xlu0 %264
  %268 = vset.pattern.permute.xlu0 0
  %269 = vperm.xlu0 %268, %v118
  %v270 = vpop.permute.xlu0 %269
  %273 = vset.pattern.permute.xlu0 0
  %274 = vperm.xlu0 %273, %v119
  %v275 = vpop.permute.xlu0 %274
  %278 = vset.pattern.permute.xlu0 0
  %279 = vperm.xlu0 %278, %v120
  %v280 = vpop.permute.xlu0 %279
  %283 = vset.pattern.permute.xlu0 0
  %284 = vperm.xlu0 %283, %v121
  %v285 = vpop.permute.xlu0 %284
  %v287 = vlaneseq
  %v288 = vshrl.u32 %v287, 7
  %v289 = vsub.s32 0, %v288
  %v290 = vrot.slane %v83, %v289
  %v291 = vmul.f32 %v125, %v290
  %v292 = vmul.f32 %v130, %v290
  %v293 = vmul.f32 %v135, %v290
  %v294 = vmul.f32 %v140, %v290
  %v295 = vmul.f32 %v145, %v290
  %v296 = vmul.f32 %v150, %v290
  %v297 = vmul.f32 %v155, %v290
  %v298 = vmul.f32 %v160, %v290
  %v299 = vmul.f32 %v165, %v290
  %v300 = vmul.f32 %v170, %v290
  %v301 = vmul.f32 %v175, %v290
  %v302 = vmul.f32 %v180, %v290
  %v303 = vmul.f32 %v185, %v290
  %v304 = vmul.f32 %v190, %v290
  %v305 = vmul.f32 %v195, %v290
  %v306 = vmul.f32 %v200, %v290
  %v307 = vmul.f32 %v205, %v290
  %v308 = vmul.f32 %v210, %v290
  %v309 = vmul.f32 %v215, %v290
  %v310 = vmul.f32 %v220, %v290
  %v311 = vmul.f32 %v225, %v290
  %v312 = vmul.f32 %v230, %v290
  %v313 = vmul.f32 %v235, %v290
  %v314 = vmul.f32 %v240, %v290
  %v315 = vmul.f32 %v245, %v290
  %v316 = vmul.f32 %v250, %v290
  %v317 = vmul.f32 %v255, %v290
  %v318 = vmul.f32 %v260, %v290
  %v319 = vmul.f32 %v265, %v290
  %v320 = vmul.f32 %v270, %v290
  %v321 = vmul.f32 %v275, %v290
  %v322 = vmul.f32 %v280, %v290
  %v323 = vmul.f32 %v285, %v290
  %v324 = vlaneseq
  %v325 = vshrl.u32 %v324, 7
  %v326 = vsub.s32 2, %v325
  %v327 = vrot.slane %v88, %v326
  %v328 = vadd.f32 %v291, %v327
  %v329 = vadd.f32 %v292, %v327
  %v330 = vadd.f32 %v293, %v327
  %v331 = vadd.f32 %v294, %v327
  %v332 = vadd.f32 %v295, %v327
  %v333 = vadd.f32 %v296, %v327
  %v334 = vadd.f32 %v297, %v327
  %v335 = vadd.f32 %v298, %v327
  %v336 = vadd.f32 %v299, %v327
  %v337 = vadd.f32 %v300, %v327
  %v338 = vadd.f32 %v301, %v327
  %v339 = vadd.f32 %v302, %v327
  %v340 = vadd.f32 %v303, %v327
  %v341 = vadd.f32 %v304, %v327
  %v342 = vadd.f32 %v305, %v327
  %v343 = vadd.f32 %v306, %v327
  %v344 = vadd.f32 %v307, %v327
  %v345 = vadd.f32 %v308, %v327
  %v346 = vadd.f32 %v309, %v327
  %v347 = vadd.f32 %v310, %v327
  %v348 = vadd.f32 %v311, %v327
  %v349 = vadd.f32 %v312, %v327
  %v350 = vadd.f32 %v313, %v327
  %v351 = vadd.f32 %v314, %v327
  %v352 = vadd.f32 %v315, %v327
  %v353 = vadd.f32 %v316, %v327
  %v354 = vadd.f32 %v317, %v327
  %v355 = vadd.f32 %v318, %v327
  %v356 = vadd.f32 %v319, %v327
  %v357 = vadd.f32 %v320, %v327
  %v358 = vadd.f32 %v321, %v327
  %v359 = vadd.f32 %v322, %v327
  %v360 = vadd.f32 %v323, %v327
  %v361 = vmax.f32 %v328, 0.0
  %v362 = vmax.f32 %v329, 0.0
  %v363 = vmax.f32 %v330, 0.0
  %v364 = vmax.f32 %v331, 0.0
  %v365 = vmax.f32 %v332, 0.0
  %v366 = vmax.f32 %v333, 0.0
  %v367 = vmax.f32 %v334, 0.0
  %v368 = vmax.f32 %v335, 0.0
  %v369 = vmax.f32 %v336, 0.0
  %v370 = vmax.f32 %v337, 0.0
  %v371 = vmax.f32 %v338, 0.0
  %v372 = vmax.f32 %v339, 0.0
  %v373 = vmax.f32 %v340, 0.0
  %v374 = vmax.f32 %v341, 0.0
  %v375 = vmax.f32 %v342, 0.0
  %v376 = vmax.f32 %v343, 0.0
  %v377 = vmax.f32 %v344, 0.0
  %v378 = vmax.f32 %v345, 0.0
  %v379 = vmax.f32 %v346, 0.0
  %v380 = vmax.f32 %v347, 0.0
  %v381 = vmax.f32 %v348, 0.0
  %v382 = vmax.f32 %v349, 0.0
  %v383 = vmax.f32 %v350, 0.0
  %v384 = vmax.f32 %v351, 0.0
  %v385 = vmax.f32 %v352, 0.0
  %v386 = vmax.f32 %v353, 0.0
  %v387 = vmax.f32 %v354, 0.0
  %v388 = vmax.f32 %v355, 0.0
  %v389 = vmax.f32 %v356, 0.0
  %v390 = vmax.f32 %v357, 0.0
  %v391 = vmax.f32 %v358, 0.0
  %v392 = vmax.f32 %v359, 0.0
  %v393 = vmax.f32 %v360, 0.0
  %v394 = vld [vmem:[%s3] sm:$0xff]
  %v395 = vld [vmem:[%s3 + $0x8] sm:$0xff]
  %396 = vset.pattern.permute.xlu0 1
  %397 = vperm.xlu0 %396, %v89
  %v398 = vpop.permute.xlu0 %397
  %400 = vset.pattern.permute.xlu0 1
  %401 = vperm.xlu0 %400, %v90
  %v402 = vpop.permute.xlu0 %401
  %404 = vset.pattern.permute.xlu0 1
  %405 = vperm.xlu0 %404, %v91
  %v406 = vpop.permute.xlu0 %405
  %408 = vset.pattern.permute.xlu0 1
  %409 = vperm.xlu0 %408, %v92
  %v410 = vpop.permute.xlu0 %409
  %412 = vset.pattern.permute.xlu0 1
  %413 = vperm.xlu0 %412, %v93
  %v414 = vpop.permute.xlu0 %413
  %416 = vset.pattern.permute.xlu0 1
  %417 = vperm.xlu0 %416, %v94
  %v418 = vpop.permute.xlu0 %417
  %420 = vset.pattern.permute.xlu0 1
  %421 = vperm.xlu0 %420, %v95
  %v422 = vpop.permute.xlu0 %421
  %424 = vset.pattern.permute.xlu0 1
  %425 = vperm.xlu0 %424, %v96
  %v426 = vpop.permute.xlu0 %425
  %428 = vset.pattern.permute.xlu0 1
  %429 = vperm.xlu0 %428, %v97
  %v430 = vpop.permute.xlu0 %429
  %432 = vset.pattern.permute.xlu0 1
  %433 = vperm.xlu0 %432, %v98
  %v434 = vpop.permute.xlu0 %433
  %436 = vset.pattern.permute.xlu0 1
  %437 = vperm.xlu0 %436, %v99
  %v438 = vpop.permute.xlu0 %437
  %440 = vset.pattern.permute.xlu0 1
  %441 = vperm.xlu0 %440, %v100
  %v442 = vpop.permute.xlu0 %441
  %444 = vset.pattern.permute.xlu0 1
  %445 = vperm.xlu0 %444, %v101
  %v446 = vpop.permute.xlu0 %445
  %448 = vset.pattern.permute.xlu0 1
  %449 = vperm.xlu0 %448, %v102
  %v450 = vpop.permute.xlu0 %449
  %452 = vset.pattern.permute.xlu0 1
  %453 = vperm.xlu0 %452, %v103
  %v454 = vpop.permute.xlu0 %453
  %456 = vset.pattern.permute.xlu0 1
  %457 = vperm.xlu0 %456, %v104
  %v458 = vpop.permute.xlu0 %457
  %460 = vset.pattern.permute.xlu0 1
  %461 = vperm.xlu0 %460, %v105
  %v462 = vpop.permute.xlu0 %461
  %464 = vset.pattern.permute.xlu0 1
  %465 = vperm.xlu0 %464, %v106
  %v466 = vpop.permute.xlu0 %465
  %468 = vset.pattern.permute.xlu0 1
  %469 = vperm.xlu0 %468, %v107
  %v470 = vpop.permute.xlu0 %469
  %472 = vset.pattern.permute.xlu0 1
  %473 = vperm.xlu0 %472, %v108
  %v474 = vpop.permute.xlu0 %473
  %476 = vset.pattern.permute.xlu0 1
  %477 = vperm.xlu0 %476, %v109
  %v478 = vpop.permute.xlu0 %477
  %480 = vset.pattern.permute.xlu0 1
  %481 = vperm.xlu0 %480, %v110
  %v482 = vpop.permute.xlu0 %481
  %484 = vset.pattern.permute.xlu0 1
  %485 = vperm.xlu0 %484, %v111
  %v486 = vpop.permute.xlu0 %485
  %488 = vset.pattern.permute.xlu0 1
  %489 = vperm.xlu0 %488, %v112
  %v490 = vpop.permute.xlu0 %489
  %492 = vset.pattern.permute.xlu0 1
  %493 = vperm.xlu0 %492, %v113
  %v494 = vpop.permute.xlu0 %493
  %496 = vset.pattern.permute.xlu0 1
  %497 = vperm.xlu0 %496, %v114
  %v498 = vpop.permute.xlu0 %497
  %500 = vset.pattern.permute.xlu0 1
  %501 = vperm.xlu0 %500, %v115
  %v502 = vpop.permute.xlu0 %501
  %504 = vset.pattern.permute.xlu0 1
  %505 = vperm.xlu0 %504, %v116
  %v506 = vpop.permute.xlu0 %505
  %508 = vset.pattern.permute.xlu0 1
  %509 = vperm.xlu0 %508, %v117
  %v510 = vpop.permute.xlu0 %509
  %512 = vset.pattern.permute.xlu0 1
  %513 = vperm.xlu0 %512, %v118
  %v514 = vpop.permute.xlu0 %513
  %516 = vset.pattern.permute.xlu0 1
  %517 = vperm.xlu0 %516, %v119
  %v518 = vpop.permute.xlu0 %517
  %520 = vset.pattern.permute.xlu0 1
  %521 = vperm.xlu0 %520, %v120
  %v522 = vpop.permute.xlu0 %521
  %524 = vset.pattern.permute.xlu0 1
  %525 = vperm.xlu0 %524, %v121
  %v526 = vpop.permute.xlu0 %525
  %v528 = vmul.f32 %v398, %v290
  %v529 = vmul.f32 %v402, %v290
  %v530 = vmul.f32 %v406, %v290
  %v531 = vmul.f32 %v410, %v290
  %v532 = vmul.f32 %v414, %v290
  %v533 = vmul.f32 %v418, %v290
  %v534 = vmul.f32 %v422, %v290
  %v535 = vmul.f32 %v426, %v290
  %v536 = vmul.f32 %v430, %v290
  %v537 = vmul.f32 %v434, %v290
  %v538 = vmul.f32 %v438, %v290
  %v539 = vmul.f32 %v442, %v290
  %v540 = vmul.f32 %v446, %v290
  %v541 = vmul.f32 %v450, %v290
  %v542 = vmul.f32 %v454, %v290
  %v543 = vmul.f32 %v458, %v290
  %v544 = vmul.f32 %v462, %v290
  %v545 = vmul.f32 %v466, %v290
  %v546 = vmul.f32 %v470, %v290
  %v547 = vmul.f32 %v474, %v290
  %v548 = vmul.f32 %v478, %v290
  %v549 = vmul.f32 %v482, %v290
  %v550 = vmul.f32 %v486, %v290
  %v551 = vmul.f32 %v490, %v290
  %v552 = vmul.f32 %v494, %v290
  %v553 = vmul.f32 %v498, %v290
  %v554 = vmul.f32 %v502, %v290
  %v555 = vmul.f32 %v506, %v290
  %v556 = vmul.f32 %v510, %v290
  %v557 = vmul.f32 %v514, %v290
  %v558 = vmul.f32 %v518, %v290
  %v559 = vmul.f32 %v522, %v290
  %v560 = vmul.f32 %v526, %v290
  %v561 = vadd.f32 %v528, %v327
  %v562 = vadd.f32 %v529, %v327
  %v563 = vadd.f32 %v530, %v327
  %v564 = vadd.f32 %v531, %v327
  %v565 = vadd.f32 %v532, %v327
  %v566 = vadd.f32 %v533, %v327
  %v567 = vadd.f32 %v534, %v327
  %v568 = vadd.f32 %v535, %v327
  %v569 = vadd.f32 %v536, %v327
  %v570 = vadd.f32 %v537, %v327
  %v571 = vadd.f32 %v538, %v327
  %v572 = vadd.f32 %v539, %v327
  %v573 = vadd.f32 %v540, %v327
  %v574 = vadd.f32 %v541, %v327
  %v575 = vadd.f32 %v542, %v327
  %v576 = vadd.f32 %v543, %v327
  %v577 = vadd.f32 %v544, %v327
  %v578 = vadd.f32 %v545, %v327
  %v579 = vadd.f32 %v546, %v327
  %v580 = vadd.f32 %v547, %v327
  %v581 = vadd.f32 %v548, %v327
  %v582 = vadd.f32 %v549, %v327
  %v583 = vadd.f32 %v550, %v327
  %v584 = vadd.f32 %v551, %v327
  %v585 = vadd.f32 %v552, %v327
  %v586 = vadd.f32 %v553, %v327
  %v587 = vadd.f32 %v554, %v327
  %v588 = vadd.f32 %v555, %v327
  %v589 = vadd.f32 %v556, %v327
  %v590 = vadd.f32 %v557, %v327
  %v591 = vadd.f32 %v558, %v327
  %v592 = vadd.f32 %v559, %v327
  %v593 = vadd.f32 %v560, %v327
  %v594 = vmax.f32 %v561, 0.0
  %v595 = vmax.f32 %v562, 0.0
  %v596 = vmax.f32 %v563, 0.0
  %v597 = vmax.f32 %v564, 0.0
  %v598 = vmax.f32 %v565, 0.0
  %v599 = vmax.f32 %v566, 0.0
  %v600 = vmax.f32 %v567, 0.0
  %v601 = vmax.f32 %v568, 0.0
  %v602 = vmax.f32 %v569, 0.0
  %v603 = vmax.f32 %v570, 0.0
  %v604 = vmax.f32 %v571, 0.0
  %v605 = vmax.f32 %v572, 0.0
  %v606 = vmax.f32 %v573, 0.0
  %v607 = vmax.f32 %v574, 0.0
  %v608 = vmax.f32 %v575, 0.0
  %v609 = vmax.f32 %v576, 0.0
  %v610 = vmax.f32 %v577, 0.0
  %v611 = vmax.f32 %v578, 0.0
  %v612 = vmax.f32 %v579, 0.0
  %v613 = vmax.f32 %v580, 0.0
  %v614 = vmax.f32 %v581, 0.0
  %v615 = vmax.f32 %v582, 0.0
  %v616 = vmax.f32 %v583, 0.0
  %v617 = vmax.f32 %v584, 0.0
  %v618 = vmax.f32 %v585, 0.0
  %v619 = vmax.f32 %v586, 0.0
  %v620 = vmax.f32 %v587, 0.0
  %v621 = vmax.f32 %v588, 0.0
  %v622 = vmax.f32 %v589, 0.0
  %v623 = vmax.f32 %v590, 0.0
  %v624 = vmax.f32 %v591, 0.0
  %v625 = vmax.f32 %v592, 0.0
  %v626 = vmax.f32 %v593, 0.0
  %s627 = scalar_lea.vmem %s3, 16
  %v628 = vld [vmem:[%s627] sm:$0xff]
  %v629 = vld [vmem:[%s627 + $0x8] sm:$0xff]
  %v631 = vsel %vm30, %v594, 0
  %v634 = vsel %vm30, %v595, 0
  %v637 = vsel %vm30, %v596, 0
  %v640 = vsel %vm30, %v597, 0
  %v643 = vsel %vm30, %v598, 0
  %v646 = vsel %vm30, %v599, 0
  %v649 = vsel %vm30, %v600, 0
  %v652 = vsel %vm30, %v601, 0
  %v655 = vsel %vm30, %v602, 0
  %v658 = vsel %vm30, %v603, 0
  %v661 = vsel %vm30, %v604, 0
  %v664 = vsel %vm30, %v605, 0
  %v667 = vsel %vm30, %v606, 0
  %v670 = vsel %vm30, %v607, 0
  %v673 = vsel %vm30, %v608, 0
  %v676 = vsel %vm30, %v609, 0
  %v679 = vsel %vm30, %v610, 0
  %v682 = vsel %vm30, %v611, 0
  %v685 = vsel %vm30, %v612, 0
  %v688 = vsel %vm30, %v613, 0
  %v691 = vsel %vm30, %v614, 0
  %v694 = vsel %vm30, %v615, 0
  %v697 = vsel %vm30, %v616, 0
  %v700 = vsel %vm30, %v617, 0
  %v703 = vsel %vm30, %v618, 0
  %v706 = vsel %vm30, %v619, 0
  %v709 = vsel %vm30, %v620, 0
  %v712 = vsel %vm30, %v621, 0
  %v715 = vsel %vm30, %v622, 0
  %v718 = vsel %vm30, %v623, 0
  %v721 = vsel %vm30, %v624, 0
  %v724 = vsel %vm30, %v625, 0
  %v727 = vsel %vm30, %v626, 0
  %729 = vmatprep.subr.mxu0 0.0
  %730 = vmatpush1.msra.mxu0 %v628
  %731 = vmatprep.subr.mxu0 0.0
  %732 = vmatpush1.msra.mxu0 %v629
  %733 = vmatprep.subr.mxu0 0.0
  %734 = vmatpush1.msra.mxu0 0.0
  %735 = vmatprep.subr.mxu0 0.0
  %736 = vmatpush1.msra.mxu0 0.0
  %737 = vmatprep.subr.mxu0 0.0
  %738 = vmatpush1.msra.mxu0 0.0
  %739 = vmatprep.subr.mxu0 0.0
  %740 = vmatpush1.msra.mxu0 0.0
  %741 = vmatprep.subr.mxu0 0.0
  %742 = vmatpush1.msra.mxu0 0.0
  %743 = vmatprep.subr.mxu0 0.0
  %744 = vmatpush1.msra.mxu0 0.0
  %745 = vmatprep.subr.mxu0 0.0
  %746 = vmatpush1.msra.mxu0 0.0
  %747 = vmatprep.subr.mxu0 0.0
  %748 = vmatpush1.msra.mxu0 0.0
  %749 = vmatprep.subr.mxu0 0.0
  %750 = vmatpush1.msra.mxu0 0.0
  %751 = vmatprep.subr.mxu0 0.0
  %752 = vmatpush1.msra.mxu0 0.0
  %753 = vmatprep.subr.mxu0 0.0
  %754 = vmatpush1.msra.mxu0 0.0
  %755 = vmatprep.subr.mxu0 0.0
  %756 = vmatpush1.msra.mxu0 0.0
  %757 = vmatprep.subr.mxu0 0.0
  %758 = vmatpush1.msra.mxu0 0.0
  %759 = vmatprep.subr.mxu0 0.0
  %760 = vmatpush1.msra.mxu0 0.0
  %761 = vmatprep.subr.mxu0 0.0
  %762 = vmatpush1.msra.mxu0 0.0
  %763 = vmatprep.subr.mxu0 0.0
  %764 = vmatpush1.msra.mxu0 0.0
  %765 = vmatprep.subr.mxu0 0.0
  %766 = vmatpush1.msra.mxu0 0.0
  %767 = vmatprep.subr.mxu0 0.0
  %768 = vmatpush1.msra.mxu0 0.0
  %769 = vmatprep.subr.mxu0 0.0
  %770 = vmatpush1.msra.mxu0 0.0
  %771 = vmatprep.subr.mxu0 0.0
  %772 = vmatpush1.msra.mxu0 0.0
  %773 = vmatprep.subr.mxu0 0.0
  %774 = vmatpush1.msra.mxu0 0.0
  %775 = vmatprep.subr.mxu0 0.0
  %776 = vmatpush1.msra.mxu0 0.0
  %777 = vmatprep.subr.mxu0 0.0
  %778 = vmatpush1.msra.mxu0 0.0
  %779 = vmatprep.subr.mxu0 0.0
  %780 = vmatpush1.msra.mxu0 0.0
  %781 = vmatprep.subr.mxu0 0.0
  %782 = vmatpush1.msra.mxu0 0.0
  %783 = vmatprep.subr.mxu0 0.0
  %784 = vmatpush1.msra.mxu0 0.0
  %785 = vmatprep.subr.mxu0 0.0
  %786 = vmatpush1.msra.mxu0 0.0
  %787 = vmatprep.subr.mxu0 0.0
  %788 = vmatpush1.msra.mxu0 0.0
  %789 = vmatprep.subr.mxu0 0.0
  %790 = vmatpush1.msra.mxu0 0.0
  %791 = vmatprep.subr.mxu0 0.0
  %792 = vmatpush1.msra.mxu0 0.0
  %793 = vmatprep.mubr.f32.mxu0 0.0
  %794 = vmatmul.mubr.f32.gmra.mrb[0].mxu0 %v631
  %v795 = vpop.f32.mrb[0].mxu0
  %v796 = vadd.f32 0.0, %v795
  %v797 = vpop.f32.mrb[0].mxu0
  %798 = vmatprep.mubr.f32.mxu0 0.0
  %799 = vmatmul.mubr.f32.gmra.mrb[0].mxu0 %v634
  %v800 = vpop.f32.mrb[0].mxu0
  %v801 = vadd.f32 0.0, %v800
  %v802 = vpop.f32.mrb[0].mxu0
  %803 = vmatprep.mubr.f32.mxu0 0.0
  %804 = vmatmul.mubr.f32.gmra.mrb[0].mxu0 %v637
  %v805 = vpop.f32.mrb[0].mxu0
  %v806 = vadd.f32 0.0, %v805
  %v807 = vpop.f32.mrb[0].mxu0
  %808 = vmatprep.mubr.f32.mxu0 0.0
  %809 = vmatmul.mubr.f32.gmra.mrb[0].mxu0 %v640
  %v810 = vpop.f32.mrb[0].mxu0
  %v811 = vadd.f32 0.0, %v810
  %v812 = vpop.f32.mrb[0].mxu0
  %813 = vmatprep.mubr.f32.mxu0 0.0
  %814 = vmatmul.mubr.f32.gmra.mrb[0].mxu0 %v643
  %v815 = vpop.f32.mrb[0].mxu0
  %v816 = vadd.f32 0.0, %v815
  %v817 = vpop.f32.mrb[0].mxu0
  %818 = vmatprep.mubr.f32.mxu0 0.0
  %819 = vmatmul.mubr.f32.gmra.mrb[0].mxu0 %v646
  %v820 = vpop.f32.mrb[0].mxu0
  %v821 = vadd.f32 0.0, %v820
  %v822 = vpop.f32.mrb[0].mxu0
  %823 = vmatprep.mubr.f32.mxu0 0.0
  %824 = vmatmul.mubr.f32.gmra.mrb[0].mxu0 %v649
  %v825 = vpop.f32.mrb[0].mxu0
  %v826 = vadd.f32 0.0, %v825
  %v827 = vpop.f32.mrb[0].mxu0
  %828 = vmatprep.mubr.f32.mxu0 0.0
  %829 = vmatmul.mubr.f32.gmra.mrb[0].mxu0 %v652
  %v830 = vpop.f32.mrb[0].mxu0
  %v831 = vadd.f32 0.0, %v830
  %v832 = vpop.f32.mrb[0].mxu0
  %833 = vmatprep.mubr.f32.mxu0 0.0
  %834 = vmatmul.mubr.f32.gmra.mrb[0].mxu0 %v655
  %v835 = vpop.f32.mrb[0].mxu0
  %v836 = vadd.f32 0.0, %v835
  %v837 = vpop.f32.mrb[0].mxu0
  %838 = vmatprep.mubr.f32.mxu0 0.0
  %839 = vmatmul.mubr.f32.gmra.mrb[0].mxu0 %v658
  %v840 = vpop.f32.mrb[0].mxu0
  %v841 = vadd.f32 0.0, %v840
  %v842 = vpop.f32.mrb[0].mxu0
  %843 = vmatprep.mubr.f32.mxu0 0.0
  %844 = vmatmul.mubr.f32.gmra.mrb[0].mxu0 %v661
  %v845 = vpop.f32.mrb[0].mxu0
  %v846 = vadd.f32 0.0, %v845
  %v847 = vpop.f32.mrb[0].mxu0
  %848 = vmatprep.mubr.f32.mxu0 0.0
  %849 = vmatmul.mubr.f32.gmra.mrb[0].mxu0 %v664
  %v850 = vpop.f32.mrb[0].mxu0
  %v851 = vadd.f32 0.0, %v850
  %v852 = vpop.f32.mrb[0].mxu0
  %853 = vmatprep.mubr.f32.mxu0 0.0
  %854 = vmatmul.mubr.f32.gmra.mrb[0].mxu0 %v667
  %v855 = vpop.f32.mrb[0].mxu0
  %v856 = vadd.f32 0.0, %v855
  %v857 = vpop.f32.mrb[0].mxu0
  %858 = vmatprep.mubr.f32.mxu0 0.0
  %859 = vmatmul.mubr.f32.gmra.mrb[0].mxu0 %v670
  %v860 = vpop.f32.mrb[0].mxu0
  %v861 = vadd.f32 0.0, %v860
  %v862 = vpop.f32.mrb[0].mxu0
  %863 = vmatprep.mubr.f32.mxu0 0.0
  %864 = vmatmul.mubr.f32.gmra.mrb[0].mxu0 %v673
  %v865 = vpop.f32.mrb[0].mxu0
  %v866 = vadd.f32 0.0, %v865
  %v867 = vpop.f32.mrb[0].mxu0
  %868 = vmatprep.mubr.f32.mxu0 0.0
  %869 = vmatmul.mubr.f32.gmra.mrb[0].mxu0 %v676
  %v870 = vpop.f32.mrb[0].mxu0
  %v871 = vadd.f32 0.0, %v870
  %v872 = vpop.f32.mrb[0].mxu0
  %873 = vmatprep.mubr.f32.mxu0 0.0
  %874 = vmatmul.mubr.f32.gmra.mrb[0].mxu0 %v679
  %v875 = vpop.f32.mrb[0].mxu0
  %v876 = vadd.f32 0.0, %v875
  %v877 = vpop.f32.mrb[0].mxu0
  %878 = vmatprep.mubr.f32.mxu0 0.0
  %879 = vmatmul.mubr.f32.gmra.mrb[0].mxu0 %v682
  %v880 = vpop.f32.mrb[0].mxu0
  %v881 = vadd.f32 0.0, %v880
  %v882 = vpop.f32.mrb[0].mxu0
  %883 = vmatprep.mubr.f32.mxu0 0.0
  %884 = vmatmul.mubr.f32.gmra.mrb[0].mxu0 %v685
  %v885 = vpop.f32.mrb[0].mxu0
  %v886 = vadd.f32 0.0, %v885
  %v887 = vpop.f32.mrb[0].mxu0
  %888 = vmatprep.mubr.f32.mxu0 0.0
  %889 = vmatmul.mubr.f32.gmra.mrb[0].mxu0 %v688
  %v890 = vpop.f32.mrb[0].mxu0
  %v891 = vadd.f32 0.0, %v890
  %v892 = vpop.f32.mrb[0].mxu0
  %893 = vmatprep.mubr.f32.mxu0 0.0
  %894 = vmatmul.mubr.f32.gmra.mrb[0].mxu0 %v691
  %v895 = vpop.f32.mrb[0].mxu0
  %v896 = vadd.f32 0.0, %v895
  %v897 = vpop.f32.mrb[0].mxu0
  %898 = vmatprep.mubr.f32.mxu0 0.0
  %899 = vmatmul.mubr.f32.gmra.mrb[0].mxu0 %v694
  %v900 = vpop.f32.mrb[0].mxu0
  %v901 = vadd.f32 0.0, %v900
  %v902 = vpop.f32.mrb[0].mxu0
  %903 = vmatprep.mubr.f32.mxu0 0.0
  %904 = vmatmul.mubr.f32.gmra.mrb[0].mxu0 %v697
  %v905 = vpop.f32.mrb[0].mxu0
  %v906 = vadd.f32 0.0, %v905
  %v907 = vpop.f32.mrb[0].mxu0
  %908 = vmatprep.mubr.f32.mxu0 0.0
  %909 = vmatmul.mubr.f32.gmra.mrb[0].mxu0 %v700
  %v910 = vpop.f32.mrb[0].mxu0
  %v911 = vadd.f32 0.0, %v910
  %v912 = vpop.f32.mrb[0].mxu0
  %913 = vmatprep.mubr.f32.mxu0 0.0
  %914 = vmatmul.mubr.f32.gmra.mrb[0].mxu0 %v703
  %v915 = vpop.f32.mrb[0].mxu0
  %v916 = vadd.f32 0.0, %v915
  %v917 = vpop.f32.mrb[0].mxu0
  %918 = vmatprep.mubr.f32.mxu0 0.0
  %919 = vmatmul.mubr.f32.gmra.mrb[0].mxu0 %v706
  %v920 = vpop.f32.mrb[0].mxu0
  %v921 = vadd.f32 0.0, %v920
  %v922 = vpop.f32.mrb[0].mxu0
  %923 = vmatprep.mubr.f32.mxu0 0.0
  %924 = vmatmul.mubr.f32.gmra.mrb[0].mxu0 %v709
  %v925 = vpop.f32.mrb[0].mxu0
  %v926 = vadd.f32 0.0, %v925
  %v927 = vpop.f32.mrb[0].mxu0
  %928 = vmatprep.mubr.f32.mxu0 0.0
  %929 = vmatmul.mubr.f32.gmra.mrb[0].mxu0 %v712
  %v930 = vpop.f32.mrb[0].mxu0
  %v931 = vadd.f32 0.0, %v930
  %v932 = vpop.f32.mrb[0].mxu0
  %933 = vmatprep.mubr.f32.mxu0 0.0
  %934 = vmatmul.mubr.f32.gmra.mrb[0].mxu0 %v715
  %v935 = vpop.f32.mrb[0].mxu0
  %v936 = vadd.f32 0.0, %v935
  %v937 = vpop.f32.mrb[0].mxu0
  %938 = vmatprep.mubr.f32.mxu0 0.0
  %939 = vmatmul.mubr.f32.gmra.mrb[0].mxu0 %v718
  %v940 = vpop.f32.mrb[0].mxu0
  %v941 = vadd.f32 0.0, %v940
  %v942 = vpop.f32.mrb[0].mxu0
  %943 = vmatprep.mubr.f32.mxu0 0.0
  %944 = vmatmul.mubr.f32.gmra.mrb[0].mxu0 %v721
  %v945 = vpop.f32.mrb[0].mxu0
  %v946 = vadd.f32 0.0, %v945
  %v947 = vpop.f32.mrb[0].mxu0
  %948 = vmatprep.mubr.f32.mxu0 0.0
  %949 = vmatmul.mubr.f32.gmra.mrb[0].mxu0 %v724
  %v950 = vpop.f32.mrb[0].mxu0
  %v951 = vadd.f32 0.0, %v950
  %v952 = vpop.f32.mrb[0].mxu0
  %953 = vmatprep.mubr.f32.mxu0 0.0
  %954 = vmatmul.mubr.f32.gmra.mrb[0].mxu0 %v727
  %v955 = vpop.f32.mrb[0].mxu0
  %v956 = vadd.f32 0.0, %v955
  %v957 = vpop.f32.mrb[0].mxu0
  %958 = vdwg.mxu0
  %v960 = vsel %vm30, %v361, 0
  %v963 = vsel %vm30, %v362, 0
  %v966 = vsel %vm30, %v363, 0
  %v969 = vsel %vm30, %v364, 0
  %v972 = vsel %vm30, %v365, 0
  %v975 = vsel %vm30, %v366, 0
  %v978 = vsel %vm30, %v367, 0
  %v981 = vsel %vm30, %v368, 0
  %v984 = vsel %vm30, %v369, 0
  %v987 = vsel %vm30, %v370, 0
  %v990 = vsel %vm30, %v371, 0
  %v993 = vsel %vm30, %v372, 0
  %v996 = vsel %vm30, %v373, 0
  %v999 = vsel %vm30, %v374, 0
  %v1002 = vsel %vm30, %v375, 0
  %v1005 = vsel %vm30, %v376, 0
  %v1008 = vsel %vm30, %v377, 0
  %v1011 = vsel %vm30, %v378, 0
  %v1014 = vsel %vm30, %v379, 0
  %v1017 = vsel %vm30, %v380, 0
  %v1020 = vsel %vm30, %v381, 0
  %v1023 = vsel %vm30, %v382, 0
  %v1026 = vsel %vm30, %v383, 0
  %v1029 = vsel %vm30, %v384, 0
  %v1032 = vsel %vm30, %v385, 0
  %v1035 = vsel %vm30, %v386, 0
  %v1038 = vsel %vm30, %v387, 0
  %v1041 = vsel %vm30, %v388, 0
  %v1044 = vsel %vm30, %v389, 0
  %v1047 = vsel %vm30, %v390, 0
  %v1050 = vsel %vm30, %v391, 0
  %v1053 = vsel %vm30, %v392, 0
  %v1056 = vsel %vm30, %v393, 0
  %1058 = vmatprep.subr.mxu0 0.0
  %1059 = vmatpush1.msra.mxu0 %v394
  %1060 = vmatprep.subr.mxu0 0.0
  %1061 = vmatpush1.msra.mxu0 %v395
  %1062 = vmatprep.subr.mxu0 0.0
  %1063 = vmatpush1.msra.mxu0 0.0
  %1064 = vmatprep.subr.mxu0 0.0
  %1065 = vmatpush1.msra.mxu0 0.0
  %1066 = vmatprep.subr.mxu0 0.0
  %1067 = vmatpush1.msra.mxu0 0.0
  %1068 = vmatprep.subr.mxu0 0.0
  %1069 = vmatpush1.msra.mxu0 0.0
  %1070 = vmatprep.subr.mxu0 0.0
  %1071 = vmatpush1.msra.mxu0 0.0
  %1072 = vmatprep.subr.mxu0 0.0
  %1073 = vmatpush1.msra.mxu0 0.0
  %1074 = vmatprep.subr.mxu0 0.0
  %1075 = vmatpush1.msra.mxu0 0.0
  %1076 = vmatprep.subr.mxu0 0.0
  %1077 = vmatpush1.msra.mxu0 0.0
  %1078 = vmatprep.subr.mxu0 0.0
  %1079 = vmatpush1.msra.mxu0 0.0
  %1080 = vmatprep.subr.mxu0 0.0
  %1081 = vmatpush1.msra.mxu0 0.0
  %1082 = vmatprep.subr.mxu0 0.0
  %1083 = vmatpush1.msra.mxu0 0.0
  %1084 = vmatprep.subr.mxu0 0.0
  %1085 = vmatpush1.msra.mxu0 0.0
  %1086 = vmatprep.subr.mxu0 0.0
  %1087 = vmatpush1.msra.mxu0 0.0
  %1088 = vmatprep.subr.mxu0 0.0
  %1089 = vmatpush1.msra.mxu0 0.0
  %1090 = vmatprep.subr.mxu0 0.0
  %1091 = vmatpush1.msra.mxu0 0.0
  %1092 = vmatprep.subr.mxu0 0.0
  %1093 = vmatpush1.msra.mxu0 0.0
  %1094 = vmatprep.subr.mxu0 0.0
  %1095 = vmatpush1.msra.mxu0 0.0
  %1096 = vmatprep.subr.mxu0 0.0
  %1097 = vmatpush1.msra.mxu0 0.0
  %1098 = vmatprep.subr.mxu0 0.0
  %1099 = vmatpush1.msra.mxu0 0.0
  %1100 = vmatprep.subr.mxu0 0.0
  %1101 = vmatpush1.msra.mxu0 0.0
  %1102 = vmatprep.subr.mxu0 0.0
  %1103 = vmatpush1.msra.mxu0 0.0
  %1104 = vmatprep.subr.mxu0 0.0
  %1105 = vmatpush1.msra.mxu0 0.0
  %1106 = vmatprep.subr.mxu0 0.0
  %1107 = vmatpush1.msra.mxu0 0.0
  %1108 = vmatprep.subr.mxu0 0.0
  %1109 = vmatpush1.msra.mxu0 0.0
  %1110 = vmatprep.subr.mxu0 0.0
  %1111 = vmatpush1.msra.mxu0 0.0
  %1112 = vmatprep.subr.mxu0 0.0
  %1113 = vmatpush1.msra.mxu0 0.0
  %1114 = vmatprep.subr.mxu0 0.0
  %1115 = vmatpush1.msra.mxu0 0.0
  %1116 = vmatprep.subr.mxu0 0.0
  %1117 = vmatpush1.msra.mxu0 0.0
  %1118 = vmatprep.subr.mxu0 0.0
  %1119 = vmatpush1.msra.mxu0 0.0
  %1120 = vmatprep.subr.mxu0 0.0
  %1121 = vmatpush1.msra.mxu0 0.0
  %1122 = vmatprep.mubr.f32.mxu0 0.0
  %1123 = vmatmul.mubr.f32.gmra.mrb[0].mxu0 %v960
  %v1124 = vpop.f32.mrb[0].mxu0
  %v1125 = vadd.f32 %v796, %v1124
  %v1126 = vpop.f32.mrb[0].mxu0
  %1127 = vmatprep.mubr.f32.mxu0 0.0
  %1128 = vmatmul.mubr.f32.gmra.mrb[0].mxu0 %v963
  %v1129 = vpop.f32.mrb[0].mxu0
  %v1130 = vadd.f32 %v801, %v1129
  %v1131 = vpop.f32.mrb[0].mxu0
  %1132 = vmatprep.mubr.f32.mxu0 0.0
  %1133 = vmatmul.mubr.f32.gmra.mrb[0].mxu0 %v966
  %v1134 = vpop.f32.mrb[0].mxu0
  %v1135 = vadd.f32 %v806, %v1134
  %v1136 = vpop.f32.mrb[0].mxu0
  %1137 = vmatprep.mubr.f32.mxu0 0.0
  %1138 = vmatmul.mubr.f32.gmra.mrb[0].mxu0 %v969
  %v1139 = vpop.f32.mrb[0].mxu0
  %v1140 = vadd.f32 %v811, %v1139
  %v1141 = vpop.f32.mrb[0].mxu0
  %1142 = vmatprep.mubr.f32.mxu0 0.0
  %1143 = vmatmul.mubr.f32.gmra.mrb[0].mxu0 %v972
  %v1144 = vpop.f32.mrb[0].mxu0
  %v1145 = vadd.f32 %v816, %v1144
  %v1146 = vpop.f32.mrb[0].mxu0
  %1147 = vmatprep.mubr.f32.mxu0 0.0
  %1148 = vmatmul.mubr.f32.gmra.mrb[0].mxu0 %v975
  %v1149 = vpop.f32.mrb[0].mxu0
  %v1150 = vadd.f32 %v821, %v1149
  %v1151 = vpop.f32.mrb[0].mxu0
  %1152 = vmatprep.mubr.f32.mxu0 0.0
  %1153 = vmatmul.mubr.f32.gmra.mrb[0].mxu0 %v978
  %v1154 = vpop.f32.mrb[0].mxu0
  %v1155 = vadd.f32 %v826, %v1154
  %v1156 = vpop.f32.mrb[0].mxu0
  %1157 = vmatprep.mubr.f32.mxu0 0.0
  %1158 = vmatmul.mubr.f32.gmra.mrb[0].mxu0 %v981
  %v1159 = vpop.f32.mrb[0].mxu0
  %v1160 = vadd.f32 %v831, %v1159
  %v1161 = vpop.f32.mrb[0].mxu0
  %1162 = vmatprep.mubr.f32.mxu0 0.0
  %1163 = vmatmul.mubr.f32.gmra.mrb[0].mxu0 %v984
  %v1164 = vpop.f32.mrb[0].mxu0
  %v1165 = vadd.f32 %v836, %v1164
  %v1166 = vpop.f32.mrb[0].mxu0
  %1167 = vmatprep.mubr.f32.mxu0 0.0
  %1168 = vmatmul.mubr.f32.gmra.mrb[0].mxu0 %v987
  %v1169 = vpop.f32.mrb[0].mxu0
  %v1170 = vadd.f32 %v841, %v1169
  %v1171 = vpop.f32.mrb[0].mxu0
  %1172 = vmatprep.mubr.f32.mxu0 0.0
  %1173 = vmatmul.mubr.f32.gmra.mrb[0].mxu0 %v990
  %v1174 = vpop.f32.mrb[0].mxu0
  %v1175 = vadd.f32 %v846, %v1174
  %v1176 = vpop.f32.mrb[0].mxu0
  %1177 = vmatprep.mubr.f32.mxu0 0.0
  %1178 = vmatmul.mubr.f32.gmra.mrb[0].mxu0 %v993
  %v1179 = vpop.f32.mrb[0].mxu0
  %v1180 = vadd.f32 %v851, %v1179
  %v1181 = vpop.f32.mrb[0].mxu0
  %1182 = vmatprep.mubr.f32.mxu0 0.0
  %1183 = vmatmul.mubr.f32.gmra.mrb[0].mxu0 %v996
  %v1184 = vpop.f32.mrb[0].mxu0
  %v1185 = vadd.f32 %v856, %v1184
  %v1186 = vpop.f32.mrb[0].mxu0
  %1187 = vmatprep.mubr.f32.mxu0 0.0
  %1188 = vmatmul.mubr.f32.gmra.mrb[0].mxu0 %v999
  %v1189 = vpop.f32.mrb[0].mxu0
  %v1190 = vadd.f32 %v861, %v1189
  %v1191 = vpop.f32.mrb[0].mxu0
  %1192 = vmatprep.mubr.f32.mxu0 0.0
  %1193 = vmatmul.mubr.f32.gmra.mrb[0].mxu0 %v1002
  %v1194 = vpop.f32.mrb[0].mxu0
  %v1195 = vadd.f32 %v866, %v1194
  %v1196 = vpop.f32.mrb[0].mxu0
  %1197 = vmatprep.mubr.f32.mxu0 0.0
  %1198 = vmatmul.mubr.f32.gmra.mrb[0].mxu0 %v1005
  %v1199 = vpop.f32.mrb[0].mxu0
  %v1200 = vadd.f32 %v871, %v1199
  %v1201 = vpop.f32.mrb[0].mxu0
  %1202 = vmatprep.mubr.f32.mxu0 0.0
  %1203 = vmatmul.mubr.f32.gmra.mrb[0].mxu0 %v1008
  %v1204 = vpop.f32.mrb[0].mxu0
  %v1205 = vadd.f32 %v876, %v1204
  %v1206 = vpop.f32.mrb[0].mxu0
  %1207 = vmatprep.mubr.f32.mxu0 0.0
  %1208 = vmatmul.mubr.f32.gmra.mrb[0].mxu0 %v1011
  %v1209 = vpop.f32.mrb[0].mxu0
  %v1210 = vadd.f32 %v881, %v1209
  %v1211 = vpop.f32.mrb[0].mxu0
  %1212 = vmatprep.mubr.f32.mxu0 0.0
  %1213 = vmatmul.mubr.f32.gmra.mrb[0].mxu0 %v1014
  %v1214 = vpop.f32.mrb[0].mxu0
  %v1215 = vadd.f32 %v886, %v1214
  %v1216 = vpop.f32.mrb[0].mxu0
  %1217 = vmatprep.mubr.f32.mxu0 0.0
  %1218 = vmatmul.mubr.f32.gmra.mrb[0].mxu0 %v1017
  %v1219 = vpop.f32.mrb[0].mxu0
  %v1220 = vadd.f32 %v891, %v1219
  %v1221 = vpop.f32.mrb[0].mxu0
  %1222 = vmatprep.mubr.f32.mxu0 0.0
  %1223 = vmatmul.mubr.f32.gmra.mrb[0].mxu0 %v1020
  %v1224 = vpop.f32.mrb[0].mxu0
  %v1225 = vadd.f32 %v896, %v1224
  %v1226 = vpop.f32.mrb[0].mxu0
  %1227 = vmatprep.mubr.f32.mxu0 0.0
  %1228 = vmatmul.mubr.f32.gmra.mrb[0].mxu0 %v1023
  %v1229 = vpop.f32.mrb[0].mxu0
  %v1230 = vadd.f32 %v901, %v1229
  %v1231 = vpop.f32.mrb[0].mxu0
  %1232 = vmatprep.mubr.f32.mxu0 0.0
  %1233 = vmatmul.mubr.f32.gmra.mrb[0].mxu0 %v1026
  %v1234 = vpop.f32.mrb[0].mxu0
  %v1235 = vadd.f32 %v906, %v1234
  %v1236 = vpop.f32.mrb[0].mxu0
  %1237 = vmatprep.mubr.f32.mxu0 0.0
  %1238 = vmatmul.mubr.f32.gmra.mrb[0].mxu0 %v1029
  %v1239 = vpop.f32.mrb[0].mxu0
  %v1240 = vadd.f32 %v911, %v1239
  %v1241 = vpop.f32.mrb[0].mxu0
  %1242 = vmatprep.mubr.f32.mxu0 0.0
  %1243 = vmatmul.mubr.f32.gmra.mrb[0].mxu0 %v1032
  %v1244 = vpop.f32.mrb[0].mxu0
  %v1245 = vadd.f32 %v916, %v1244
  %v1246 = vpop.f32.mrb[0].mxu0
  %1247 = vmatprep.mubr.f32.mxu0 0.0
  %1248 = vmatmul.mubr.f32.gmra.mrb[0].mxu0 %v1035
  %v1249 = vpop.f32.mrb[0].mxu0
  %v1250 = vadd.f32 %v921, %v1249
  %v1251 = vpop.f32.mrb[0].mxu0
  %1252 = vmatprep.mubr.f32.mxu0 0.0
  %1253 = vmatmul.mubr.f32.gmra.mrb[0].mxu0 %v1038
  %v1254 = vpop.f32.mrb[0].mxu0
  %v1255 = vadd.f32 %v926, %v1254
  %v1256 = vpop.f32.mrb[0].mxu0
  %1257 = vmatprep.mubr.f32.mxu0 0.0
  %1258 = vmatmul.mubr.f32.gmra.mrb[0].mxu0 %v1041
  %v1259 = vpop.f32.mrb[0].mxu0
  %v1260 = vadd.f32 %v931, %v1259
  %v1261 = vpop.f32.mrb[0].mxu0
  %1262 = vmatprep.mubr.f32.mxu0 0.0
  %1263 = vmatmul.mubr.f32.gmra.mrb[0].mxu0 %v1044
  %v1264 = vpop.f32.mrb[0].mxu0
  %v1265 = vadd.f32 %v936, %v1264
  %v1266 = vpop.f32.mrb[0].mxu0
  %1267 = vmatprep.mubr.f32.mxu0 0.0
  %1268 = vmatmul.mubr.f32.gmra.mrb[0].mxu0 %v1047
  %v1269 = vpop.f32.mrb[0].mxu0
  %v1270 = vadd.f32 %v941, %v1269
  %v1271 = vpop.f32.mrb[0].mxu0
  %1272 = vmatprep.mubr.f32.mxu0 0.0
  %1273 = vmatmul.mubr.f32.gmra.mrb[0].mxu0 %v1050
  %v1274 = vpop.f32.mrb[0].mxu0
  %v1275 = vadd.f32 %v946, %v1274
  %v1276 = vpop.f32.mrb[0].mxu0
  %1277 = vmatprep.mubr.f32.mxu0 0.0
  %1278 = vmatmul.mubr.f32.gmra.mrb[0].mxu0 %v1053
  %v1279 = vpop.f32.mrb[0].mxu0
  %v1280 = vadd.f32 %v951, %v1279
  %v1281 = vpop.f32.mrb[0].mxu0
  %1282 = vmatprep.mubr.f32.mxu0 0.0
  %1283 = vmatmul.mubr.f32.gmra.mrb[0].mxu0 %v1056
  %v1284 = vpop.f32.mrb[0].mxu0
  %v1285 = vadd.f32 %v956, %v1284
  %v1286 = vpop.f32.mrb[0].mxu0
  %1287 = vdwg.mxu0
  %1288 = vset.pattern.permute.xlu0 2
  %1289 = vperm.xlu0 %1288, %v89
  %v1290 = vpop.permute.xlu0 %1289
  %1292 = vset.pattern.permute.xlu0 2
  %1293 = vperm.xlu0 %1292, %v90
  %v1294 = vpop.permute.xlu0 %1293
  %1296 = vset.pattern.permute.xlu0 2
  %1297 = vperm.xlu0 %1296, %v91
  %v1298 = vpop.permute.xlu0 %1297
  %1300 = vset.pattern.permute.xlu0 2
  %1301 = vperm.xlu0 %1300, %v92
  %v1302 = vpop.permute.xlu0 %1301
  %1304 = vset.pattern.permute.xlu0 2
  %1305 = vperm.xlu0 %1304, %v93
  %v1306 = vpop.permute.xlu0 %1305
  %1308 = vset.pattern.permute.xlu0 2
  %1309 = vperm.xlu0 %1308, %v94
  %v1310 = vpop.permute.xlu0 %1309
  %1312 = vset.pattern.permute.xlu0 2
  %1313 = vperm.xlu0 %1312, %v95
  %v1314 = vpop.permute.xlu0 %1313
  %1316 = vset.pattern.permute.xlu0 2
  %1317 = vperm.xlu0 %1316, %v96
  %v1318 = vpop.permute.xlu0 %1317
  %1320 = vset.pattern.permute.xlu0 2
  %1321 = vperm.xlu0 %1320, %v97
  %v1322 = vpop.permute.xlu0 %1321
  %1324 = vset.pattern.permute.xlu0 2
  %1325 = vperm.xlu0 %1324, %v98
  %v1326 = vpop.permute.xlu0 %1325
  %1328 = vset.pattern.permute.xlu0 2
  %1329 = vperm.xlu0 %1328, %v99
  %v1330 = vpop.permute.xlu0 %1329
  %1332 = vset.pattern.permute.xlu0 2
  %1333 = vperm.xlu0 %1332, %v100
  %v1334 = vpop.permute.xlu0 %1333
  %1336 = vset.pattern.permute.xlu0 2
  %1337 = vperm.xlu0 %1336, %v101
  %v1338 = vpop.permute.xlu0 %1337
  %1340 = vset.pattern.permute.xlu0 2
  %1341 = vperm.xlu0 %1340, %v102
  %v1342 = vpop.permute.xlu0 %1341
  %1344 = vset.pattern.permute.xlu0 2
  %1345 = vperm.xlu0 %1344, %v103
  %v1346 = vpop.permute.xlu0 %1345
  %1348 = vset.pattern.permute.xlu0 2
  %1349 = vperm.xlu0 %1348, %v104
  %v1350 = vpop.permute.xlu0 %1349
  %1352 = vset.pattern.permute.xlu0 2
  %1353 = vperm.xlu0 %1352, %v105
  %v1354 = vpop.permute.xlu0 %1353
  %1356 = vset.pattern.permute.xlu0 2
  %1357 = vperm.xlu0 %1356, %v106
  %v1358 = vpop.permute.xlu0 %1357
  %1360 = vset.pattern.permute.xlu0 2
  %1361 = vperm.xlu0 %1360, %v107
  %v1362 = vpop.permute.xlu0 %1361
  %1364 = vset.pattern.permute.xlu0 2
  %1365 = vperm.xlu0 %1364, %v108
  %v1366 = vpop.permute.xlu0 %1365
  %1368 = vset.pattern.permute.xlu0 2
  %1369 = vperm.xlu0 %1368, %v109
  %v1370 = vpop.permute.xlu0 %1369
  %1372 = vset.pattern.permute.xlu0 2
  %1373 = vperm.xlu0 %1372, %v110
  %v1374 = vpop.permute.xlu0 %1373
  %1376 = vset.pattern.permute.xlu0 2
  %1377 = vperm.xlu0 %1376, %v111
  %v1378 = vpop.permute.xlu0 %1377
  %1380 = vset.pattern.permute.xlu0 2
  %1381 = vperm.xlu0 %1380, %v112
  %v1382 = vpop.permute.xlu0 %1381
  %1384 = vset.pattern.permute.xlu0 2
  %1385 = vperm.xlu0 %1384, %v113
  %v1386 = vpop.permute.xlu0 %1385
  %1388 = vset.pattern.permute.xlu0 2
  %1389 = vperm.xlu0 %1388, %v114
  %v1390 = vpop.permute.xlu0 %1389
  %1392 = vset.pattern.permute.xlu0 2
  %1393 = vperm.xlu0 %1392, %v115
  %v1394 = vpop.permute.xlu0 %1393
  %1396 = vset.pattern.permute.xlu0 2
  %1397 = vperm.xlu0 %1396, %v116
  %v1398 = vpop.permute.xlu0 %1397
  %1400 = vset.pattern.permute.xlu0 2
  %1401 = vperm.xlu0 %1400, %v117
  %v1402 = vpop.permute.xlu0 %1401
  %1404 = vset.pattern.permute.xlu0 2
  %1405 = vperm.xlu0 %1404, %v118
  %v1406 = vpop.permute.xlu0 %1405
  %1408 = vset.pattern.permute.xlu0 2
  %1409 = vperm.xlu0 %1408, %v119
  %v1410 = vpop.permute.xlu0 %1409
  %1412 = vset.pattern.permute.xlu0 2
  %1413 = vperm.xlu0 %1412, %v120
  %v1414 = vpop.permute.xlu0 %1413
  %1416 = vset.pattern.permute.xlu0 2
  %1417 = vperm.xlu0 %1416, %v121
  %v1418 = vpop.permute.xlu0 %1417
  %v1420 = vmul.f32 %v1290, %v290
  %v1421 = vmul.f32 %v1294, %v290
  %v1422 = vmul.f32 %v1298, %v290
  %v1423 = vmul.f32 %v1302, %v290
  %v1424 = vmul.f32 %v1306, %v290
  %v1425 = vmul.f32 %v1310, %v290
  %v1426 = vmul.f32 %v1314, %v290
  %v1427 = vmul.f32 %v1318, %v290
  %v1428 = vmul.f32 %v1322, %v290
  %v1429 = vmul.f32 %v1326, %v290
  %v1430 = vmul.f32 %v1330, %v290
  %v1431 = vmul.f32 %v1334, %v290
  %v1432 = vmul.f32 %v1338, %v290
  %v1433 = vmul.f32 %v1342, %v290
  %v1434 = vmul.f32 %v1346, %v290
  %v1435 = vmul.f32 %v1350, %v290
  %v1436 = vmul.f32 %v1354, %v290
  %v1437 = vmul.f32 %v1358, %v290
  %v1438 = vmul.f32 %v1362, %v290
  %v1439 = vmul.f32 %v1366, %v290
  %v1440 = vmul.f32 %v1370, %v290
  %v1441 = vmul.f32 %v1374, %v290
  %v1442 = vmul.f32 %v1378, %v290
  %v1443 = vmul.f32 %v1382, %v290
  %v1444 = vmul.f32 %v1386, %v290
  %v1445 = vmul.f32 %v1390, %v290
  %v1446 = vmul.f32 %v1394, %v290
  %v1447 = vmul.f32 %v1398, %v290
  %v1448 = vmul.f32 %v1402, %v290
  %v1449 = vmul.f32 %v1406, %v290
  %v1450 = vmul.f32 %v1410, %v290
  %v1451 = vmul.f32 %v1414, %v290
  %v1452 = vmul.f32 %v1418, %v290
  %v1453 = vadd.f32 %v1420, %v327
  %v1454 = vadd.f32 %v1421, %v327
  %v1455 = vadd.f32 %v1422, %v327
  %v1456 = vadd.f32 %v1423, %v327
  %v1457 = vadd.f32 %v1424, %v327
  %v1458 = vadd.f32 %v1425, %v327
  %v1459 = vadd.f32 %v1426, %v327
  %v1460 = vadd.f32 %v1427, %v327
  %v1461 = vadd.f32 %v1428, %v327
  %v1462 = vadd.f32 %v1429, %v327
  %v1463 = vadd.f32 %v1430, %v327
  %v1464 = vadd.f32 %v1431, %v327
  %v1465 = vadd.f32 %v1432, %v327
  %v1466 = vadd.f32 %v1433, %v327
  %v1467 = vadd.f32 %v1434, %v327
  %v1468 = vadd.f32 %v1435, %v327
  %v1469 = vadd.f32 %v1436, %v327
  %v1470 = vadd.f32 %v1437, %v327
  %v1471 = vadd.f32 %v1438, %v327
  %v1472 = vadd.f32 %v1439, %v327
  %v1473 = vadd.f32 %v1440, %v327
  %v1474 = vadd.f32 %v1441, %v327
  %v1475 = vadd.f32 %v1442, %v327
  %v1476 = vadd.f32 %v1443, %v327
  %v1477 = vadd.f32 %v1444, %v327
  %v1478 = vadd.f32 %v1445, %v327
  %v1479 = vadd.f32 %v1446, %v327
  %v1480 = vadd.f32 %v1447, %v327
  %v1481 = vadd.f32 %v1448, %v327
  %v1482 = vadd.f32 %v1449, %v327
  %v1483 = vadd.f32 %v1450, %v327
  %v1484 = vadd.f32 %v1451, %v327
  %v1485 = vadd.f32 %v1452, %v327
  %v1486 = vmax.f32 %v1453, 0.0
  %v1487 = vmax.f32 %v1454, 0.0
  %v1488 = vmax.f32 %v1455, 0.0
  %v1489 = vmax.f32 %v1456, 0.0
  %v1490 = vmax.f32 %v1457, 0.0
  %v1491 = vmax.f32 %v1458, 0.0
  %v1492 = vmax.f32 %v1459, 0.0
  %v1493 = vmax.f32 %v1460, 0.0
  %v1494 = vmax.f32 %v1461, 0.0
  %v1495 = vmax.f32 %v1462, 0.0
  %v1496 = vmax.f32 %v1463, 0.0
  %v1497 = vmax.f32 %v1464, 0.0
  %v1498 = vmax.f32 %v1465, 0.0
  %v1499 = vmax.f32 %v1466, 0.0
  %v1500 = vmax.f32 %v1467, 0.0
  %v1501 = vmax.f32 %v1468, 0.0
  %v1502 = vmax.f32 %v1469, 0.0
  %v1503 = vmax.f32 %v1470, 0.0
  %v1504 = vmax.f32 %v1471, 0.0
  %v1505 = vmax.f32 %v1472, 0.0
  %v1506 = vmax.f32 %v1473, 0.0
  %v1507 = vmax.f32 %v1474, 0.0
  %v1508 = vmax.f32 %v1475, 0.0
  %v1509 = vmax.f32 %v1476, 0.0
  %v1510 = vmax.f32 %v1477, 0.0
  %v1511 = vmax.f32 %v1478, 0.0
  %v1512 = vmax.f32 %v1479, 0.0
  %v1513 = vmax.f32 %v1480, 0.0
  %v1514 = vmax.f32 %v1481, 0.0
  %v1515 = vmax.f32 %v1482, 0.0
  %v1516 = vmax.f32 %v1483, 0.0
  %v1517 = vmax.f32 %v1484, 0.0
  %v1518 = vmax.f32 %v1485, 0.0
  %s1519 = scalar_lea.vmem %s3, 32
  %v1520 = vld [vmem:[%s1519] sm:$0xff]
  %v1521 = vld [vmem:[%s1519 + $0x8] sm:$0xff]
  %v1523 = vsel %vm30, %v1486, 0
  %v1526 = vsel %vm30, %v1487, 0
  %v1529 = vsel %vm30, %v1488, 0
  %v1532 = vsel %vm30, %v1489, 0
  %v1535 = vsel %vm30, %v1490, 0
  %v1538 = vsel %vm30, %v1491, 0
  %v1541 = vsel %vm30, %v1492, 0
  %v1544 = vsel %vm30, %v1493, 0
  %v1547 = vsel %vm30, %v1494, 0
  %v1550 = vsel %vm30, %v1495, 0
  %v1553 = vsel %vm30, %v1496, 0
  %v1556 = vsel %vm30, %v1497, 0
  %v1559 = vsel %vm30, %v1498, 0
  %v1562 = vsel %vm30, %v1499, 0
  %v1565 = vsel %vm30, %v1500, 0
  %v1568 = vsel %vm30, %v1501, 0
  %v1571 = vsel %vm30, %v1502, 0
  %v1574 = vsel %vm30, %v1503, 0
  %v1577 = vsel %vm30, %v1504, 0
  %v1580 = vsel %vm30, %v1505, 0
  %v1583 = vsel %vm30, %v1506, 0
  %v1586 = vsel %vm30, %v1507, 0
  %v1589 = vsel %vm30, %v1508, 0
  %v1592 = vsel %vm30, %v1509, 0
  %v1595 = vsel %vm30, %v1510, 0
  %v1598 = vsel %vm30, %v1511, 0
  %v1601 = vsel %vm30, %v1512, 0
  %v1604 = vsel %vm30, %v1513, 0
  %v1607 = vsel %vm30, %v1514, 0
  %v1610 = vsel %vm30, %v1515, 0
  %v1613 = vsel %vm30, %v1516, 0
  %v1616 = vsel %vm30, %v1517, 0
  %v1619 = vsel %vm30, %v1518, 0
  %1621 = vmatprep.subr.mxu0 0.0
  %1622 = vmatpush1.msra.mxu0 %v1520
  %1623 = vmatprep.subr.mxu0 0.0
  %1624 = vmatpush1.msra.mxu0 %v1521
  %1625 = vmatprep.subr.mxu0 0.0
  %1626 = vmatpush1.msra.mxu0 0.0
  %1627 = vmatprep.subr.mxu0 0.0
  %1628 = vmatpush1.msra.mxu0 0.0
  %1629 = vmatprep.subr.mxu0 0.0
  %1630 = vmatpush1.msra.mxu0 0.0
  %1631 = vmatprep.subr.mxu0 0.0
  %1632 = vmatpush1.msra.mxu0 0.0
  %1633 = vmatprep.subr.mxu0 0.0
  %1634 = vmatpush1.msra.mxu0 0.0
  %1635 = vmatprep.subr.mxu0 0.0
  %1636 = vmatpush1.msra.mxu0 0.0
  %1637 = vmatprep.subr.mxu0 0.0
  %1638 = vmatpush1.msra.mxu0 0.0
  %1639 = vmatprep.subr.mxu0 0.0
  %1640 = vmatpush1.msra.mxu0 0.0
  %1641 = vmatprep.subr.mxu0 0.0
  %1642 = vmatpush1.msra.mxu0 0.0
  %1643 = vmatprep.subr.mxu0 0.0
  %1644 = vmatpush1.msra.mxu0 0.0
  %1645 = vmatprep.subr.mxu0 0.0
  %1646 = vmatpush1.msra.mxu0 0.0
  %1647 = vmatprep.subr.mxu0 0.0
  %1648 = vmatpush1.msra.mxu0 0.0
  %1649 = vmatprep.subr.mxu0 0.0
  %1650 = vmatpush1.msra.mxu0 0.0
  %1651 = vmatprep.subr.mxu0 0.0
  %1652 = vmatpush1.msra.mxu0 0.0
  %1653 = vmatprep.subr.mxu0 0.0
  %1654 = vmatpush1.msra.mxu0 0.0
  %1655 = vmatprep.subr.mxu0 0.0
  %1656 = vmatpush1.msra.mxu0 0.0
  %1657 = vmatprep.subr.mxu0 0.0
  %1658 = vmatpush1.msra.mxu0 0.0
  %1659 = vmatprep.subr.mxu0 0.0
  %1660 = vmatpush1.msra.mxu0 0.0
  %1661 = vmatprep.subr.mxu0 0.0
  %1662 = vmatpush1.msra.mxu0 0.0
  %1663 = vmatprep.subr.mxu0 0.0
  %1664 = vmatpush1.msra.mxu0 0.0
  %1665 = vmatprep.subr.mxu0 0.0
  %1666 = vmatpush1.msra.mxu0 0.0
  %1667 = vmatprep.subr.mxu0 0.0
  %1668 = vmatpush1.msra.mxu0 0.0
  %1669 = vmatprep.subr.mxu0 0.0
  %1670 = vmatpush1.msra.mxu0 0.0
  %1671 = vmatprep.subr.mxu0 0.0
  %1672 = vmatpush1.msra.mxu0 0.0
  %1673 = vmatprep.subr.mxu0 0.0
  %1674 = vmatpush1.msra.mxu0 0.0
  %1675 = vmatprep.subr.mxu0 0.0
  %1676 = vmatpush1.msra.mxu0 0.0
  %1677 = vmatprep.subr.mxu0 0.0
  %1678 = vmatpush1.msra.mxu0 0.0
  %1679 = vmatprep.subr.mxu0 0.0
  %1680 = vmatpush1.msra.mxu0 0.0
  %1681 = vmatprep.subr.mxu0 0.0
  %1682 = vmatpush1.msra.mxu0 0.0
  %1683 = vmatprep.subr.mxu0 0.0
  %1684 = vmatpush1.msra.mxu0 0.0
  %1685 = vmatprep.mubr.f32.mxu0 0.0
  %1686 = vmatmul.mubr.f32.gmra.mrb[0].mxu0 %v1523
  %v1687 = vpop.f32.mrb[0].mxu0
  %v1688 = vadd.f32 0.0, %v1687
  %v1689 = vpop.f32.mrb[0].mxu0
  %1690 = vmatprep.mubr.f32.mxu0 0.0
  %1691 = vmatmul.mubr.f32.gmra.mrb[0].mxu0 %v1526
  %v1692 = vpop.f32.mrb[0].mxu0
  %v1693 = vadd.f32 0.0, %v1692
  %v1694 = vpop.f32.mrb[0].mxu0
  %1695 = vmatprep.mubr.f32.mxu0 0.0
  %1696 = vmatmul.mubr.f32.gmra.mrb[0].mxu0 %v1529
  %v1697 = vpop.f32.mrb[0].mxu0
  %v1698 = vadd.f32 0.0, %v1697
  %v1699 = vpop.f32.mrb[0].mxu0
  %1700 = vmatprep.mubr.f32.mxu0 0.0
  %1701 = vmatmul.mubr.f32.gmra.mrb[0].mxu0 %v1532
  %v1702 = vpop.f32.mrb[0].mxu0
  %v1703 = vadd.f32 0.0, %v1702
  %v1704 = vpop.f32.mrb[0].mxu0
  %1705 = vmatprep.mubr.f32.mxu0 0.0
  %1706 = vmatmul.mubr.f32.gmra.mrb[0].mxu0 %v1535
  %v1707 = vpop.f32.mrb[0].mxu0
  %v1708 = vadd.f32 0.0, %v1707
  %v1709 = vpop.f32.mrb[0].mxu0
  %1710 = vmatprep.mubr.f32.mxu0 0.0
  %1711 = vmatmul.mubr.f32.gmra.mrb[0].mxu0 %v1538
  %v1712 = vpop.f32.mrb[0].mxu0
  %v1713 = vadd.f32 0.0, %v1712
  %v1714 = vpop.f32.mrb[0].mxu0
  %1715 = vmatprep.mubr.f32.mxu0 0.0
  %1716 = vmatmul.mubr.f32.gmra.mrb[0].mxu0 %v1541
  %v1717 = vpop.f32.mrb[0].mxu0
  %v1718 = vadd.f32 0.0, %v1717
  %v1719 = vpop.f32.mrb[0].mxu0
  %1720 = vmatprep.mubr.f32.mxu0 0.0
  %1721 = vmatmul.mubr.f32.gmra.mrb[0].mxu0 %v1544
  %v1722 = vpop.f32.mrb[0].mxu0
  %v1723 = vadd.f32 0.0, %v1722
  %v1724 = vpop.f32.mrb[0].mxu0
  %1725 = vmatprep.mubr.f32.mxu0 0.0
  %1726 = vmatmul.mubr.f32.gmra.mrb[0].mxu0 %v1547
  %v1727 = vpop.f32.mrb[0].mxu0
  %v1728 = vadd.f32 0.0, %v1727
  %v1729 = vpop.f32.mrb[0].mxu0
  %1730 = vmatprep.mubr.f32.mxu0 0.0
  %1731 = vmatmul.mubr.f32.gmra.mrb[0].mxu0 %v1550
  %v1732 = vpop.f32.mrb[0].mxu0
  %v1733 = vadd.f32 0.0, %v1732
  %v1734 = vpop.f32.mrb[0].mxu0
  %1735 = vmatprep.mubr.f32.mxu0 0.0
  %1736 = vmatmul.mubr.f32.gmra.mrb[0].mxu0 %v1553
  %v1737 = vpop.f32.mrb[0].mxu0
  %v1738 = vadd.f32 0.0, %v1737
  %v1739 = vpop.f32.mrb[0].mxu0
  %1740 = vmatprep.mubr.f32.mxu0 0.0
  %1741 = vmatmul.mubr.f32.gmra.mrb[0].mxu0 %v1556
  %v1742 = vpop.f32.mrb[0].mxu0
  %v1743 = vadd.f32 0.0, %v1742
  %v1744 = vpop.f32.mrb[0].mxu0
  %1745 = vmatprep.mubr.f32.mxu0 0.0
  %1746 = vmatmul.mubr.f32.gmra.mrb[0].mxu0 %v1559
  %v1747 = vpop.f32.mrb[0].mxu0
  %v1748 = vadd.f32 0.0, %v1747
  %v1749 = vpop.f32.mrb[0].mxu0
  %1750 = vmatprep.mubr.f32.mxu0 0.0
  %1751 = vmatmul.mubr.f32.gmra.mrb[0].mxu0 %v1562
  %v1752 = vpop.f32.mrb[0].mxu0
  %v1753 = vadd.f32 0.0, %v1752
  %v1754 = vpop.f32.mrb[0].mxu0
  %1755 = vmatprep.mubr.f32.mxu0 0.0
  %1756 = vmatmul.mubr.f32.gmra.mrb[0].mxu0 %v1565
  %v1757 = vpop.f32.mrb[0].mxu0
  %v1758 = vadd.f32 0.0, %v1757
  %v1759 = vpop.f32.mrb[0].mxu0
  %1760 = vmatprep.mubr.f32.mxu0 0.0
  %1761 = vmatmul.mubr.f32.gmra.mrb[0].mxu0 %v1568
  %v1762 = vpop.f32.mrb[0].mxu0
  %v1763 = vadd.f32 0.0, %v1762
  %v1764 = vpop.f32.mrb[0].mxu0
  %1765 = vmatprep.mubr.f32.mxu0 0.0
  %1766 = vmatmul.mubr.f32.gmra.mrb[0].mxu0 %v1571
  %v1767 = vpop.f32.mrb[0].mxu0
  %v1768 = vadd.f32 0.0, %v1767
  %v1769 = vpop.f32.mrb[0].mxu0
  %1770 = vmatprep.mubr.f32.mxu0 0.0
  %1771 = vmatmul.mubr.f32.gmra.mrb[0].mxu0 %v1574
  %v1772 = vpop.f32.mrb[0].mxu0
  %v1773 = vadd.f32 0.0, %v1772
  %v1774 = vpop.f32.mrb[0].mxu0
  %1775 = vmatprep.mubr.f32.mxu0 0.0
  %1776 = vmatmul.mubr.f32.gmra.mrb[0].mxu0 %v1577
  %v1777 = vpop.f32.mrb[0].mxu0
  %v1778 = vadd.f32 0.0, %v1777
  %v1779 = vpop.f32.mrb[0].mxu0
  %1780 = vmatprep.mubr.f32.mxu0 0.0
  %1781 = vmatmul.mubr.f32.gmra.mrb[0].mxu0 %v1580
  %v1782 = vpop.f32.mrb[0].mxu0
  %v1783 = vadd.f32 0.0, %v1782
  %v1784 = vpop.f32.mrb[0].mxu0
  %1785 = vmatprep.mubr.f32.mxu0 0.0
  %1786 = vmatmul.mubr.f32.gmra.mrb[0].mxu0 %v1583
  %v1787 = vpop.f32.mrb[0].mxu0
  %v1788 = vadd.f32 0.0, %v1787
  %v1789 = vpop.f32.mrb[0].mxu0
  %1790 = vmatprep.mubr.f32.mxu0 0.0
  %1791 = vmatmul.mubr.f32.gmra.mrb[0].mxu0 %v1586
  %v1792 = vpop.f32.mrb[0].mxu0
  %v1793 = vadd.f32 0.0, %v1792
  %v1794 = vpop.f32.mrb[0].mxu0
  %1795 = vmatprep.mubr.f32.mxu0 0.0
  %1796 = vmatmul.mubr.f32.gmra.mrb[0].mxu0 %v1589
  %v1797 = vpop.f32.mrb[0].mxu0
  %v1798 = vadd.f32 0.0, %v1797
  %v1799 = vpop.f32.mrb[0].mxu0
  %1800 = vmatprep.mubr.f32.mxu0 0.0
  %1801 = vmatmul.mubr.f32.gmra.mrb[0].mxu0 %v1592
  %v1802 = vpop.f32.mrb[0].mxu0
  %v1803 = vadd.f32 0.0, %v1802
  %v1804 = vpop.f32.mrb[0].mxu0
  %1805 = vmatprep.mubr.f32.mxu0 0.0
  %1806 = vmatmul.mubr.f32.gmra.mrb[0].mxu0 %v1595
  %v1807 = vpop.f32.mrb[0].mxu0
  %v1808 = vadd.f32 0.0, %v1807
  %v1809 = vpop.f32.mrb[0].mxu0
  %1810 = vmatprep.mubr.f32.mxu0 0.0
  %1811 = vmatmul.mubr.f32.gmra.mrb[0].mxu0 %v1598
  %v1812 = vpop.f32.mrb[0].mxu0
  %v1813 = vadd.f32 0.0, %v1812
  %v1814 = vpop.f32.mrb[0].mxu0
  %1815 = vmatprep.mubr.f32.mxu0 0.0
  %1816 = vmatmul.mubr.f32.gmra.mrb[0].mxu0 %v1601
  %v1817 = vpop.f32.mrb[0].mxu0
  %v1818 = vadd.f32 0.0, %v1817
  %v1819 = vpop.f32.mrb[0].mxu0
  %1820 = vmatprep.mubr.f32.mxu0 0.0
  %1821 = vmatmul.mubr.f32.gmra.mrb[0].mxu0 %v1604
  %v1822 = vpop.f32.mrb[0].mxu0
  %v1823 = vadd.f32 0.0, %v1822
  %v1824 = vpop.f32.mrb[0].mxu0
  %1825 = vmatprep.mubr.f32.mxu0 0.0
  %1826 = vmatmul.mubr.f32.gmra.mrb[0].mxu0 %v1607
  %v1827 = vpop.f32.mrb[0].mxu0
  %v1828 = vadd.f32 0.0, %v1827
  %v1829 = vpop.f32.mrb[0].mxu0
  %1830 = vmatprep.mubr.f32.mxu0 0.0
  %1831 = vmatmul.mubr.f32.gmra.mrb[0].mxu0 %v1610
  %v1832 = vpop.f32.mrb[0].mxu0
  %v1833 = vadd.f32 0.0, %v1832
  %v1834 = vpop.f32.mrb[0].mxu0
  %1835 = vmatprep.mubr.f32.mxu0 0.0
  %1836 = vmatmul.mubr.f32.gmra.mrb[0].mxu0 %v1613
  %v1837 = vpop.f32.mrb[0].mxu0
  %v1838 = vadd.f32 0.0, %v1837
  %v1839 = vpop.f32.mrb[0].mxu0
  %1840 = vmatprep.mubr.f32.mxu0 0.0
  %1841 = vmatmul.mubr.f32.gmra.mrb[0].mxu0 %v1616
  %v1842 = vpop.f32.mrb[0].mxu0
  %v1843 = vadd.f32 0.0, %v1842
  %v1844 = vpop.f32.mrb[0].mxu0
  %1845 = vmatprep.mubr.f32.mxu0 0.0
  %1846 = vmatmul.mubr.f32.gmra.mrb[0].mxu0 %v1619
  %v1847 = vpop.f32.mrb[0].mxu0
  %v1848 = vadd.f32 0.0, %v1847
  %v1849 = vpop.f32.mrb[0].mxu0
  %1850 = vdwg.mxu0
  %v1851 = vadd.f32 %v1125, %v1688
  %v1852 = vadd.f32 %v1130, %v1693
  %v1853 = vadd.f32 %v1135, %v1698
  %v1854 = vadd.f32 %v1140, %v1703
  %v1855 = vadd.f32 %v1145, %v1708
  %v1856 = vadd.f32 %v1150, %v1713
  %v1857 = vadd.f32 %v1155, %v1718
  %v1858 = vadd.f32 %v1160, %v1723
  %v1859 = vadd.f32 %v1165, %v1728
  %v1860 = vadd.f32 %v1170, %v1733
  %v1861 = vadd.f32 %v1175, %v1738
  %v1862 = vadd.f32 %v1180, %v1743
  %v1863 = vadd.f32 %v1185, %v1748
  %v1864 = vadd.f32 %v1190, %v1753
  %v1865 = vadd.f32 %v1195, %v1758
  %v1866 = vadd.f32 %v1200, %v1763
  %v1867 = vadd.f32 %v1205, %v1768
  %v1868 = vadd.f32 %v1210, %v1773
  %v1869 = vadd.f32 %v1215, %v1778
  %v1870 = vadd.f32 %v1220, %v1783
  %v1871 = vadd.f32 %v1225, %v1788
  %v1872 = vadd.f32 %v1230, %v1793
  %v1873 = vadd.f32 %v1235, %v1798
  %v1874 = vadd.f32 %v1240, %v1803
  %v1875 = vadd.f32 %v1245, %v1808
  %v1876 = vadd.f32 %v1250, %v1813
  %v1877 = vadd.f32 %v1255, %v1818
  %v1878 = vadd.f32 %v1260, %v1823
  %v1879 = vadd.f32 %v1265, %v1828
  %v1880 = vadd.f32 %v1270, %v1833
  %v1881 = vadd.f32 %v1275, %v1838
  %v1882 = vadd.f32 %v1280, %v1843
  %v1883 = vadd.f32 %v1285, %v1848
  %1884 = vset.pattern.permute.xlu0 3
  %1885 = vperm.xlu0 %1884, %v89
  %v1886 = vpop.permute.xlu0 %1885
  %1888 = vset.pattern.permute.xlu0 3
  %1889 = vperm.xlu0 %1888, %v90
  %v1890 = vpop.permute.xlu0 %1889
  %1892 = vset.pattern.permute.xlu0 3
  %1893 = vperm.xlu0 %1892, %v91
  %v1894 = vpop.permute.xlu0 %1893
  %1896 = vset.pattern.permute.xlu0 3
  %1897 = vperm.xlu0 %1896, %v92
  %v1898 = vpop.permute.xlu0 %1897
  %1900 = vset.pattern.permute.xlu0 3
  %1901 = vperm.xlu0 %1900, %v93
  %v1902 = vpop.permute.xlu0 %1901
  %1904 = vset.pattern.permute.xlu0 3
  %1905 = vperm.xlu0 %1904, %v94
  %v1906 = vpop.permute.xlu0 %1905
  %1908 = vset.pattern.permute.xlu0 3
  %1909 = vperm.xlu0 %1908, %v95
  %v1910 = vpop.permute.xlu0 %1909
  %1912 = vset.pattern.permute.xlu0 3
  %1913 = vperm.xlu0 %1912, %v96
  %v1914 = vpop.permute.xlu0 %1913
  %1916 = vset.pattern.permute.xlu0 3
  %1917 = vperm.xlu0 %1916, %v97
  %v1918 = vpop.permute.xlu0 %1917
  %1920 = vset.pattern.permute.xlu0 3
  %1921 = vperm.xlu0 %1920, %v98
  %v1922 = vpop.permute.xlu0 %1921
  %1924 = vset.pattern.permute.xlu0 3
  %1925 = vperm.xlu0 %1924, %v99
  %v1926 = vpop.permute.xlu0 %1925
  %1928 = vset.pattern.permute.xlu0 3
  %1929 = vperm.xlu0 %1928, %v100
  %v1930 = vpop.permute.xlu0 %1929
  %1932 = vset.pattern.permute.xlu0 3
  %1933 = vperm.xlu0 %1932, %v101
  %v1934 = vpop.permute.xlu0 %1933
  %1936 = vset.pattern.permute.xlu0 3
  %1937 = vperm.xlu0 %1936, %v102
  %v1938 = vpop.permute.xlu0 %1937
  %1940 = vset.pattern.permute.xlu0 3
  %1941 = vperm.xlu0 %1940, %v103
  %v1942 = vpop.permute.xlu0 %1941
  %1944 = vset.pattern.permute.xlu0 3
  %1945 = vperm.xlu0 %1944, %v104
  %v1946 = vpop.permute.xlu0 %1945
  %1948 = vset.pattern.permute.xlu0 3
  %1949 = vperm.xlu0 %1948, %v105
  %v1950 = vpop.permute.xlu0 %1949
  %1952 = vset.pattern.permute.xlu0 3
  %1953 = vperm.xlu0 %1952, %v106
  %v1954 = vpop.permute.xlu0 %1953
  %1956 = vset.pattern.permute.xlu0 3
  %1957 = vperm.xlu0 %1956, %v107
  %v1958 = vpop.permute.xlu0 %1957
  %1960 = vset.pattern.permute.xlu0 3
  %1961 = vperm.xlu0 %1960, %v108
  %v1962 = vpop.permute.xlu0 %1961
  %1964 = vset.pattern.permute.xlu0 3
  %1965 = vperm.xlu0 %1964, %v109
  %v1966 = vpop.permute.xlu0 %1965
  %1968 = vset.pattern.permute.xlu0 3
  %1969 = vperm.xlu0 %1968, %v110
  %v1970 = vpop.permute.xlu0 %1969
  %1972 = vset.pattern.permute.xlu0 3
  %1973 = vperm.xlu0 %1972, %v111
  %v1974 = vpop.permute.xlu0 %1973
  %1976 = vset.pattern.permute.xlu0 3
  %1977 = vperm.xlu0 %1976, %v112
  %v1978 = vpop.permute.xlu0 %1977
  %1980 = vset.pattern.permute.xlu0 3
  %1981 = vperm.xlu0 %1980, %v113
  %v1982 = vpop.permute.xlu0 %1981
  %1984 = vset.pattern.permute.xlu0 3
  %1985 = vperm.xlu0 %1984, %v114
  %v1986 = vpop.permute.xlu0 %1985
  %1988 = vset.pattern.permute.xlu0 3
  %1989 = vperm.xlu0 %1988, %v115
  %v1990 = vpop.permute.xlu0 %1989
  %1992 = vset.pattern.permute.xlu0 3
  %1993 = vperm.xlu0 %1992, %v116
  %v1994 = vpop.permute.xlu0 %1993
  %1996 = vset.pattern.permute.xlu0 3
  %1997 = vperm.xlu0 %1996, %v117
  %v1998 = vpop.permute.xlu0 %1997
  %2000 = vset.pattern.permute.xlu0 3
  %2001 = vperm.xlu0 %2000, %v118
  %v2002 = vpop.permute.xlu0 %2001
  %2004 = vset.pattern.permute.xlu0 3
  %2005 = vperm.xlu0 %2004, %v119
  %v2006 = vpop.permute.xlu0 %2005
  %2008 = vset.pattern.permute.xlu0 3
  %2009 = vperm.xlu0 %2008, %v120
  %v2010 = vpop.permute.xlu0 %2009
  %2012 = vset.pattern.permute.xlu0 3
  %2013 = vperm.xlu0 %2012, %v121
  %v2014 = vpop.permute.xlu0 %2013
  %v2016 = vmul.f32 %v1886, %v290
  %v2017 = vmul.f32 %v1890, %v290
  %v2018 = vmul.f32 %v1894, %v290
  %v2019 = vmul.f32 %v1898, %v290
  %v2020 = vmul.f32 %v1902, %v290
  %v2021 = vmul.f32 %v1906, %v290
  %v2022 = vmul.f32 %v1910, %v290
  %v2023 = vmul.f32 %v1914, %v290
  %v2024 = vmul.f32 %v1918, %v290
  %v2025 = vmul.f32 %v1922, %v290
  %v2026 = vmul.f32 %v1926, %v290
  %v2027 = vmul.f32 %v1930, %v290
  %v2028 = vmul.f32 %v1934, %v290
  %v2029 = vmul.f32 %v1938, %v290
  %v2030 = vmul.f32 %v1942, %v290
  %v2031 = vmul.f32 %v1946, %v290
  %v2032 = vmul.f32 %v1950, %v290
  %v2033 = vmul.f32 %v1954, %v290
  %v2034 = vmul.f32 %v1958, %v290
  %v2035 = vmul.f32 %v1962, %v290
  %v2036 = vmul.f32 %v1966, %v290
  %v2037 = vmul.f32 %v1970, %v290
  %v2038 = vmul.f32 %v1974, %v290
  %v2039 = vmul.f32 %v1978, %v290
  %v2040 = vmul.f32 %v1982, %v290
  %v2041 = vmul.f32 %v1986, %v290
  %v2042 = vmul.f32 %v1990, %v290
  %v2043 = vmul.f32 %v1994, %v290
  %v2044 = vmul.f32 %v1998, %v290
  %v2045 = vmul.f32 %v2002, %v290
  %v2046 = vmul.f32 %v2006, %v290
  %v2047 = vmul.f32 %v2010, %v290
  %v2048 = vmul.f32 %v2014, %v290
  %v2049 = vadd.f32 %v2016, %v327
  %v2050 = vadd.f32 %v2017, %v327
  %v2051 = vadd.f32 %v2018, %v327
  %v2052 = vadd.f32 %v2019, %v327
  %v2053 = vadd.f32 %v2020, %v327
  %v2054 = vadd.f32 %v2021, %v327
  %v2055 = vadd.f32 %v2022, %v327
  %v2056 = vadd.f32 %v2023, %v327
  %v2057 = vadd.f32 %v2024, %v327
  %v2058 = vadd.f32 %v2025, %v327
  %v2059 = vadd.f32 %v2026, %v327
  %v2060 = vadd.f32 %v2027, %v327
  %v2061 = vadd.f32 %v2028, %v327
  %v2062 = vadd.f32 %v2029, %v327
  %v2063 = vadd.f32 %v2030, %v327
  %v2064 = vadd.f32 %v2031, %v327
  %v2065 = vadd.f32 %v2032, %v327
  %v2066 = vadd.f32 %v2033, %v327
  %v2067 = vadd.f32 %v2034, %v327
  %v2068 = vadd.f32 %v2035, %v327
  %v2069 = vadd.f32 %v2036, %v327
  %v2070 = vadd.f32 %v2037, %v327
  %v2071 = vadd.f32 %v2038, %v327
  %v2072 = vadd.f32 %v2039, %v327
  %v2073 = vadd.f32 %v2040, %v327
  %v2074 = vadd.f32 %v2041, %v327
  %v2075 = vadd.f32 %v2042, %v327
  %v2076 = vadd.f32 %v2043, %v327
  %v2077 = vadd.f32 %v2044, %v327
  %v2078 = vadd.f32 %v2045, %v327
  %v2079 = vadd.f32 %v2046, %v327
  %v2080 = vadd.f32 %v2047, %v327
  %v2081 = vadd.f32 %v2048, %v327
  %v2082 = vmax.f32 %v2049, 0.0
  %v2083 = vmax.f32 %v2050, 0.0
  %v2084 = vmax.f32 %v2051, 0.0
  %v2085 = vmax.f32 %v2052, 0.0
  %v2086 = vmax.f32 %v2053, 0.0
  %v2087 = vmax.f32 %v2054, 0.0
  %v2088 = vmax.f32 %v2055, 0.0
  %v2089 = vmax.f32 %v2056, 0.0
  %v2090 = vmax.f32 %v2057, 0.0
  %v2091 = vmax.f32 %v2058, 0.0
  %v2092 = vmax.f32 %v2059, 0.0
  %v2093 = vmax.f32 %v2060, 0.0
  %v2094 = vmax.f32 %v2061, 0.0
  %v2095 = vmax.f32 %v2062, 0.0
  %v2096 = vmax.f32 %v2063, 0.0
  %v2097 = vmax.f32 %v2064, 0.0
  %v2098 = vmax.f32 %v2065, 0.0
  %v2099 = vmax.f32 %v2066, 0.0
  %v2100 = vmax.f32 %v2067, 0.0
  %v2101 = vmax.f32 %v2068, 0.0
  %v2102 = vmax.f32 %v2069, 0.0
  %v2103 = vmax.f32 %v2070, 0.0
  %v2104 = vmax.f32 %v2071, 0.0
  %v2105 = vmax.f32 %v2072, 0.0
  %v2106 = vmax.f32 %v2073, 0.0
  %v2107 = vmax.f32 %v2074, 0.0
  %v2108 = vmax.f32 %v2075, 0.0
  %v2109 = vmax.f32 %v2076, 0.0
  %v2110 = vmax.f32 %v2077, 0.0
  %v2111 = vmax.f32 %v2078, 0.0
  %v2112 = vmax.f32 %v2079, 0.0
  %v2113 = vmax.f32 %v2080, 0.0
  %v2114 = vmax.f32 %v2081, 0.0
  %s2115 = scalar_lea.vmem %s3, 48
  %v2116 = vld [vmem:[%s2115] sm:$0xff]
  %v2117 = vld [vmem:[%s2115 + $0x8] sm:$0xff]
  %v2119 = vsel %vm30, %v2082, 0
  %v2122 = vsel %vm30, %v2083, 0
  %v2125 = vsel %vm30, %v2084, 0
  %v2128 = vsel %vm30, %v2085, 0
  %v2131 = vsel %vm30, %v2086, 0
  %v2134 = vsel %vm30, %v2087, 0
  %v2137 = vsel %vm30, %v2088, 0
  %v2140 = vsel %vm30, %v2089, 0
  %v2143 = vsel %vm30, %v2090, 0
  %v2146 = vsel %vm30, %v2091, 0
  %v2149 = vsel %vm30, %v2092, 0
  %v2152 = vsel %vm30, %v2093, 0
  %v2155 = vsel %vm30, %v2094, 0
  %v2158 = vsel %vm30, %v2095, 0
  %v2161 = vsel %vm30, %v2096, 0
  %v2164 = vsel %vm30, %v2097, 0
  %v2167 = vsel %vm30, %v2098, 0
  %v2170 = vsel %vm30, %v2099, 0
  %v2173 = vsel %vm30, %v2100, 0
  %v2176 = vsel %vm30, %v2101, 0
  %v2179 = vsel %vm30, %v2102, 0
  %v2182 = vsel %vm30, %v2103, 0
  %v2185 = vsel %vm30, %v2104, 0
  %v2188 = vsel %vm30, %v2105, 0
  %v2191 = vsel %vm30, %v2106, 0
  %v2194 = vsel %vm30, %v2107, 0
  %v2197 = vsel %vm30, %v2108, 0
  %v2200 = vsel %vm30, %v2109, 0
  %v2203 = vsel %vm30, %v2110, 0
  %v2206 = vsel %vm30, %v2111, 0
  %v2209 = vsel %vm30, %v2112, 0
  %v2212 = vsel %vm30, %v2113, 0
  %v2215 = vsel %vm30, %v2114, 0
  %2217 = vmatprep.subr.mxu0 0.0
  %2218 = vmatpush1.msra.mxu0 %v2116
  %2219 = vmatprep.subr.mxu0 0.0
  %2220 = vmatpush1.msra.mxu0 %v2117
  %2221 = vmatprep.subr.mxu0 0.0
  %2222 = vmatpush1.msra.mxu0 0.0
  %2223 = vmatprep.subr.mxu0 0.0
  %2224 = vmatpush1.msra.mxu0 0.0
  %2225 = vmatprep.subr.mxu0 0.0
  %2226 = vmatpush1.msra.mxu0 0.0
  %2227 = vmatprep.subr.mxu0 0.0
  %2228 = vmatpush1.msra.mxu0 0.0
  %2229 = vmatprep.subr.mxu0 0.0
  %2230 = vmatpush1.msra.mxu0 0.0
  %2231 = vmatprep.subr.mxu0 0.0
  %2232 = vmatpush1.msra.mxu0 0.0
  %2233 = vmatprep.subr.mxu0 0.0
  %2234 = vmatpush1.msra.mxu0 0.0
  %2235 = vmatprep.subr.mxu0 0.0
  %2236 = vmatpush1.msra.mxu0 0.0
  %2237 = vmatprep.subr.mxu0 0.0
  %2238 = vmatpush1.msra.mxu0 0.0
  %2239 = vmatprep.subr.mxu0 0.0
  %2240 = vmatpush1.msra.mxu0 0.0
  %2241 = vmatprep.subr.mxu0 0.0
  %2242 = vmatpush1.msra.mxu0 0.0
  %2243 = vmatprep.subr.mxu0 0.0
  %2244 = vmatpush1.msra.mxu0 0.0
  %2245 = vmatprep.subr.mxu0 0.0
  %2246 = vmatpush1.msra.mxu0 0.0
  %2247 = vmatprep.subr.mxu0 0.0
  %2248 = vmatpush1.msra.mxu0 0.0
  %2249 = vmatprep.subr.mxu0 0.0
  %2250 = vmatpush1.msra.mxu0 0.0
  %2251 = vmatprep.subr.mxu0 0.0
  %2252 = vmatpush1.msra.mxu0 0.0
  %2253 = vmatprep.subr.mxu0 0.0
  %2254 = vmatpush1.msra.mxu0 0.0
  %2255 = vmatprep.subr.mxu0 0.0
  %2256 = vmatpush1.msra.mxu0 0.0
  %2257 = vmatprep.subr.mxu0 0.0
  %2258 = vmatpush1.msra.mxu0 0.0
  %2259 = vmatprep.subr.mxu0 0.0
  %2260 = vmatpush1.msra.mxu0 0.0
  %2261 = vmatprep.subr.mxu0 0.0
  %2262 = vmatpush1.msra.mxu0 0.0
  %2263 = vmatprep.subr.mxu0 0.0
  %2264 = vmatpush1.msra.mxu0 0.0
  %2265 = vmatprep.subr.mxu0 0.0
  %2266 = vmatpush1.msra.mxu0 0.0
  %2267 = vmatprep.subr.mxu0 0.0
  %2268 = vmatpush1.msra.mxu0 0.0
  %2269 = vmatprep.subr.mxu0 0.0
  %2270 = vmatpush1.msra.mxu0 0.0
  %2271 = vmatprep.subr.mxu0 0.0
  %2272 = vmatpush1.msra.mxu0 0.0
  %2273 = vmatprep.subr.mxu0 0.0
  %2274 = vmatpush1.msra.mxu0 0.0
  %2275 = vmatprep.subr.mxu0 0.0
  %2276 = vmatpush1.msra.mxu0 0.0
  %2277 = vmatprep.subr.mxu0 0.0
  %2278 = vmatpush1.msra.mxu0 0.0
  %2279 = vmatprep.subr.mxu0 0.0
  %2280 = vmatpush1.msra.mxu0 0.0
  %2281 = vmatprep.mubr.f32.mxu0 0.0
  %2282 = vmatmul.mubr.f32.gmra.mrb[0].mxu0 %v2119
  %v2283 = vpop.f32.mrb[0].mxu0
  %v2284 = vadd.f32 0.0, %v2283
  %v2285 = vpop.f32.mrb[0].mxu0
  %2286 = vmatprep.mubr.f32.mxu0 0.0
  %2287 = vmatmul.mubr.f32.gmra.mrb[0].mxu0 %v2122
  %v2288 = vpop.f32.mrb[0].mxu0
  %v2289 = vadd.f32 0.0, %v2288
  %v2290 = vpop.f32.mrb[0].mxu0
  %2291 = vmatprep.mubr.f32.mxu0 0.0
  %2292 = vmatmul.mubr.f32.gmra.mrb[0].mxu0 %v2125
  %v2293 = vpop.f32.mrb[0].mxu0
  %v2294 = vadd.f32 0.0, %v2293
  %v2295 = vpop.f32.mrb[0].mxu0
  %2296 = vmatprep.mubr.f32.mxu0 0.0
  %2297 = vmatmul.mubr.f32.gmra.mrb[0].mxu0 %v2128
  %v2298 = vpop.f32.mrb[0].mxu0
  %v2299 = vadd.f32 0.0, %v2298
  %v2300 = vpop.f32.mrb[0].mxu0
  %2301 = vmatprep.mubr.f32.mxu0 0.0
  %2302 = vmatmul.mubr.f32.gmra.mrb[0].mxu0 %v2131
  %v2303 = vpop.f32.mrb[0].mxu0
  %v2304 = vadd.f32 0.0, %v2303
  %v2305 = vpop.f32.mrb[0].mxu0
  %2306 = vmatprep.mubr.f32.mxu0 0.0
  %2307 = vmatmul.mubr.f32.gmra.mrb[0].mxu0 %v2134
  %v2308 = vpop.f32.mrb[0].mxu0
  %v2309 = vadd.f32 0.0, %v2308
  %v2310 = vpop.f32.mrb[0].mxu0
  %2311 = vmatprep.mubr.f32.mxu0 0.0
  %2312 = vmatmul.mubr.f32.gmra.mrb[0].mxu0 %v2137
  %v2313 = vpop.f32.mrb[0].mxu0
  %v2314 = vadd.f32 0.0, %v2313
  %v2315 = vpop.f32.mrb[0].mxu0
  %2316 = vmatprep.mubr.f32.mxu0 0.0
  %2317 = vmatmul.mubr.f32.gmra.mrb[0].mxu0 %v2140
  %v2318 = vpop.f32.mrb[0].mxu0
  %v2319 = vadd.f32 0.0, %v2318
  %v2320 = vpop.f32.mrb[0].mxu0
  %2321 = vmatprep.mubr.f32.mxu0 0.0
  %2322 = vmatmul.mubr.f32.gmra.mrb[0].mxu0 %v2143
  %v2323 = vpop.f32.mrb[0].mxu0
  %v2324 = vadd.f32 0.0, %v2323
  %v2325 = vpop.f32.mrb[0].mxu0
  %2326 = vmatprep.mubr.f32.mxu0 0.0
  %2327 = vmatmul.mubr.f32.gmra.mrb[0].mxu0 %v2146
  %v2328 = vpop.f32.mrb[0].mxu0
  %v2329 = vadd.f32 0.0, %v2328
  %v2330 = vpop.f32.mrb[0].mxu0
  %2331 = vmatprep.mubr.f32.mxu0 0.0
  %2332 = vmatmul.mubr.f32.gmra.mrb[0].mxu0 %v2149
  %v2333 = vpop.f32.mrb[0].mxu0
  %v2334 = vadd.f32 0.0, %v2333
  %v2335 = vpop.f32.mrb[0].mxu0
  %2336 = vmatprep.mubr.f32.mxu0 0.0
  %2337 = vmatmul.mubr.f32.gmra.mrb[0].mxu0 %v2152
  %v2338 = vpop.f32.mrb[0].mxu0
  %v2339 = vadd.f32 0.0, %v2338
  %v2340 = vpop.f32.mrb[0].mxu0
  %2341 = vmatprep.mubr.f32.mxu0 0.0
  %2342 = vmatmul.mubr.f32.gmra.mrb[0].mxu0 %v2155
  %v2343 = vpop.f32.mrb[0].mxu0
  %v2344 = vadd.f32 0.0, %v2343
  %v2345 = vpop.f32.mrb[0].mxu0
  %2346 = vmatprep.mubr.f32.mxu0 0.0
  %2347 = vmatmul.mubr.f32.gmra.mrb[0].mxu0 %v2158
  %v2348 = vpop.f32.mrb[0].mxu0
  %v2349 = vadd.f32 0.0, %v2348
  %v2350 = vpop.f32.mrb[0].mxu0
  %2351 = vmatprep.mubr.f32.mxu0 0.0
  %2352 = vmatmul.mubr.f32.gmra.mrb[0].mxu0 %v2161
  %v2353 = vpop.f32.mrb[0].mxu0
  %v2354 = vadd.f32 0.0, %v2353
  %v2355 = vpop.f32.mrb[0].mxu0
  %2356 = vmatprep.mubr.f32.mxu0 0.0
  %2357 = vmatmul.mubr.f32.gmra.mrb[0].mxu0 %v2164
  %v2358 = vpop.f32.mrb[0].mxu0
  %v2359 = vadd.f32 0.0, %v2358
  %v2360 = vpop.f32.mrb[0].mxu0
  %2361 = vmatprep.mubr.f32.mxu0 0.0
  %2362 = vmatmul.mubr.f32.gmra.mrb[0].mxu0 %v2167
  %v2363 = vpop.f32.mrb[0].mxu0
  %v2364 = vadd.f32 0.0, %v2363
  %v2365 = vpop.f32.mrb[0].mxu0
  %2366 = vmatprep.mubr.f32.mxu0 0.0
  %2367 = vmatmul.mubr.f32.gmra.mrb[0].mxu0 %v2170
  %v2368 = vpop.f32.mrb[0].mxu0
  %v2369 = vadd.f32 0.0, %v2368
  %v2370 = vpop.f32.mrb[0].mxu0
  %2371 = vmatprep.mubr.f32.mxu0 0.0
  %2372 = vmatmul.mubr.f32.gmra.mrb[0].mxu0 %v2173
  %v2373 = vpop.f32.mrb[0].mxu0
  %v2374 = vadd.f32 0.0, %v2373
  %v2375 = vpop.f32.mrb[0].mxu0
  %2376 = vmatprep.mubr.f32.mxu0 0.0
  %2377 = vmatmul.mubr.f32.gmra.mrb[0].mxu0 %v2176
  %v2378 = vpop.f32.mrb[0].mxu0
  %v2379 = vadd.f32 0.0, %v2378
  %v2380 = vpop.f32.mrb[0].mxu0
  %2381 = vmatprep.mubr.f32.mxu0 0.0
  %2382 = vmatmul.mubr.f32.gmra.mrb[0].mxu0 %v2179
  %v2383 = vpop.f32.mrb[0].mxu0
  %v2384 = vadd.f32 0.0, %v2383
  %v2385 = vpop.f32.mrb[0].mxu0
  %2386 = vmatprep.mubr.f32.mxu0 0.0
  %2387 = vmatmul.mubr.f32.gmra.mrb[0].mxu0 %v2182
  %v2388 = vpop.f32.mrb[0].mxu0
  %v2389 = vadd.f32 0.0, %v2388
  %v2390 = vpop.f32.mrb[0].mxu0
  %2391 = vmatprep.mubr.f32.mxu0 0.0
  %2392 = vmatmul.mubr.f32.gmra.mrb[0].mxu0 %v2185
  %v2393 = vpop.f32.mrb[0].mxu0
  %v2394 = vadd.f32 0.0, %v2393
  %v2395 = vpop.f32.mrb[0].mxu0
  %2396 = vmatprep.mubr.f32.mxu0 0.0
  %2397 = vmatmul.mubr.f32.gmra.mrb[0].mxu0 %v2188
  %v2398 = vpop.f32.mrb[0].mxu0
  %v2399 = vadd.f32 0.0, %v2398
  %v2400 = vpop.f32.mrb[0].mxu0
  %2401 = vmatprep.mubr.f32.mxu0 0.0
  %2402 = vmatmul.mubr.f32.gmra.mrb[0].mxu0 %v2191
  %v2403 = vpop.f32.mrb[0].mxu0
  %v2404 = vadd.f32 0.0, %v2403
  %v2405 = vpop.f32.mrb[0].mxu0
  %2406 = vmatprep.mubr.f32.mxu0 0.0
  %2407 = vmatmul.mubr.f32.gmra.mrb[0].mxu0 %v2194
  %v2408 = vpop.f32.mrb[0].mxu0
  %v2409 = vadd.f32 0.0, %v2408
  %v2410 = vpop.f32.mrb[0].mxu0
  %2411 = vmatprep.mubr.f32.mxu0 0.0
  %2412 = vmatmul.mubr.f32.gmra.mrb[0].mxu0 %v2197
  %v2413 = vpop.f32.mrb[0].mxu0
  %v2414 = vadd.f32 0.0, %v2413
  %v2415 = vpop.f32.mrb[0].mxu0
  %2416 = vmatprep.mubr.f32.mxu0 0.0
  %2417 = vmatmul.mubr.f32.gmra.mrb[0].mxu0 %v2200
  %v2418 = vpop.f32.mrb[0].mxu0
  %v2419 = vadd.f32 0.0, %v2418
  %v2420 = vpop.f32.mrb[0].mxu0
  %2421 = vmatprep.mubr.f32.mxu0 0.0
  %2422 = vmatmul.mubr.f32.gmra.mrb[0].mxu0 %v2203
  %v2423 = vpop.f32.mrb[0].mxu0
  %v2424 = vadd.f32 0.0, %v2423
  %v2425 = vpop.f32.mrb[0].mxu0
  %2426 = vmatprep.mubr.f32.mxu0 0.0
  %2427 = vmatmul.mubr.f32.gmra.mrb[0].mxu0 %v2206
  %v2428 = vpop.f32.mrb[0].mxu0
  %v2429 = vadd.f32 0.0, %v2428
  %v2430 = vpop.f32.mrb[0].mxu0
  %2431 = vmatprep.mubr.f32.mxu0 0.0
  %2432 = vmatmul.mubr.f32.gmra.mrb[0].mxu0 %v2209
  %v2433 = vpop.f32.mrb[0].mxu0
  %v2434 = vadd.f32 0.0, %v2433
  %v2435 = vpop.f32.mrb[0].mxu0
  %2436 = vmatprep.mubr.f32.mxu0 0.0
  %2437 = vmatmul.mubr.f32.gmra.mrb[0].mxu0 %v2212
  %v2438 = vpop.f32.mrb[0].mxu0
  %v2439 = vadd.f32 0.0, %v2438
  %v2440 = vpop.f32.mrb[0].mxu0
  %2441 = vmatprep.mubr.f32.mxu0 0.0
  %2442 = vmatmul.mubr.f32.gmra.mrb[0].mxu0 %v2215
  %v2443 = vpop.f32.mrb[0].mxu0
  %v2444 = vadd.f32 0.0, %v2443
  %v2445 = vpop.f32.mrb[0].mxu0
  %2446 = vdwg.mxu0
  %v2447 = vadd.f32 %v1851, %v2284
  %v2448 = vadd.f32 %v1852, %v2289
  %v2449 = vadd.f32 %v1853, %v2294
  %v2450 = vadd.f32 %v1854, %v2299
  %v2451 = vadd.f32 %v1855, %v2304
  %v2452 = vadd.f32 %v1856, %v2309
  %v2453 = vadd.f32 %v1857, %v2314
  %v2454 = vadd.f32 %v1858, %v2319
  %v2455 = vadd.f32 %v1859, %v2324
  %v2456 = vadd.f32 %v1860, %v2329
  %v2457 = vadd.f32 %v1861, %v2334
  %v2458 = vadd.f32 %v1862, %v2339
  %v2459 = vadd.f32 %v1863, %v2344
  %v2460 = vadd.f32 %v1864, %v2349
  %v2461 = vadd.f32 %v1865, %v2354
  %v2462 = vadd.f32 %v1866, %v2359
  %v2463 = vadd.f32 %v1867, %v2364
  %v2464 = vadd.f32 %v1868, %v2369
  %v2465 = vadd.f32 %v1869, %v2374
  %v2466 = vadd.f32 %v1870, %v2379
  %v2467 = vadd.f32 %v1871, %v2384
  %v2468 = vadd.f32 %v1872, %v2389
  %v2469 = vadd.f32 %v1873, %v2394
  %v2470 = vadd.f32 %v1874, %v2399
  %v2471 = vadd.f32 %v1875, %v2404
  %v2472 = vadd.f32 %v1876, %v2409
  %v2473 = vadd.f32 %v1877, %v2414
  %v2474 = vadd.f32 %v1878, %v2419
  %v2475 = vadd.f32 %v1879, %v2424
  %v2476 = vadd.f32 %v1880, %v2429
  %v2477 = vadd.f32 %v1881, %v2434
  %v2478 = vadd.f32 %v1882, %v2439
  %v2479 = vadd.f32 %v1883, %v2444
  %2480 = vset.pattern.permute.xlu0 4
  %2481 = vperm.xlu0 %2480, %v89
  %v2482 = vpop.permute.xlu0 %2481
  %2484 = vset.pattern.permute.xlu0 4
  %2485 = vperm.xlu0 %2484, %v90
  %v2486 = vpop.permute.xlu0 %2485
  %2488 = vset.pattern.permute.xlu0 4
  %2489 = vperm.xlu0 %2488, %v91
  %v2490 = vpop.permute.xlu0 %2489
  %2492 = vset.pattern.permute.xlu0 4
  %2493 = vperm.xlu0 %2492, %v92
  %v2494 = vpop.permute.xlu0 %2493
  %2496 = vset.pattern.permute.xlu0 4
  %2497 = vperm.xlu0 %2496, %v93
  %v2498 = vpop.permute.xlu0 %2497
  %2500 = vset.pattern.permute.xlu0 4
  %2501 = vperm.xlu0 %2500, %v94
  %v2502 = vpop.permute.xlu0 %2501
  %2504 = vset.pattern.permute.xlu0 4
  %2505 = vperm.xlu0 %2504, %v95
  %v2506 = vpop.permute.xlu0 %2505
  %2508 = vset.pattern.permute.xlu0 4
  %2509 = vperm.xlu0 %2508, %v96
  %v2510 = vpop.permute.xlu0 %2509
  %2512 = vset.pattern.permute.xlu0 4
  %2513 = vperm.xlu0 %2512, %v97
  %v2514 = vpop.permute.xlu0 %2513
  %2516 = vset.pattern.permute.xlu0 4
  %2517 = vperm.xlu0 %2516, %v98
  %v2518 = vpop.permute.xlu0 %2517
  %2520 = vset.pattern.permute.xlu0 4
  %2521 = vperm.xlu0 %2520, %v99
  %v2522 = vpop.permute.xlu0 %2521
  %2524 = vset.pattern.permute.xlu0 4
  %2525 = vperm.xlu0 %2524, %v100
  %v2526 = vpop.permute.xlu0 %2525
  %2528 = vset.pattern.permute.xlu0 4
  %2529 = vperm.xlu0 %2528, %v101
  %v2530 = vpop.permute.xlu0 %2529
  %2532 = vset.pattern.permute.xlu0 4
  %2533 = vperm.xlu0 %2532, %v102
  %v2534 = vpop.permute.xlu0 %2533
  %2536 = vset.pattern.permute.xlu0 4
  %2537 = vperm.xlu0 %2536, %v103
  %v2538 = vpop.permute.xlu0 %2537
  %2540 = vset.pattern.permute.xlu0 4
  %2541 = vperm.xlu0 %2540, %v104
  %v2542 = vpop.permute.xlu0 %2541
  %2544 = vset.pattern.permute.xlu0 4
  %2545 = vperm.xlu0 %2544, %v105
  %v2546 = vpop.permute.xlu0 %2545
  %2548 = vset.pattern.permute.xlu0 4
  %2549 = vperm.xlu0 %2548, %v106
  %v2550 = vpop.permute.xlu0 %2549
  %2552 = vset.pattern.permute.xlu0 4
  %2553 = vperm.xlu0 %2552, %v107
  %v2554 = vpop.permute.xlu0 %2553
  %2556 = vset.pattern.permute.xlu0 4
  %2557 = vperm.xlu0 %2556, %v108
  %v2558 = vpop.permute.xlu0 %2557
  %2560 = vset.pattern.permute.xlu0 4
  %2561 = vperm.xlu0 %2560, %v109
  %v2562 = vpop.permute.xlu0 %2561
  %2564 = vset.pattern.permute.xlu0 4
  %2565 = vperm.xlu0 %2564, %v110
  %v2566 = vpop.permute.xlu0 %2565
  %2568 = vset.pattern.permute.xlu0 4
  %2569 = vperm.xlu0 %2568, %v111
  %v2570 = vpop.permute.xlu0 %2569
  %2572 = vset.pattern.permute.xlu0 4
  %2573 = vperm.xlu0 %2572, %v112
  %v2574 = vpop.permute.xlu0 %2573
  %2576 = vset.pattern.permute.xlu0 4
  %2577 = vperm.xlu0 %2576, %v113
  %v2578 = vpop.permute.xlu0 %2577
  %2580 = vset.pattern.permute.xlu0 4
  %2581 = vperm.xlu0 %2580, %v114
  %v2582 = vpop.permute.xlu0 %2581
  %2584 = vset.pattern.permute.xlu0 4
  %2585 = vperm.xlu0 %2584, %v115
  %v2586 = vpop.permute.xlu0 %2585
  %2588 = vset.pattern.permute.xlu0 4
  %2589 = vperm.xlu0 %2588, %v116
  %v2590 = vpop.permute.xlu0 %2589
  %2592 = vset.pattern.permute.xlu0 4
  %2593 = vperm.xlu0 %2592, %v117
  %v2594 = vpop.permute.xlu0 %2593
  %2596 = vset.pattern.permute.xlu0 4
  %2597 = vperm.xlu0 %2596, %v118
  %v2598 = vpop.permute.xlu0 %2597
  %2600 = vset.pattern.permute.xlu0 4
  %2601 = vperm.xlu0 %2600, %v119
  %v2602 = vpop.permute.xlu0 %2601
  %2604 = vset.pattern.permute.xlu0 4
  %2605 = vperm.xlu0 %2604, %v120
  %v2606 = vpop.permute.xlu0 %2605
  %2608 = vset.pattern.permute.xlu0 4
  %2609 = vperm.xlu0 %2608, %v121
  %v2610 = vpop.permute.xlu0 %2609
  %v2612 = vmul.f32 %v2482, %v290
  %v2613 = vmul.f32 %v2486, %v290
  %v2614 = vmul.f32 %v2490, %v290
  %v2615 = vmul.f32 %v2494, %v290
  %v2616 = vmul.f32 %v2498, %v290
  %v2617 = vmul.f32 %v2502, %v290
  %v2618 = vmul.f32 %v2506, %v290
  %v2619 = vmul.f32 %v2510, %v290
  %v2620 = vmul.f32 %v2514, %v290
  %v2621 = vmul.f32 %v2518, %v290
  %v2622 = vmul.f32 %v2522, %v290
  %v2623 = vmul.f32 %v2526, %v290
  %v2624 = vmul.f32 %v2530, %v290
  %v2625 = vmul.f32 %v2534, %v290
  %v2626 = vmul.f32 %v2538, %v290
  %v2627 = vmul.f32 %v2542, %v290
  %v2628 = vmul.f32 %v2546, %v290
  %v2629 = vmul.f32 %v2550, %v290
  %v2630 = vmul.f32 %v2554, %v290
  %v2631 = vmul.f32 %v2558, %v290
  %v2632 = vmul.f32 %v2562, %v290
  %v2633 = vmul.f32 %v2566, %v290
  %v2634 = vmul.f32 %v2570, %v290
  %v2635 = vmul.f32 %v2574, %v290
  %v2636 = vmul.f32 %v2578, %v290
  %v2637 = vmul.f32 %v2582, %v290
  %v2638 = vmul.f32 %v2586, %v290
  %v2639 = vmul.f32 %v2590, %v290
  %v2640 = vmul.f32 %v2594, %v290
  %v2641 = vmul.f32 %v2598, %v290
  %v2642 = vmul.f32 %v2602, %v290
  %v2643 = vmul.f32 %v2606, %v290
  %v2644 = vmul.f32 %v2610, %v290
  %v2645 = vadd.f32 %v2612, %v327
  %v2646 = vadd.f32 %v2613, %v327
  %v2647 = vadd.f32 %v2614, %v327
  %v2648 = vadd.f32 %v2615, %v327
  %v2649 = vadd.f32 %v2616, %v327
  %v2650 = vadd.f32 %v2617, %v327
  %v2651 = vadd.f32 %v2618, %v327
  %v2652 = vadd.f32 %v2619, %v327
  %v2653 = vadd.f32 %v2620, %v327
  %v2654 = vadd.f32 %v2621, %v327
  %v2655 = vadd.f32 %v2622, %v327
  %v2656 = vadd.f32 %v2623, %v327
  %v2657 = vadd.f32 %v2624, %v327
  %v2658 = vadd.f32 %v2625, %v327
  %v2659 = vadd.f32 %v2626, %v327
  %v2660 = vadd.f32 %v2627, %v327
  %v2661 = vadd.f32 %v2628, %v327
  %v2662 = vadd.f32 %v2629, %v327
  %v2663 = vadd.f32 %v2630, %v327
  %v2664 = vadd.f32 %v2631, %v327
  %v2665 = vadd.f32 %v2632, %v327
  %v2666 = vadd.f32 %v2633, %v327
  %v2667 = vadd.f32 %v2634, %v327
  %v2668 = vadd.f32 %v2635, %v327
  %v2669 = vadd.f32 %v2636, %v327
  %v2670 = vadd.f32 %v2637, %v327
  %v2671 = vadd.f32 %v2638, %v327
  %v2672 = vadd.f32 %v2639, %v327
  %v2673 = vadd.f32 %v2640, %v327
  %v2674 = vadd.f32 %v2641, %v327
  %v2675 = vadd.f32 %v2642, %v327
  %v2676 = vadd.f32 %v2643, %v327
  %v2677 = vadd.f32 %v2644, %v327
  %v2678 = vmax.f32 %v2645, 0.0
  %v2679 = vmax.f32 %v2646, 0.0
  %v2680 = vmax.f32 %v2647, 0.0
  %v2681 = vmax.f32 %v2648, 0.0
  %v2682 = vmax.f32 %v2649, 0.0
  %v2683 = vmax.f32 %v2650, 0.0
  %v2684 = vmax.f32 %v2651, 0.0
  %v2685 = vmax.f32 %v2652, 0.0
  %v2686 = vmax.f32 %v2653, 0.0
  %v2687 = vmax.f32 %v2654, 0.0
  %v2688 = vmax.f32 %v2655, 0.0
  %v2689 = vmax.f32 %v2656, 0.0
  %v2690 = vmax.f32 %v2657, 0.0
  %v2691 = vmax.f32 %v2658, 0.0
  %v2692 = vmax.f32 %v2659, 0.0
  %v2693 = vmax.f32 %v2660, 0.0
  %v2694 = vmax.f32 %v2661, 0.0
  %v2695 = vmax.f32 %v2662, 0.0
  %v2696 = vmax.f32 %v2663, 0.0
  %v2697 = vmax.f32 %v2664, 0.0
  %v2698 = vmax.f32 %v2665, 0.0
  %v2699 = vmax.f32 %v2666, 0.0
  %v2700 = vmax.f32 %v2667, 0.0
  %v2701 = vmax.f32 %v2668, 0.0
  %v2702 = vmax.f32 %v2669, 0.0
  %v2703 = vmax.f32 %v2670, 0.0
  %v2704 = vmax.f32 %v2671, 0.0
  %v2705 = vmax.f32 %v2672, 0.0
  %v2706 = vmax.f32 %v2673, 0.0
  %v2707 = vmax.f32 %v2674, 0.0
  %v2708 = vmax.f32 %v2675, 0.0
  %v2709 = vmax.f32 %v2676, 0.0
  %v2710 = vmax.f32 %v2677, 0.0
  %s2711 = scalar_lea.vmem %s3, 64
  %v2712 = vld [vmem:[%s2711] sm:$0xff]
  %v2713 = vld [vmem:[%s2711 + $0x8] sm:$0xff]
  %v2715 = vsel %vm30, %v2678, 0
  %v2718 = vsel %vm30, %v2679, 0
  %v2721 = vsel %vm30, %v2680, 0
  %v2724 = vsel %vm30, %v2681, 0
  %v2727 = vsel %vm30, %v2682, 0
  %v2730 = vsel %vm30, %v2683, 0
  %v2733 = vsel %vm30, %v2684, 0
  %v2736 = vsel %vm30, %v2685, 0
  %v2739 = vsel %vm30, %v2686, 0
  %v2742 = vsel %vm30, %v2687, 0
  %v2745 = vsel %vm30, %v2688, 0
  %v2748 = vsel %vm30, %v2689, 0
  %v2751 = vsel %vm30, %v2690, 0
  %v2754 = vsel %vm30, %v2691, 0
  %v2757 = vsel %vm30, %v2692, 0
  %v2760 = vsel %vm30, %v2693, 0
  %v2763 = vsel %vm30, %v2694, 0
  %v2766 = vsel %vm30, %v2695, 0
  %v2769 = vsel %vm30, %v2696, 0
  %v2772 = vsel %vm30, %v2697, 0
  %v2775 = vsel %vm30, %v2698, 0
  %v2778 = vsel %vm30, %v2699, 0
  %v2781 = vsel %vm30, %v2700, 0
  %v2784 = vsel %vm30, %v2701, 0
  %v2787 = vsel %vm30, %v2702, 0
  %v2790 = vsel %vm30, %v2703, 0
  %v2793 = vsel %vm30, %v2704, 0
  %v2796 = vsel %vm30, %v2705, 0
  %v2799 = vsel %vm30, %v2706, 0
  %v2802 = vsel %vm30, %v2707, 0
  %v2805 = vsel %vm30, %v2708, 0
  %v2808 = vsel %vm30, %v2709, 0
  %v2811 = vsel %vm30, %v2710, 0
  %2813 = vmatprep.subr.mxu0 0.0
  %2814 = vmatpush1.msra.mxu0 %v2712
  %2815 = vmatprep.subr.mxu0 0.0
  %2816 = vmatpush1.msra.mxu0 %v2713
  %2817 = vmatprep.subr.mxu0 0.0
  %2818 = vmatpush1.msra.mxu0 0.0
  %2819 = vmatprep.subr.mxu0 0.0
  %2820 = vmatpush1.msra.mxu0 0.0
  %2821 = vmatprep.subr.mxu0 0.0
  %2822 = vmatpush1.msra.mxu0 0.0
  %2823 = vmatprep.subr.mxu0 0.0
  %2824 = vmatpush1.msra.mxu0 0.0
  %2825 = vmatprep.subr.mxu0 0.0
  %2826 = vmatpush1.msra.mxu0 0.0
  %2827 = vmatprep.subr.mxu0 0.0
  %2828 = vmatpush1.msra.mxu0 0.0
  %2829 = vmatprep.subr.mxu0 0.0
  %2830 = vmatpush1.msra.mxu0 0.0
  %2831 = vmatprep.subr.mxu0 0.0
  %2832 = vmatpush1.msra.mxu0 0.0
  %2833 = vmatprep.subr.mxu0 0.0
  %2834 = vmatpush1.msra.mxu0 0.0
  %2835 = vmatprep.subr.mxu0 0.0
  %2836 = vmatpush1.msra.mxu0 0.0
  %2837 = vmatprep.subr.mxu0 0.0
  %2838 = vmatpush1.msra.mxu0 0.0
  %2839 = vmatprep.subr.mxu0 0.0
  %2840 = vmatpush1.msra.mxu0 0.0
  %2841 = vmatprep.subr.mxu0 0.0
  %2842 = vmatpush1.msra.mxu0 0.0
  %2843 = vmatprep.subr.mxu0 0.0
  %2844 = vmatpush1.msra.mxu0 0.0
  %2845 = vmatprep.subr.mxu0 0.0
  %2846 = vmatpush1.msra.mxu0 0.0
  %2847 = vmatprep.subr.mxu0 0.0
  %2848 = vmatpush1.msra.mxu0 0.0
  %2849 = vmatprep.subr.mxu0 0.0
  %2850 = vmatpush1.msra.mxu0 0.0
  %2851 = vmatprep.subr.mxu0 0.0
  %2852 = vmatpush1.msra.mxu0 0.0
  %2853 = vmatprep.subr.mxu0 0.0
  %2854 = vmatpush1.msra.mxu0 0.0
  %2855 = vmatprep.subr.mxu0 0.0
  %2856 = vmatpush1.msra.mxu0 0.0
  %2857 = vmatprep.subr.mxu0 0.0
  %2858 = vmatpush1.msra.mxu0 0.0
  %2859 = vmatprep.subr.mxu0 0.0
  %2860 = vmatpush1.msra.mxu0 0.0
  %2861 = vmatprep.subr.mxu0 0.0
  %2862 = vmatpush1.msra.mxu0 0.0
  %2863 = vmatprep.subr.mxu0 0.0
  %2864 = vmatpush1.msra.mxu0 0.0
  %2865 = vmatprep.subr.mxu0 0.0
  %2866 = vmatpush1.msra.mxu0 0.0
  %2867 = vmatprep.subr.mxu0 0.0
  %2868 = vmatpush1.msra.mxu0 0.0
  %2869 = vmatprep.subr.mxu0 0.0
  %2870 = vmatpush1.msra.mxu0 0.0
  %2871 = vmatprep.subr.mxu0 0.0
  %2872 = vmatpush1.msra.mxu0 0.0
  %2873 = vmatprep.subr.mxu0 0.0
  %2874 = vmatpush1.msra.mxu0 0.0
  %2875 = vmatprep.subr.mxu0 0.0
  %2876 = vmatpush1.msra.mxu0 0.0
  %2877 = vmatprep.mubr.f32.mxu0 0.0
  %2878 = vmatmul.mubr.f32.gmra.mrb[0].mxu0 %v2715
  %v2879 = vpop.f32.mrb[0].mxu0
  %v2880 = vadd.f32 0.0, %v2879
  %v2881 = vpop.f32.mrb[0].mxu0
  %2882 = vmatprep.mubr.f32.mxu0 0.0
  %2883 = vmatmul.mubr.f32.gmra.mrb[0].mxu0 %v2718
  %v2884 = vpop.f32.mrb[0].mxu0
  %v2885 = vadd.f32 0.0, %v2884
  %v2886 = vpop.f32.mrb[0].mxu0
  %2887 = vmatprep.mubr.f32.mxu0 0.0
  %2888 = vmatmul.mubr.f32.gmra.mrb[0].mxu0 %v2721
  %v2889 = vpop.f32.mrb[0].mxu0
  %v2890 = vadd.f32 0.0, %v2889
  %v2891 = vpop.f32.mrb[0].mxu0
  %2892 = vmatprep.mubr.f32.mxu0 0.0
  %2893 = vmatmul.mubr.f32.gmra.mrb[0].mxu0 %v2724
  %v2894 = vpop.f32.mrb[0].mxu0
  %v2895 = vadd.f32 0.0, %v2894
  %v2896 = vpop.f32.mrb[0].mxu0
  %2897 = vmatprep.mubr.f32.mxu0 0.0
  %2898 = vmatmul.mubr.f32.gmra.mrb[0].mxu0 %v2727
  %v2899 = vpop.f32.mrb[0].mxu0
  %v2900 = vadd.f32 0.0, %v2899
  %v2901 = vpop.f32.mrb[0].mxu0
  %2902 = vmatprep.mubr.f32.mxu0 0.0
  %2903 = vmatmul.mubr.f32.gmra.mrb[0].mxu0 %v2730
  %v2904 = vpop.f32.mrb[0].mxu0
  %v2905 = vadd.f32 0.0, %v2904
  %v2906 = vpop.f32.mrb[0].mxu0
  %2907 = vmatprep.mubr.f32.mxu0 0.0
  %2908 = vmatmul.mubr.f32.gmra.mrb[0].mxu0 %v2733
  %v2909 = vpop.f32.mrb[0].mxu0
  %v2910 = vadd.f32 0.0, %v2909
  %v2911 = vpop.f32.mrb[0].mxu0
  %2912 = vmatprep.mubr.f32.mxu0 0.0
  %2913 = vmatmul.mubr.f32.gmra.mrb[0].mxu0 %v2736
  %v2914 = vpop.f32.mrb[0].mxu0
  %v2915 = vadd.f32 0.0, %v2914
  %v2916 = vpop.f32.mrb[0].mxu0
  %2917 = vmatprep.mubr.f32.mxu0 0.0
  %2918 = vmatmul.mubr.f32.gmra.mrb[0].mxu0 %v2739
  %v2919 = vpop.f32.mrb[0].mxu0
  %v2920 = vadd.f32 0.0, %v2919
  %v2921 = vpop.f32.mrb[0].mxu0
  %2922 = vmatprep.mubr.f32.mxu0 0.0
  %2923 = vmatmul.mubr.f32.gmra.mrb[0].mxu0 %v2742
  %v2924 = vpop.f32.mrb[0].mxu0
  %v2925 = vadd.f32 0.0, %v2924
  %v2926 = vpop.f32.mrb[0].mxu0
  %2927 = vmatprep.mubr.f32.mxu0 0.0
  %2928 = vmatmul.mubr.f32.gmra.mrb[0].mxu0 %v2745
  %v2929 = vpop.f32.mrb[0].mxu0
  %v2930 = vadd.f32 0.0, %v2929
  %v2931 = vpop.f32.mrb[0].mxu0
  %2932 = vmatprep.mubr.f32.mxu0 0.0
  %2933 = vmatmul.mubr.f32.gmra.mrb[0].mxu0 %v2748
  %v2934 = vpop.f32.mrb[0].mxu0
  %v2935 = vadd.f32 0.0, %v2934
  %v2936 = vpop.f32.mrb[0].mxu0
  %2937 = vmatprep.mubr.f32.mxu0 0.0
  %2938 = vmatmul.mubr.f32.gmra.mrb[0].mxu0 %v2751
  %v2939 = vpop.f32.mrb[0].mxu0
  %v2940 = vadd.f32 0.0, %v2939
  %v2941 = vpop.f32.mrb[0].mxu0
  %2942 = vmatprep.mubr.f32.mxu0 0.0
  %2943 = vmatmul.mubr.f32.gmra.mrb[0].mxu0 %v2754
  %v2944 = vpop.f32.mrb[0].mxu0
  %v2945 = vadd.f32 0.0, %v2944
  %v2946 = vpop.f32.mrb[0].mxu0
  %2947 = vmatprep.mubr.f32.mxu0 0.0
  %2948 = vmatmul.mubr.f32.gmra.mrb[0].mxu0 %v2757
  %v2949 = vpop.f32.mrb[0].mxu0
  %v2950 = vadd.f32 0.0, %v2949
  %v2951 = vpop.f32.mrb[0].mxu0
  %2952 = vmatprep.mubr.f32.mxu0 0.0
  %2953 = vmatmul.mubr.f32.gmra.mrb[0].mxu0 %v2760
  %v2954 = vpop.f32.mrb[0].mxu0
  %v2955 = vadd.f32 0.0, %v2954
  %v2956 = vpop.f32.mrb[0].mxu0
  %2957 = vmatprep.mubr.f32.mxu0 0.0
  %2958 = vmatmul.mubr.f32.gmra.mrb[0].mxu0 %v2763
  %v2959 = vpop.f32.mrb[0].mxu0
  %v2960 = vadd.f32 0.0, %v2959
  %v2961 = vpop.f32.mrb[0].mxu0
  %2962 = vmatprep.mubr.f32.mxu0 0.0
  %2963 = vmatmul.mubr.f32.gmra.mrb[0].mxu0 %v2766
  %v2964 = vpop.f32.mrb[0].mxu0
  %v2965 = vadd.f32 0.0, %v2964
  %v2966 = vpop.f32.mrb[0].mxu0
  %2967 = vmatprep.mubr.f32.mxu0 0.0
  %2968 = vmatmul.mubr.f32.gmra.mrb[0].mxu0 %v2769
  %v2969 = vpop.f32.mrb[0].mxu0
  %v2970 = vadd.f32 0.0, %v2969
  %v2971 = vpop.f32.mrb[0].mxu0
  %2972 = vmatprep.mubr.f32.mxu0 0.0
  %2973 = vmatmul.mubr.f32.gmra.mrb[0].mxu0 %v2772
  %v2974 = vpop.f32.mrb[0].mxu0
  %v2975 = vadd.f32 0.0, %v2974
  %v2976 = vpop.f32.mrb[0].mxu0
  %2977 = vmatprep.mubr.f32.mxu0 0.0
  %2978 = vmatmul.mubr.f32.gmra.mrb[0].mxu0 %v2775
  %v2979 = vpop.f32.mrb[0].mxu0
  %v2980 = vadd.f32 0.0, %v2979
  %v2981 = vpop.f32.mrb[0].mxu0
  %2982 = vmatprep.mubr.f32.mxu0 0.0
  %2983 = vmatmul.mubr.f32.gmra.mrb[0].mxu0 %v2778
  %v2984 = vpop.f32.mrb[0].mxu0
  %v2985 = vadd.f32 0.0, %v2984
  %v2986 = vpop.f32.mrb[0].mxu0
  %2987 = vmatprep.mubr.f32.mxu0 0.0
  %2988 = vmatmul.mubr.f32.gmra.mrb[0].mxu0 %v2781
  %v2989 = vpop.f32.mrb[0].mxu0
  %v2990 = vadd.f32 0.0, %v2989
  %v2991 = vpop.f32.mrb[0].mxu0
  %2992 = vmatprep.mubr.f32.mxu0 0.0
  %2993 = vmatmul.mubr.f32.gmra.mrb[0].mxu0 %v2784
  %v2994 = vpop.f32.mrb[0].mxu0
  %v2995 = vadd.f32 0.0, %v2994
  %v2996 = vpop.f32.mrb[0].mxu0
  %2997 = vmatprep.mubr.f32.mxu0 0.0
  %2998 = vmatmul.mubr.f32.gmra.mrb[0].mxu0 %v2787
  %v2999 = vpop.f32.mrb[0].mxu0
  %v3000 = vadd.f32 0.0, %v2999
  %v3001 = vpop.f32.mrb[0].mxu0
  %3002 = vmatprep.mubr.f32.mxu0 0.0
  %3003 = vmatmul.mubr.f32.gmra.mrb[0].mxu0 %v2790
  %v3004 = vpop.f32.mrb[0].mxu0
  %v3005 = vadd.f32 0.0, %v3004
  %v3006 = vpop.f32.mrb[0].mxu0
  %3007 = vmatprep.mubr.f32.mxu0 0.0
  %3008 = vmatmul.mubr.f32.gmra.mrb[0].mxu0 %v2793
  %v3009 = vpop.f32.mrb[0].mxu0
  %v3010 = vadd.f32 0.0, %v3009
  %v3011 = vpop.f32.mrb[0].mxu0
  %3012 = vmatprep.mubr.f32.mxu0 0.0
  %3013 = vmatmul.mubr.f32.gmra.mrb[0].mxu0 %v2796
  %v3014 = vpop.f32.mrb[0].mxu0
  %v3015 = vadd.f32 0.0, %v3014
  %v3016 = vpop.f32.mrb[0].mxu0
  %3017 = vmatprep.mubr.f32.mxu0 0.0
  %3018 = vmatmul.mubr.f32.gmra.mrb[0].mxu0 %v2799
  %v3019 = vpop.f32.mrb[0].mxu0
  %v3020 = vadd.f32 0.0, %v3019
  %v3021 = vpop.f32.mrb[0].mxu0
  %3022 = vmatprep.mubr.f32.mxu0 0.0
  %3023 = vmatmul.mubr.f32.gmra.mrb[0].mxu0 %v2802
  %v3024 = vpop.f32.mrb[0].mxu0
  %v3025 = vadd.f32 0.0, %v3024
  %v3026 = vpop.f32.mrb[0].mxu0
  %3027 = vmatprep.mubr.f32.mxu0 0.0
  %3028 = vmatmul.mubr.f32.gmra.mrb[0].mxu0 %v2805
  %v3029 = vpop.f32.mrb[0].mxu0
  %v3030 = vadd.f32 0.0, %v3029
  %v3031 = vpop.f32.mrb[0].mxu0
  %3032 = vmatprep.mubr.f32.mxu0 0.0
  %3033 = vmatmul.mubr.f32.gmra.mrb[0].mxu0 %v2808
  %v3034 = vpop.f32.mrb[0].mxu0
  %v3035 = vadd.f32 0.0, %v3034
  %v3036 = vpop.f32.mrb[0].mxu0
  %3037 = vmatprep.mubr.f32.mxu0 0.0
  %3038 = vmatmul.mubr.f32.gmra.mrb[0].mxu0 %v2811
  %v3039 = vpop.f32.mrb[0].mxu0
  %v3040 = vadd.f32 0.0, %v3039
  %v3041 = vpop.f32.mrb[0].mxu0
  %3042 = vdwg.mxu0
  %v3043 = vadd.f32 %v2447, %v2880
  %v3044 = vadd.f32 %v2448, %v2885
  %v3045 = vadd.f32 %v2449, %v2890
  %v3046 = vadd.f32 %v2450, %v2895
  %v3047 = vadd.f32 %v2451, %v2900
  %v3048 = vadd.f32 %v2452, %v2905
  %v3049 = vadd.f32 %v2453, %v2910
  %v3050 = vadd.f32 %v2454, %v2915
  %v3051 = vadd.f32 %v2455, %v2920
  %v3052 = vadd.f32 %v2456, %v2925
  %v3053 = vadd.f32 %v2457, %v2930
  %v3054 = vadd.f32 %v2458, %v2935
  %v3055 = vadd.f32 %v2459, %v2940
  %v3056 = vadd.f32 %v2460, %v2945
  %v3057 = vadd.f32 %v2461, %v2950
  %v3058 = vadd.f32 %v2462, %v2955
  %v3059 = vadd.f32 %v2463, %v2960
  %v3060 = vadd.f32 %v2464, %v2965
  %v3061 = vadd.f32 %v2465, %v2970
  %v3062 = vadd.f32 %v2466, %v2975
  %v3063 = vadd.f32 %v2467, %v2980
  %v3064 = vadd.f32 %v2468, %v2985
  %v3065 = vadd.f32 %v2469, %v2990
  %v3066 = vadd.f32 %v2470, %v2995
  %v3067 = vadd.f32 %v2471, %v3000
  %v3068 = vadd.f32 %v2472, %v3005
  %v3069 = vadd.f32 %v2473, %v3010
  %v3070 = vadd.f32 %v2474, %v3015
  %v3071 = vadd.f32 %v2475, %v3020
  %v3072 = vadd.f32 %v2476, %v3025
  %v3073 = vadd.f32 %v2477, %v3030
  %v3074 = vadd.f32 %v2478, %v3035
  %v3075 = vadd.f32 %v2479, %v3040
  %3076 = vset.pattern.permute.xlu0 5
  %3077 = vperm.xlu0 %3076, %v89
  %v3078 = vpop.permute.xlu0 %3077
  %3080 = vset.pattern.permute.xlu0 5
  %3081 = vperm.xlu0 %3080, %v90
  %v3082 = vpop.permute.xlu0 %3081
  %3084 = vset.pattern.permute.xlu0 5
  %3085 = vperm.xlu0 %3084, %v91
  %v3086 = vpop.permute.xlu0 %3085
  %3088 = vset.pattern.permute.xlu0 5
  %3089 = vperm.xlu0 %3088, %v92
  %v3090 = vpop.permute.xlu0 %3089
  %3092 = vset.pattern.permute.xlu0 5
  %3093 = vperm.xlu0 %3092, %v93
  %v3094 = vpop.permute.xlu0 %3093
  %3096 = vset.pattern.permute.xlu0 5
  %3097 = vperm.xlu0 %3096, %v94
  %v3098 = vpop.permute.xlu0 %3097
  %3100 = vset.pattern.permute.xlu0 5
  %3101 = vperm.xlu0 %3100, %v95
  %v3102 = vpop.permute.xlu0 %3101
  %3104 = vset.pattern.permute.xlu0 5
  %3105 = vperm.xlu0 %3104, %v96
  %v3106 = vpop.permute.xlu0 %3105
  %3108 = vset.pattern.permute.xlu0 5
  %3109 = vperm.xlu0 %3108, %v97
  %v3110 = vpop.permute.xlu0 %3109
  %3112 = vset.pattern.permute.xlu0 5
  %3113 = vperm.xlu0 %3112, %v98
  %v3114 = vpop.permute.xlu0 %3113
  %3116 = vset.pattern.permute.xlu0 5
  %3117 = vperm.xlu0 %3116, %v99
  %v3118 = vpop.permute.xlu0 %3117
  %3120 = vset.pattern.permute.xlu0 5
  %3121 = vperm.xlu0 %3120, %v100
  %v3122 = vpop.permute.xlu0 %3121
  %3124 = vset.pattern.permute.xlu0 5
  %3125 = vperm.xlu0 %3124, %v101
  %v3126 = vpop.permute.xlu0 %3125
  %3128 = vset.pattern.permute.xlu0 5
  %3129 = vperm.xlu0 %3128, %v102
  %v3130 = vpop.permute.xlu0 %3129
  %3132 = vset.pattern.permute.xlu0 5
  %3133 = vperm.xlu0 %3132, %v103
  %v3134 = vpop.permute.xlu0 %3133
  %3136 = vset.pattern.permute.xlu0 5
  %3137 = vperm.xlu0 %3136, %v104
  %v3138 = vpop.permute.xlu0 %3137
  %3140 = vset.pattern.permute.xlu0 5
  %3141 = vperm.xlu0 %3140, %v105
  %v3142 = vpop.permute.xlu0 %3141
  %3144 = vset.pattern.permute.xlu0 5
  %3145 = vperm.xlu0 %3144, %v106
  %v3146 = vpop.permute.xlu0 %3145
  %3148 = vset.pattern.permute.xlu0 5
  %3149 = vperm.xlu0 %3148, %v107
  %v3150 = vpop.permute.xlu0 %3149
  %3152 = vset.pattern.permute.xlu0 5
  %3153 = vperm.xlu0 %3152, %v108
  %v3154 = vpop.permute.xlu0 %3153
  %3156 = vset.pattern.permute.xlu0 5
  %3157 = vperm.xlu0 %3156, %v109
  %v3158 = vpop.permute.xlu0 %3157
  %3160 = vset.pattern.permute.xlu0 5
  %3161 = vperm.xlu0 %3160, %v110
  %v3162 = vpop.permute.xlu0 %3161
  %3164 = vset.pattern.permute.xlu0 5
  %3165 = vperm.xlu0 %3164, %v111
  %v3166 = vpop.permute.xlu0 %3165
  %3168 = vset.pattern.permute.xlu0 5
  %3169 = vperm.xlu0 %3168, %v112
  %v3170 = vpop.permute.xlu0 %3169
  %3172 = vset.pattern.permute.xlu0 5
  %3173 = vperm.xlu0 %3172, %v113
  %v3174 = vpop.permute.xlu0 %3173
  %3176 = vset.pattern.permute.xlu0 5
  %3177 = vperm.xlu0 %3176, %v114
  %v3178 = vpop.permute.xlu0 %3177
  %3180 = vset.pattern.permute.xlu0 5
  %3181 = vperm.xlu0 %3180, %v115
  %v3182 = vpop.permute.xlu0 %3181
  %3184 = vset.pattern.permute.xlu0 5
  %3185 = vperm.xlu0 %3184, %v116
  %v3186 = vpop.permute.xlu0 %3185
  %3188 = vset.pattern.permute.xlu0 5
  %3189 = vperm.xlu0 %3188, %v117
  %v3190 = vpop.permute.xlu0 %3189
  %3192 = vset.pattern.permute.xlu0 5
  %3193 = vperm.xlu0 %3192, %v118
  %v3194 = vpop.permute.xlu0 %3193
  %3196 = vset.pattern.permute.xlu0 5
  %3197 = vperm.xlu0 %3196, %v119
  %v3198 = vpop.permute.xlu0 %3197
  %3200 = vset.pattern.permute.xlu0 5
  %3201 = vperm.xlu0 %3200, %v120
  %v3202 = vpop.permute.xlu0 %3201
  %3204 = vset.pattern.permute.xlu0 5
  %3205 = vperm.xlu0 %3204, %v121
  %v3206 = vpop.permute.xlu0 %3205
  %v3208 = vmul.f32 %v3078, %v290
  %v3209 = vmul.f32 %v3082, %v290
  %v3210 = vmul.f32 %v3086, %v290
  %v3211 = vmul.f32 %v3090, %v290
  %v3212 = vmul.f32 %v3094, %v290
  %v3213 = vmul.f32 %v3098, %v290
  %v3214 = vmul.f32 %v3102, %v290
  %v3215 = vmul.f32 %v3106, %v290
  %v3216 = vmul.f32 %v3110, %v290
  %v3217 = vmul.f32 %v3114, %v290
  %v3218 = vmul.f32 %v3118, %v290
  %v3219 = vmul.f32 %v3122, %v290
  %v3220 = vmul.f32 %v3126, %v290
  %v3221 = vmul.f32 %v3130, %v290
  %v3222 = vmul.f32 %v3134, %v290
  %v3223 = vmul.f32 %v3138, %v290
  %v3224 = vmul.f32 %v3142, %v290
  %v3225 = vmul.f32 %v3146, %v290
  %v3226 = vmul.f32 %v3150, %v290
  %v3227 = vmul.f32 %v3154, %v290
  %v3228 = vmul.f32 %v3158, %v290
  %v3229 = vmul.f32 %v3162, %v290
  %v3230 = vmul.f32 %v3166, %v290
  %v3231 = vmul.f32 %v3170, %v290
  %v3232 = vmul.f32 %v3174, %v290
  %v3233 = vmul.f32 %v3178, %v290
  %v3234 = vmul.f32 %v3182, %v290
  %v3235 = vmul.f32 %v3186, %v290
  %v3236 = vmul.f32 %v3190, %v290
  %v3237 = vmul.f32 %v3194, %v290
  %v3238 = vmul.f32 %v3198, %v290
  %v3239 = vmul.f32 %v3202, %v290
  %v3240 = vmul.f32 %v3206, %v290
  %v3241 = vadd.f32 %v3208, %v327
  %v3242 = vadd.f32 %v3209, %v327
  %v3243 = vadd.f32 %v3210, %v327
  %v3244 = vadd.f32 %v3211, %v327
  %v3245 = vadd.f32 %v3212, %v327
  %v3246 = vadd.f32 %v3213, %v327
  %v3247 = vadd.f32 %v3214, %v327
  %v3248 = vadd.f32 %v3215, %v327
  %v3249 = vadd.f32 %v3216, %v327
  %v3250 = vadd.f32 %v3217, %v327
  %v3251 = vadd.f32 %v3218, %v327
  %v3252 = vadd.f32 %v3219, %v327
  %v3253 = vadd.f32 %v3220, %v327
  %v3254 = vadd.f32 %v3221, %v327
  %v3255 = vadd.f32 %v3222, %v327
  %v3256 = vadd.f32 %v3223, %v327
  %v3257 = vadd.f32 %v3224, %v327
  %v3258 = vadd.f32 %v3225, %v327
  %v3259 = vadd.f32 %v3226, %v327
  %v3260 = vadd.f32 %v3227, %v327
  %v3261 = vadd.f32 %v3228, %v327
  %v3262 = vadd.f32 %v3229, %v327
  %v3263 = vadd.f32 %v3230, %v327
  %v3264 = vadd.f32 %v3231, %v327
  %v3265 = vadd.f32 %v3232, %v327
  %v3266 = vadd.f32 %v3233, %v327
  %v3267 = vadd.f32 %v3234, %v327
  %v3268 = vadd.f32 %v3235, %v327
  %v3269 = vadd.f32 %v3236, %v327
  %v3270 = vadd.f32 %v3237, %v327
  %v3271 = vadd.f32 %v3238, %v327
  %v3272 = vadd.f32 %v3239, %v327
  %v3273 = vadd.f32 %v3240, %v327
  %v3274 = vmax.f32 %v3241, 0.0
  %v3275 = vmax.f32 %v3242, 0.0
  %v3276 = vmax.f32 %v3243, 0.0
  %v3277 = vmax.f32 %v3244, 0.0
  %v3278 = vmax.f32 %v3245, 0.0
  %v3279 = vmax.f32 %v3246, 0.0
  %v3280 = vmax.f32 %v3247, 0.0
  %v3281 = vmax.f32 %v3248, 0.0
  %v3282 = vmax.f32 %v3249, 0.0
  %v3283 = vmax.f32 %v3250, 0.0
  %v3284 = vmax.f32 %v3251, 0.0
  %v3285 = vmax.f32 %v3252, 0.0
  %v3286 = vmax.f32 %v3253, 0.0
  %v3287 = vmax.f32 %v3254, 0.0
  %v3288 = vmax.f32 %v3255, 0.0
  %v3289 = vmax.f32 %v3256, 0.0
  %v3290 = vmax.f32 %v3257, 0.0
  %v3291 = vmax.f32 %v3258, 0.0
  %v3292 = vmax.f32 %v3259, 0.0
  %v3293 = vmax.f32 %v3260, 0.0
  %v3294 = vmax.f32 %v3261, 0.0
  %v3295 = vmax.f32 %v3262, 0.0
  %v3296 = vmax.f32 %v3263, 0.0
  %v3297 = vmax.f32 %v3264, 0.0
  %v3298 = vmax.f32 %v3265, 0.0
  %v3299 = vmax.f32 %v3266, 0.0
  %v3300 = vmax.f32 %v3267, 0.0
  %v3301 = vmax.f32 %v3268, 0.0
  %v3302 = vmax.f32 %v3269, 0.0
  %v3303 = vmax.f32 %v3270, 0.0
  %v3304 = vmax.f32 %v3271, 0.0
  %v3305 = vmax.f32 %v3272, 0.0
  %v3306 = vmax.f32 %v3273, 0.0
  %s3307 = scalar_lea.vmem %s3, 80
  %v3308 = vld [vmem:[%s3307] sm:$0xff]
  %v3309 = vld [vmem:[%s3307 + $0x8] sm:$0xff]
  %v3311 = vsel %vm30, %v3274, 0
  %v3314 = vsel %vm30, %v3275, 0
  %v3317 = vsel %vm30, %v3276, 0
  %v3320 = vsel %vm30, %v3277, 0
  %v3323 = vsel %vm30, %v3278, 0
  %v3326 = vsel %vm30, %v3279, 0
  %v3329 = vsel %vm30, %v3280, 0
  %v3332 = vsel %vm30, %v3281, 0
  %v3335 = vsel %vm30, %v3282, 0
  %v3338 = vsel %vm30, %v3283, 0
  %v3341 = vsel %vm30, %v3284, 0
  %v3344 = vsel %vm30, %v3285, 0
  %v3347 = vsel %vm30, %v3286, 0
  %v3350 = vsel %vm30, %v3287, 0
  %v3353 = vsel %vm30, %v3288, 0
  %v3356 = vsel %vm30, %v3289, 0
  %v3359 = vsel %vm30, %v3290, 0
  %v3362 = vsel %vm30, %v3291, 0
  %v3365 = vsel %vm30, %v3292, 0
  %v3368 = vsel %vm30, %v3293, 0
  %v3371 = vsel %vm30, %v3294, 0
  %v3374 = vsel %vm30, %v3295, 0
  %v3377 = vsel %vm30, %v3296, 0
  %v3380 = vsel %vm30, %v3297, 0
  %v3383 = vsel %vm30, %v3298, 0
  %v3386 = vsel %vm30, %v3299, 0
  %v3389 = vsel %vm30, %v3300, 0
  %v3392 = vsel %vm30, %v3301, 0
  %v3395 = vsel %vm30, %v3302, 0
  %v3398 = vsel %vm30, %v3303, 0
  %v3401 = vsel %vm30, %v3304, 0
  %v3404 = vsel %vm30, %v3305, 0
  %v3407 = vsel %vm30, %v3306, 0
  %3409 = vmatprep.subr.mxu0 0.0
  %3410 = vmatpush1.msra.mxu0 %v3308
  %3411 = vmatprep.subr.mxu0 0.0
  %3412 = vmatpush1.msra.mxu0 %v3309
  %3413 = vmatprep.subr.mxu0 0.0
  %3414 = vmatpush1.msra.mxu0 0.0
  %3415 = vmatprep.subr.mxu0 0.0
  %3416 = vmatpush1.msra.mxu0 0.0
  %3417 = vmatprep.subr.mxu0 0.0
  %3418 = vmatpush1.msra.mxu0 0.0
  %3419 = vmatprep.subr.mxu0 0.0
  %3420 = vmatpush1.msra.mxu0 0.0
  %3421 = vmatprep.subr.mxu0 0.0
  %3422 = vmatpush1.msra.mxu0 0.0
  %3423 = vmatprep.subr.mxu0 0.0
  %3424 = vmatpush1.msra.mxu0 0.0
  %3425 = vmatprep.subr.mxu0 0.0
  %3426 = vmatpush1.msra.mxu0 0.0
  %3427 = vmatprep.subr.mxu0 0.0
  %3428 = vmatpush1.msra.mxu0 0.0
  %3429 = vmatprep.subr.mxu0 0.0
  %3430 = vmatpush1.msra.mxu0 0.0
  %3431 = vmatprep.subr.mxu0 0.0
  %3432 = vmatpush1.msra.mxu0 0.0
  %3433 = vmatprep.subr.mxu0 0.0
  %3434 = vmatpush1.msra.mxu0 0.0
  %3435 = vmatprep.subr.mxu0 0.0
  %3436 = vmatpush1.msra.mxu0 0.0
  %3437 = vmatprep.subr.mxu0 0.0
  %3438 = vmatpush1.msra.mxu0 0.0
  %3439 = vmatprep.subr.mxu0 0.0
  %3440 = vmatpush1.msra.mxu0 0.0
  %3441 = vmatprep.subr.mxu0 0.0
  %3442 = vmatpush1.msra.mxu0 0.0
  %3443 = vmatprep.subr.mxu0 0.0
  %3444 = vmatpush1.msra.mxu0 0.0
  %3445 = vmatprep.subr.mxu0 0.0
  %3446 = vmatpush1.msra.mxu0 0.0
  %3447 = vmatprep.subr.mxu0 0.0
  %3448 = vmatpush1.msra.mxu0 0.0
  %3449 = vmatprep.subr.mxu0 0.0
  %3450 = vmatpush1.msra.mxu0 0.0
  %3451 = vmatprep.subr.mxu0 0.0
  %3452 = vmatpush1.msra.mxu0 0.0
  %3453 = vmatprep.subr.mxu0 0.0
  %3454 = vmatpush1.msra.mxu0 0.0
  %3455 = vmatprep.subr.mxu0 0.0
  %3456 = vmatpush1.msra.mxu0 0.0
  %3457 = vmatprep.subr.mxu0 0.0
  %3458 = vmatpush1.msra.mxu0 0.0
  %3459 = vmatprep.subr.mxu0 0.0
  %3460 = vmatpush1.msra.mxu0 0.0
  %3461 = vmatprep.subr.mxu0 0.0
  %3462 = vmatpush1.msra.mxu0 0.0
  %3463 = vmatprep.subr.mxu0 0.0
  %3464 = vmatpush1.msra.mxu0 0.0
  %3465 = vmatprep.subr.mxu0 0.0
  %3466 = vmatpush1.msra.mxu0 0.0
  %3467 = vmatprep.subr.mxu0 0.0
  %3468 = vmatpush1.msra.mxu0 0.0
  %3469 = vmatprep.subr.mxu0 0.0
  %3470 = vmatpush1.msra.mxu0 0.0
  %3471 = vmatprep.subr.mxu0 0.0
  %3472 = vmatpush1.msra.mxu0 0.0
  %3473 = vmatprep.mubr.f32.mxu0 0.0
  %3474 = vmatmul.mubr.f32.gmra.mrb[0].mxu0 %v3311
  %v3475 = vpop.f32.mrb[0].mxu0
  %v3476 = vadd.f32 0.0, %v3475
  %v3477 = vpop.f32.mrb[0].mxu0
  %3478 = vmatprep.mubr.f32.mxu0 0.0
  %3479 = vmatmul.mubr.f32.gmra.mrb[0].mxu0 %v3314
  %v3480 = vpop.f32.mrb[0].mxu0
  %v3481 = vadd.f32 0.0, %v3480
  %v3482 = vpop.f32.mrb[0].mxu0
  %3483 = vmatprep.mubr.f32.mxu0 0.0
  %3484 = vmatmul.mubr.f32.gmra.mrb[0].mxu0 %v3317
  %v3485 = vpop.f32.mrb[0].mxu0
  %v3486 = vadd.f32 0.0, %v3485
  %v3487 = vpop.f32.mrb[0].mxu0
  %3488 = vmatprep.mubr.f32.mxu0 0.0
  %3489 = vmatmul.mubr.f32.gmra.mrb[0].mxu0 %v3320
  %v3490 = vpop.f32.mrb[0].mxu0
  %v3491 = vadd.f32 0.0, %v3490
  %v3492 = vpop.f32.mrb[0].mxu0
  %3493 = vmatprep.mubr.f32.mxu0 0.0
  %3494 = vmatmul.mubr.f32.gmra.mrb[0].mxu0 %v3323
  %v3495 = vpop.f32.mrb[0].mxu0
  %v3496 = vadd.f32 0.0, %v3495
  %v3497 = vpop.f32.mrb[0].mxu0
  %3498 = vmatprep.mubr.f32.mxu0 0.0
  %3499 = vmatmul.mubr.f32.gmra.mrb[0].mxu0 %v3326
  %v3500 = vpop.f32.mrb[0].mxu0
  %v3501 = vadd.f32 0.0, %v3500
  %v3502 = vpop.f32.mrb[0].mxu0
  %3503 = vmatprep.mubr.f32.mxu0 0.0
  %3504 = vmatmul.mubr.f32.gmra.mrb[0].mxu0 %v3329
  %v3505 = vpop.f32.mrb[0].mxu0
  %v3506 = vadd.f32 0.0, %v3505
  %v3507 = vpop.f32.mrb[0].mxu0
  %3508 = vmatprep.mubr.f32.mxu0 0.0
  %3509 = vmatmul.mubr.f32.gmra.mrb[0].mxu0 %v3332
  %v3510 = vpop.f32.mrb[0].mxu0
  %v3511 = vadd.f32 0.0, %v3510
  %v3512 = vpop.f32.mrb[0].mxu0
  %3513 = vmatprep.mubr.f32.mxu0 0.0
  %3514 = vmatmul.mubr.f32.gmra.mrb[0].mxu0 %v3335
  %v3515 = vpop.f32.mrb[0].mxu0
  %v3516 = vadd.f32 0.0, %v3515
  %v3517 = vpop.f32.mrb[0].mxu0
  %3518 = vmatprep.mubr.f32.mxu0 0.0
  %3519 = vmatmul.mubr.f32.gmra.mrb[0].mxu0 %v3338
  %v3520 = vpop.f32.mrb[0].mxu0
  %v3521 = vadd.f32 0.0, %v3520
  %v3522 = vpop.f32.mrb[0].mxu0
  %3523 = vmatprep.mubr.f32.mxu0 0.0
  %3524 = vmatmul.mubr.f32.gmra.mrb[0].mxu0 %v3341
  %v3525 = vpop.f32.mrb[0].mxu0
  %v3526 = vadd.f32 0.0, %v3525
  %v3527 = vpop.f32.mrb[0].mxu0
  %3528 = vmatprep.mubr.f32.mxu0 0.0
  %3529 = vmatmul.mubr.f32.gmra.mrb[0].mxu0 %v3344
  %v3530 = vpop.f32.mrb[0].mxu0
  %v3531 = vadd.f32 0.0, %v3530
  %v3532 = vpop.f32.mrb[0].mxu0
  %3533 = vmatprep.mubr.f32.mxu0 0.0
  %3534 = vmatmul.mubr.f32.gmra.mrb[0].mxu0 %v3347
  %v3535 = vpop.f32.mrb[0].mxu0
  %v3536 = vadd.f32 0.0, %v3535
  %v3537 = vpop.f32.mrb[0].mxu0
  %3538 = vmatprep.mubr.f32.mxu0 0.0
  %3539 = vmatmul.mubr.f32.gmra.mrb[0].mxu0 %v3350
  %v3540 = vpop.f32.mrb[0].mxu0
  %v3541 = vadd.f32 0.0, %v3540
  %v3542 = vpop.f32.mrb[0].mxu0
  %3543 = vmatprep.mubr.f32.mxu0 0.0
  %3544 = vmatmul.mubr.f32.gmra.mrb[0].mxu0 %v3353
  %v3545 = vpop.f32.mrb[0].mxu0
  %v3546 = vadd.f32 0.0, %v3545
  %v3547 = vpop.f32.mrb[0].mxu0
  %3548 = vmatprep.mubr.f32.mxu0 0.0
  %3549 = vmatmul.mubr.f32.gmra.mrb[0].mxu0 %v3356
  %v3550 = vpop.f32.mrb[0].mxu0
  %v3551 = vadd.f32 0.0, %v3550
  %v3552 = vpop.f32.mrb[0].mxu0
  %3553 = vmatprep.mubr.f32.mxu0 0.0
  %3554 = vmatmul.mubr.f32.gmra.mrb[0].mxu0 %v3359
  %v3555 = vpop.f32.mrb[0].mxu0
  %v3556 = vadd.f32 0.0, %v3555
  %v3557 = vpop.f32.mrb[0].mxu0
  %3558 = vmatprep.mubr.f32.mxu0 0.0
  %3559 = vmatmul.mubr.f32.gmra.mrb[0].mxu0 %v3362
  %v3560 = vpop.f32.mrb[0].mxu0
  %v3561 = vadd.f32 0.0, %v3560
  %v3562 = vpop.f32.mrb[0].mxu0
  %3563 = vmatprep.mubr.f32.mxu0 0.0
  %3564 = vmatmul.mubr.f32.gmra.mrb[0].mxu0 %v3365
  %v3565 = vpop.f32.mrb[0].mxu0
  %v3566 = vadd.f32 0.0, %v3565
  %v3567 = vpop.f32.mrb[0].mxu0
  %3568 = vmatprep.mubr.f32.mxu0 0.0
  %3569 = vmatmul.mubr.f32.gmra.mrb[0].mxu0 %v3368
  %v3570 = vpop.f32.mrb[0].mxu0
  %v3571 = vadd.f32 0.0, %v3570
  %v3572 = vpop.f32.mrb[0].mxu0
  %3573 = vmatprep.mubr.f32.mxu0 0.0
  %3574 = vmatmul.mubr.f32.gmra.mrb[0].mxu0 %v3371
  %v3575 = vpop.f32.mrb[0].mxu0
  %v3576 = vadd.f32 0.0, %v3575
  %v3577 = vpop.f32.mrb[0].mxu0
  %3578 = vmatprep.mubr.f32.mxu0 0.0
  %3579 = vmatmul.mubr.f32.gmra.mrb[0].mxu0 %v3374
  %v3580 = vpop.f32.mrb[0].mxu0
  %v3581 = vadd.f32 0.0, %v3580
  %v3582 = vpop.f32.mrb[0].mxu0
  %3583 = vmatprep.mubr.f32.mxu0 0.0
  %3584 = vmatmul.mubr.f32.gmra.mrb[0].mxu0 %v3377
  %v3585 = vpop.f32.mrb[0].mxu0
  %v3586 = vadd.f32 0.0, %v3585
  %v3587 = vpop.f32.mrb[0].mxu0
  %3588 = vmatprep.mubr.f32.mxu0 0.0
  %3589 = vmatmul.mubr.f32.gmra.mrb[0].mxu0 %v3380
  %v3590 = vpop.f32.mrb[0].mxu0
  %v3591 = vadd.f32 0.0, %v3590
  %v3592 = vpop.f32.mrb[0].mxu0
  %3593 = vmatprep.mubr.f32.mxu0 0.0
  %3594 = vmatmul.mubr.f32.gmra.mrb[0].mxu0 %v3383
  %v3595 = vpop.f32.mrb[0].mxu0
  %v3596 = vadd.f32 0.0, %v3595
  %v3597 = vpop.f32.mrb[0].mxu0
  %3598 = vmatprep.mubr.f32.mxu0 0.0
  %3599 = vmatmul.mubr.f32.gmra.mrb[0].mxu0 %v3386
  %v3600 = vpop.f32.mrb[0].mxu0
  %v3601 = vadd.f32 0.0, %v3600
  %v3602 = vpop.f32.mrb[0].mxu0
  %3603 = vmatprep.mubr.f32.mxu0 0.0
  %3604 = vmatmul.mubr.f32.gmra.mrb[0].mxu0 %v3389
  %v3605 = vpop.f32.mrb[0].mxu0
  %v3606 = vadd.f32 0.0, %v3605
  %v3607 = vpop.f32.mrb[0].mxu0
  %3608 = vmatprep.mubr.f32.mxu0 0.0
  %3609 = vmatmul.mubr.f32.gmra.mrb[0].mxu0 %v3392
  %v3610 = vpop.f32.mrb[0].mxu0
  %v3611 = vadd.f32 0.0, %v3610
  %v3612 = vpop.f32.mrb[0].mxu0
  %3613 = vmatprep.mubr.f32.mxu0 0.0
  %3614 = vmatmul.mubr.f32.gmra.mrb[0].mxu0 %v3395
  %v3615 = vpop.f32.mrb[0].mxu0
  %v3616 = vadd.f32 0.0, %v3615
  %v3617 = vpop.f32.mrb[0].mxu0
  %3618 = vmatprep.mubr.f32.mxu0 0.0
  %3619 = vmatmul.mubr.f32.gmra.mrb[0].mxu0 %v3398
  %v3620 = vpop.f32.mrb[0].mxu0
  %v3621 = vadd.f32 0.0, %v3620
  %v3622 = vpop.f32.mrb[0].mxu0
  %3623 = vmatprep.mubr.f32.mxu0 0.0
  %3624 = vmatmul.mubr.f32.gmra.mrb[0].mxu0 %v3401
  %v3625 = vpop.f32.mrb[0].mxu0
  %v3626 = vadd.f32 0.0, %v3625
  %v3627 = vpop.f32.mrb[0].mxu0
  %3628 = vmatprep.mubr.f32.mxu0 0.0
  %3629 = vmatmul.mubr.f32.gmra.mrb[0].mxu0 %v3404
  %v3630 = vpop.f32.mrb[0].mxu0
  %v3631 = vadd.f32 0.0, %v3630
  %v3632 = vpop.f32.mrb[0].mxu0
  %3633 = vmatprep.mubr.f32.mxu0 0.0
  %3634 = vmatmul.mubr.f32.gmra.mrb[0].mxu0 %v3407
  %v3635 = vpop.f32.mrb[0].mxu0
  %v3636 = vadd.f32 0.0, %v3635
  %v3637 = vpop.f32.mrb[0].mxu0
  %3638 = vdwg.mxu0
  %v3639 = vadd.f32 %v3043, %v3476
  %v3640 = vadd.f32 %v3044, %v3481
  %v3641 = vadd.f32 %v3045, %v3486
  %v3642 = vadd.f32 %v3046, %v3491
  %v3643 = vadd.f32 %v3047, %v3496
  %v3644 = vadd.f32 %v3048, %v3501
  %v3645 = vadd.f32 %v3049, %v3506
  %v3646 = vadd.f32 %v3050, %v3511
  %v3647 = vadd.f32 %v3051, %v3516
  %v3648 = vadd.f32 %v3052, %v3521
  %v3649 = vadd.f32 %v3053, %v3526
  %v3650 = vadd.f32 %v3054, %v3531
  %v3651 = vadd.f32 %v3055, %v3536
  %v3652 = vadd.f32 %v3056, %v3541
  %v3653 = vadd.f32 %v3057, %v3546
  %v3654 = vadd.f32 %v3058, %v3551
  %v3655 = vadd.f32 %v3059, %v3556
  %v3656 = vadd.f32 %v3060, %v3561
  %v3657 = vadd.f32 %v3061, %v3566
  %v3658 = vadd.f32 %v3062, %v3571
  %v3659 = vadd.f32 %v3063, %v3576
  %v3660 = vadd.f32 %v3064, %v3581
  %v3661 = vadd.f32 %v3065, %v3586
  %v3662 = vadd.f32 %v3066, %v3591
  %v3663 = vadd.f32 %v3067, %v3596
  %v3664 = vadd.f32 %v3068, %v3601
  %v3665 = vadd.f32 %v3069, %v3606
  %v3666 = vadd.f32 %v3070, %v3611
  %v3667 = vadd.f32 %v3071, %v3616
  %v3668 = vadd.f32 %v3072, %v3621
  %v3669 = vadd.f32 %v3073, %v3626
  %v3670 = vadd.f32 %v3074, %v3631
  %v3671 = vadd.f32 %v3075, %v3636
  %3672 = vset.pattern.permute.xlu0 6
  %3673 = vperm.xlu0 %3672, %v89
  %v3674 = vpop.permute.xlu0 %3673
  %3676 = vset.pattern.permute.xlu0 6
  %3677 = vperm.xlu0 %3676, %v90
  %v3678 = vpop.permute.xlu0 %3677
  %3680 = vset.pattern.permute.xlu0 6
  %3681 = vperm.xlu0 %3680, %v91
  %v3682 = vpop.permute.xlu0 %3681
  %3684 = vset.pattern.permute.xlu0 6
  %3685 = vperm.xlu0 %3684, %v92
  %v3686 = vpop.permute.xlu0 %3685
  %3688 = vset.pattern.permute.xlu0 6
  %3689 = vperm.xlu0 %3688, %v93
  %v3690 = vpop.permute.xlu0 %3689
  %3692 = vset.pattern.permute.xlu0 6
  %3693 = vperm.xlu0 %3692, %v94
  %v3694 = vpop.permute.xlu0 %3693
  %3696 = vset.pattern.permute.xlu0 6
  %3697 = vperm.xlu0 %3696, %v95
  %v3698 = vpop.permute.xlu0 %3697
  %3700 = vset.pattern.permute.xlu0 6
  %3701 = vperm.xlu0 %3700, %v96
  %v3702 = vpop.permute.xlu0 %3701
  %3704 = vset.pattern.permute.xlu0 6
  %3705 = vperm.xlu0 %3704, %v97
  %v3706 = vpop.permute.xlu0 %3705
  %3708 = vset.pattern.permute.xlu0 6
  %3709 = vperm.xlu0 %3708, %v98
  %v3710 = vpop.permute.xlu0 %3709
  %3712 = vset.pattern.permute.xlu0 6
  %3713 = vperm.xlu0 %3712, %v99
  %v3714 = vpop.permute.xlu0 %3713
  %3716 = vset.pattern.permute.xlu0 6
  %3717 = vperm.xlu0 %3716, %v100
  %v3718 = vpop.permute.xlu0 %3717
  %3720 = vset.pattern.permute.xlu0 6
  %3721 = vperm.xlu0 %3720, %v101
  %v3722 = vpop.permute.xlu0 %3721
  %3724 = vset.pattern.permute.xlu0 6
  %3725 = vperm.xlu0 %3724, %v102
  %v3726 = vpop.permute.xlu0 %3725
  %3728 = vset.pattern.permute.xlu0 6
  %3729 = vperm.xlu0 %3728, %v103
  %v3730 = vpop.permute.xlu0 %3729
  %3732 = vset.pattern.permute.xlu0 6
  %3733 = vperm.xlu0 %3732, %v104
  %v3734 = vpop.permute.xlu0 %3733
  %3736 = vset.pattern.permute.xlu0 6
  %3737 = vperm.xlu0 %3736, %v105
  %v3738 = vpop.permute.xlu0 %3737
  %3740 = vset.pattern.permute.xlu0 6
  %3741 = vperm.xlu0 %3740, %v106
  %v3742 = vpop.permute.xlu0 %3741
  %3744 = vset.pattern.permute.xlu0 6
  %3745 = vperm.xlu0 %3744, %v107
  %v3746 = vpop.permute.xlu0 %3745
  %3748 = vset.pattern.permute.xlu0 6
  %3749 = vperm.xlu0 %3748, %v108
  %v3750 = vpop.permute.xlu0 %3749
  %3752 = vset.pattern.permute.xlu0 6
  %3753 = vperm.xlu0 %3752, %v109
  %v3754 = vpop.permute.xlu0 %3753
  %3756 = vset.pattern.permute.xlu0 6
  %3757 = vperm.xlu0 %3756, %v110
  %v3758 = vpop.permute.xlu0 %3757
  %3760 = vset.pattern.permute.xlu0 6
  %3761 = vperm.xlu0 %3760, %v111
  %v3762 = vpop.permute.xlu0 %3761
  %3764 = vset.pattern.permute.xlu0 6
  %3765 = vperm.xlu0 %3764, %v112
  %v3766 = vpop.permute.xlu0 %3765
  %3768 = vset.pattern.permute.xlu0 6
  %3769 = vperm.xlu0 %3768, %v113
  %v3770 = vpop.permute.xlu0 %3769
  %3772 = vset.pattern.permute.xlu0 6
  %3773 = vperm.xlu0 %3772, %v114
  %v3774 = vpop.permute.xlu0 %3773
  %3776 = vset.pattern.permute.xlu0 6
  %3777 = vperm.xlu0 %3776, %v115
  %v3778 = vpop.permute.xlu0 %3777
  %3780 = vset.pattern.permute.xlu0 6
  %3781 = vperm.xlu0 %3780, %v116
  %v3782 = vpop.permute.xlu0 %3781
  %3784 = vset.pattern.permute.xlu0 6
  %3785 = vperm.xlu0 %3784, %v117
  %v3786 = vpop.permute.xlu0 %3785
  %3788 = vset.pattern.permute.xlu0 6
  %3789 = vperm.xlu0 %3788, %v118
  %v3790 = vpop.permute.xlu0 %3789
  %3792 = vset.pattern.permute.xlu0 6
  %3793 = vperm.xlu0 %3792, %v119
  %v3794 = vpop.permute.xlu0 %3793
  %3796 = vset.pattern.permute.xlu0 6
  %3797 = vperm.xlu0 %3796, %v120
  %v3798 = vpop.permute.xlu0 %3797
  %3800 = vset.pattern.permute.xlu0 6
  %3801 = vperm.xlu0 %3800, %v121
  %v3802 = vpop.permute.xlu0 %3801
  %v3804 = vmul.f32 %v3674, %v290
  %v3805 = vmul.f32 %v3678, %v290
  %v3806 = vmul.f32 %v3682, %v290
  %v3807 = vmul.f32 %v3686, %v290
  %v3808 = vmul.f32 %v3690, %v290
  %v3809 = vmul.f32 %v3694, %v290
  %v3810 = vmul.f32 %v3698, %v290
  %v3811 = vmul.f32 %v3702, %v290
  %v3812 = vmul.f32 %v3706, %v290
  %v3813 = vmul.f32 %v3710, %v290
  %v3814 = vmul.f32 %v3714, %v290
  %v3815 = vmul.f32 %v3718, %v290
  %v3816 = vmul.f32 %v3722, %v290
  %v3817 = vmul.f32 %v3726, %v290
  %v3818 = vmul.f32 %v3730, %v290
  %v3819 = vmul.f32 %v3734, %v290
  %v3820 = vmul.f32 %v3738, %v290
  %v3821 = vmul.f32 %v3742, %v290
  %v3822 = vmul.f32 %v3746, %v290
  %v3823 = vmul.f32 %v3750, %v290
  %v3824 = vmul.f32 %v3754, %v290
  %v3825 = vmul.f32 %v3758, %v290
  %v3826 = vmul.f32 %v3762, %v290
  %v3827 = vmul.f32 %v3766, %v290
  %v3828 = vmul.f32 %v3770, %v290
  %v3829 = vmul.f32 %v3774, %v290
  %v3830 = vmul.f32 %v3778, %v290
  %v3831 = vmul.f32 %v3782, %v290
  %v3832 = vmul.f32 %v3786, %v290
  %v3833 = vmul.f32 %v3790, %v290
  %v3834 = vmul.f32 %v3794, %v290
  %v3835 = vmul.f32 %v3798, %v290
  %v3836 = vmul.f32 %v3802, %v290
  %v3837 = vadd.f32 %v3804, %v327
  %v3838 = vadd.f32 %v3805, %v327
  %v3839 = vadd.f32 %v3806, %v327
  %v3840 = vadd.f32 %v3807, %v327
  %v3841 = vadd.f32 %v3808, %v327
  %v3842 = vadd.f32 %v3809, %v327
  %v3843 = vadd.f32 %v3810, %v327
  %v3844 = vadd.f32 %v3811, %v327
  %v3845 = vadd.f32 %v3812, %v327
  %v3846 = vadd.f32 %v3813, %v327
  %v3847 = vadd.f32 %v3814, %v327
  %v3848 = vadd.f32 %v3815, %v327
  %v3849 = vadd.f32 %v3816, %v327
  %v3850 = vadd.f32 %v3817, %v327
  %v3851 = vadd.f32 %v3818, %v327
  %v3852 = vadd.f32 %v3819, %v327
  %v3853 = vadd.f32 %v3820, %v327
  %v3854 = vadd.f32 %v3821, %v327
  %v3855 = vadd.f32 %v3822, %v327
  %v3856 = vadd.f32 %v3823, %v327
  %v3857 = vadd.f32 %v3824, %v327
  %v3858 = vadd.f32 %v3825, %v327
  %v3859 = vadd.f32 %v3826, %v327
  %v3860 = vadd.f32 %v3827, %v327
  %v3861 = vadd.f32 %v3828, %v327
  %v3862 = vadd.f32 %v3829, %v327
  %v3863 = vadd.f32 %v3830, %v327
  %v3864 = vadd.f32 %v3831, %v327
  %v3865 = vadd.f32 %v3832, %v327
  %v3866 = vadd.f32 %v3833, %v327
  %v3867 = vadd.f32 %v3834, %v327
  %v3868 = vadd.f32 %v3835, %v327
  %v3869 = vadd.f32 %v3836, %v327
  %v3870 = vmax.f32 %v3837, 0.0
  %v3871 = vmax.f32 %v3838, 0.0
  %v3872 = vmax.f32 %v3839, 0.0
  %v3873 = vmax.f32 %v3840, 0.0
  %v3874 = vmax.f32 %v3841, 0.0
  %v3875 = vmax.f32 %v3842, 0.0
  %v3876 = vmax.f32 %v3843, 0.0
  %v3877 = vmax.f32 %v3844, 0.0
  %v3878 = vmax.f32 %v3845, 0.0
  %v3879 = vmax.f32 %v3846, 0.0
  %v3880 = vmax.f32 %v3847, 0.0
  %v3881 = vmax.f32 %v3848, 0.0
  %v3882 = vmax.f32 %v3849, 0.0
  %v3883 = vmax.f32 %v3850, 0.0
  %v3884 = vmax.f32 %v3851, 0.0
  %v3885 = vmax.f32 %v3852, 0.0
  %v3886 = vmax.f32 %v3853, 0.0
  %v3887 = vmax.f32 %v3854, 0.0
  %v3888 = vmax.f32 %v3855, 0.0
  %v3889 = vmax.f32 %v3856, 0.0
  %v3890 = vmax.f32 %v3857, 0.0
  %v3891 = vmax.f32 %v3858, 0.0
  %v3892 = vmax.f32 %v3859, 0.0
  %v3893 = vmax.f32 %v3860, 0.0
  %v3894 = vmax.f32 %v3861, 0.0
  %v3895 = vmax.f32 %v3862, 0.0
  %v3896 = vmax.f32 %v3863, 0.0
  %v3897 = vmax.f32 %v3864, 0.0
  %v3898 = vmax.f32 %v3865, 0.0
  %v3899 = vmax.f32 %v3866, 0.0
  %v3900 = vmax.f32 %v3867, 0.0
  %v3901 = vmax.f32 %v3868, 0.0
  %v3902 = vmax.f32 %v3869, 0.0
  %s3903 = scalar_lea.vmem %s3, 96
  %v3904 = vld [vmem:[%s3903] sm:$0xff]
  %v3905 = vld [vmem:[%s3903 + $0x8] sm:$0xff]
  %v3907 = vsel %vm30, %v3870, 0
  %v3910 = vsel %vm30, %v3871, 0
  %v3913 = vsel %vm30, %v3872, 0
  %v3916 = vsel %vm30, %v3873, 0
  %v3919 = vsel %vm30, %v3874, 0
  %v3922 = vsel %vm30, %v3875, 0
  %v3925 = vsel %vm30, %v3876, 0
  %v3928 = vsel %vm30, %v3877, 0
  %v3931 = vsel %vm30, %v3878, 0
  %v3934 = vsel %vm30, %v3879, 0
  %v3937 = vsel %vm30, %v3880, 0
  %v3940 = vsel %vm30, %v3881, 0
  %v3943 = vsel %vm30, %v3882, 0
  %v3946 = vsel %vm30, %v3883, 0
  %v3949 = vsel %vm30, %v3884, 0
  %v3952 = vsel %vm30, %v3885, 0
  %v3955 = vsel %vm30, %v3886, 0
  %v3958 = vsel %vm30, %v3887, 0
  %v3961 = vsel %vm30, %v3888, 0
  %v3964 = vsel %vm30, %v3889, 0
  %v3967 = vsel %vm30, %v3890, 0
  %v3970 = vsel %vm30, %v3891, 0
  %v3973 = vsel %vm30, %v3892, 0
  %v3976 = vsel %vm30, %v3893, 0
  %v3979 = vsel %vm30, %v3894, 0
  %v3982 = vsel %vm30, %v3895, 0
  %v3985 = vsel %vm30, %v3896, 0
  %v3988 = vsel %vm30, %v3897, 0
  %v3991 = vsel %vm30, %v3898, 0
  %v3994 = vsel %vm30, %v3899, 0
  %v3997 = vsel %vm30, %v3900, 0
  %v4000 = vsel %vm30, %v3901, 0
  %v4003 = vsel %vm30, %v3902, 0
  %4005 = vmatprep.subr.mxu0 0.0
  %4006 = vmatpush1.msra.mxu0 %v3904
  %4007 = vmatprep.subr.mxu0 0.0
  %4008 = vmatpush1.msra.mxu0 %v3905
  %4009 = vmatprep.subr.mxu0 0.0
  %4010 = vmatpush1.msra.mxu0 0.0
  %4011 = vmatprep.subr.mxu0 0.0
  %4012 = vmatpush1.msra.mxu0 0.0
  %4013 = vmatprep.subr.mxu0 0.0
  %4014 = vmatpush1.msra.mxu0 0.0
  %4015 = vmatprep.subr.mxu0 0.0
  %4016 = vmatpush1.msra.mxu0 0.0
  %4017 = vmatprep.subr.mxu0 0.0
  %4018 = vmatpush1.msra.mxu0 0.0
  %4019 = vmatprep.subr.mxu0 0.0
  %4020 = vmatpush1.msra.mxu0 0.0
  %4021 = vmatprep.subr.mxu0 0.0
  %4022 = vmatpush1.msra.mxu0 0.0
  %4023 = vmatprep.subr.mxu0 0.0
  %4024 = vmatpush1.msra.mxu0 0.0
  %4025 = vmatprep.subr.mxu0 0.0
  %4026 = vmatpush1.msra.mxu0 0.0
  %4027 = vmatprep.subr.mxu0 0.0
  %4028 = vmatpush1.msra.mxu0 0.0
  %4029 = vmatprep.subr.mxu0 0.0
  %4030 = vmatpush1.msra.mxu0 0.0
  %4031 = vmatprep.subr.mxu0 0.0
  %4032 = vmatpush1.msra.mxu0 0.0
  %4033 = vmatprep.subr.mxu0 0.0
  %4034 = vmatpush1.msra.mxu0 0.0
  %4035 = vmatprep.subr.mxu0 0.0
  %4036 = vmatpush1.msra.mxu0 0.0
  %4037 = vmatprep.subr.mxu0 0.0
  %4038 = vmatpush1.msra.mxu0 0.0
  %4039 = vmatprep.subr.mxu0 0.0
  %4040 = vmatpush1.msra.mxu0 0.0
  %4041 = vmatprep.subr.mxu0 0.0
  %4042 = vmatpush1.msra.mxu0 0.0
  %4043 = vmatprep.subr.mxu0 0.0
  %4044 = vmatpush1.msra.mxu0 0.0
  %4045 = vmatprep.subr.mxu0 0.0
  %4046 = vmatpush1.msra.mxu0 0.0
  %4047 = vmatprep.subr.mxu0 0.0
  %4048 = vmatpush1.msra.mxu0 0.0
  %4049 = vmatprep.subr.mxu0 0.0
  %4050 = vmatpush1.msra.mxu0 0.0
  %4051 = vmatprep.subr.mxu0 0.0
  %4052 = vmatpush1.msra.mxu0 0.0
  %4053 = vmatprep.subr.mxu0 0.0
  %4054 = vmatpush1.msra.mxu0 0.0
  %4055 = vmatprep.subr.mxu0 0.0
  %4056 = vmatpush1.msra.mxu0 0.0
  %4057 = vmatprep.subr.mxu0 0.0
  %4058 = vmatpush1.msra.mxu0 0.0
  %4059 = vmatprep.subr.mxu0 0.0
  %4060 = vmatpush1.msra.mxu0 0.0
  %4061 = vmatprep.subr.mxu0 0.0
  %4062 = vmatpush1.msra.mxu0 0.0
  %4063 = vmatprep.subr.mxu0 0.0
  %4064 = vmatpush1.msra.mxu0 0.0
  %4065 = vmatprep.subr.mxu0 0.0
  %4066 = vmatpush1.msra.mxu0 0.0
  %4067 = vmatprep.subr.mxu0 0.0
  %4068 = vmatpush1.msra.mxu0 0.0
  %4069 = vmatprep.mubr.f32.mxu0 0.0
  %4070 = vmatmul.mubr.f32.gmra.mrb[0].mxu0 %v3907
  %v4071 = vpop.f32.mrb[0].mxu0
  %v4072 = vadd.f32 0.0, %v4071
  %v4073 = vpop.f32.mrb[0].mxu0
  %4074 = vmatprep.mubr.f32.mxu0 0.0
  %4075 = vmatmul.mubr.f32.gmra.mrb[0].mxu0 %v3910
  %v4076 = vpop.f32.mrb[0].mxu0
  %v4077 = vadd.f32 0.0, %v4076
  %v4078 = vpop.f32.mrb[0].mxu0
  %4079 = vmatprep.mubr.f32.mxu0 0.0
  %4080 = vmatmul.mubr.f32.gmra.mrb[0].mxu0 %v3913
  %v4081 = vpop.f32.mrb[0].mxu0
  %v4082 = vadd.f32 0.0, %v4081
  %v4083 = vpop.f32.mrb[0].mxu0
  %4084 = vmatprep.mubr.f32.mxu0 0.0
  %4085 = vmatmul.mubr.f32.gmra.mrb[0].mxu0 %v3916
  %v4086 = vpop.f32.mrb[0].mxu0
  %v4087 = vadd.f32 0.0, %v4086
  %v4088 = vpop.f32.mrb[0].mxu0
  %4089 = vmatprep.mubr.f32.mxu0 0.0
  %4090 = vmatmul.mubr.f32.gmra.mrb[0].mxu0 %v3919
  %v4091 = vpop.f32.mrb[0].mxu0
  %v4092 = vadd.f32 0.0, %v4091
  %v4093 = vpop.f32.mrb[0].mxu0
  %4094 = vmatprep.mubr.f32.mxu0 0.0
  %4095 = vmatmul.mubr.f32.gmra.mrb[0].mxu0 %v3922
  %v4096 = vpop.f32.mrb[0].mxu0
  %v4097 = vadd.f32 0.0, %v4096
  %v4098 = vpop.f32.mrb[0].mxu0
  %4099 = vmatprep.mubr.f32.mxu0 0.0
  %4100 = vmatmul.mubr.f32.gmra.mrb[0].mxu0 %v3925
  %v4101 = vpop.f32.mrb[0].mxu0
  %v4102 = vadd.f32 0.0, %v4101
  %v4103 = vpop.f32.mrb[0].mxu0
  %4104 = vmatprep.mubr.f32.mxu0 0.0
  %4105 = vmatmul.mubr.f32.gmra.mrb[0].mxu0 %v3928
  %v4106 = vpop.f32.mrb[0].mxu0
  %v4107 = vadd.f32 0.0, %v4106
  %v4108 = vpop.f32.mrb[0].mxu0
  %4109 = vmatprep.mubr.f32.mxu0 0.0
  %4110 = vmatmul.mubr.f32.gmra.mrb[0].mxu0 %v3931
  %v4111 = vpop.f32.mrb[0].mxu0
  %v4112 = vadd.f32 0.0, %v4111
  %v4113 = vpop.f32.mrb[0].mxu0
  %4114 = vmatprep.mubr.f32.mxu0 0.0
  %4115 = vmatmul.mubr.f32.gmra.mrb[0].mxu0 %v3934
  %v4116 = vpop.f32.mrb[0].mxu0
  %v4117 = vadd.f32 0.0, %v4116
  %v4118 = vpop.f32.mrb[0].mxu0
  %4119 = vmatprep.mubr.f32.mxu0 0.0
  %4120 = vmatmul.mubr.f32.gmra.mrb[0].mxu0 %v3937
  %v4121 = vpop.f32.mrb[0].mxu0
  %v4122 = vadd.f32 0.0, %v4121
  %v4123 = vpop.f32.mrb[0].mxu0
  %4124 = vmatprep.mubr.f32.mxu0 0.0
  %4125 = vmatmul.mubr.f32.gmra.mrb[0].mxu0 %v3940
  %v4126 = vpop.f32.mrb[0].mxu0
  %v4127 = vadd.f32 0.0, %v4126
  %v4128 = vpop.f32.mrb[0].mxu0
  %4129 = vmatprep.mubr.f32.mxu0 0.0
  %4130 = vmatmul.mubr.f32.gmra.mrb[0].mxu0 %v3943
  %v4131 = vpop.f32.mrb[0].mxu0
  %v4132 = vadd.f32 0.0, %v4131
  %v4133 = vpop.f32.mrb[0].mxu0
  %4134 = vmatprep.mubr.f32.mxu0 0.0
  %4135 = vmatmul.mubr.f32.gmra.mrb[0].mxu0 %v3946
  %v4136 = vpop.f32.mrb[0].mxu0
  %v4137 = vadd.f32 0.0, %v4136
  %v4138 = vpop.f32.mrb[0].mxu0
  %4139 = vmatprep.mubr.f32.mxu0 0.0
  %4140 = vmatmul.mubr.f32.gmra.mrb[0].mxu0 %v3949
  %v4141 = vpop.f32.mrb[0].mxu0
  %v4142 = vadd.f32 0.0, %v4141
  %v4143 = vpop.f32.mrb[0].mxu0
  %4144 = vmatprep.mubr.f32.mxu0 0.0
  %4145 = vmatmul.mubr.f32.gmra.mrb[0].mxu0 %v3952
  %v4146 = vpop.f32.mrb[0].mxu0
  %v4147 = vadd.f32 0.0, %v4146
  %v4148 = vpop.f32.mrb[0].mxu0
  %4149 = vmatprep.mubr.f32.mxu0 0.0
  %4150 = vmatmul.mubr.f32.gmra.mrb[0].mxu0 %v3955
  %v4151 = vpop.f32.mrb[0].mxu0
  %v4152 = vadd.f32 0.0, %v4151
  %v4153 = vpop.f32.mrb[0].mxu0
  %4154 = vmatprep.mubr.f32.mxu0 0.0
  %4155 = vmatmul.mubr.f32.gmra.mrb[0].mxu0 %v3958
  %v4156 = vpop.f32.mrb[0].mxu0
  %v4157 = vadd.f32 0.0, %v4156
  %v4158 = vpop.f32.mrb[0].mxu0
  %4159 = vmatprep.mubr.f32.mxu0 0.0
  %4160 = vmatmul.mubr.f32.gmra.mrb[0].mxu0 %v3961
  %v4161 = vpop.f32.mrb[0].mxu0
  %v4162 = vadd.f32 0.0, %v4161
  %v4163 = vpop.f32.mrb[0].mxu0
  %4164 = vmatprep.mubr.f32.mxu0 0.0
  %4165 = vmatmul.mubr.f32.gmra.mrb[0].mxu0 %v3964
  %v4166 = vpop.f32.mrb[0].mxu0
  %v4167 = vadd.f32 0.0, %v4166
  %v4168 = vpop.f32.mrb[0].mxu0
  %4169 = vmatprep.mubr.f32.mxu0 0.0
  %4170 = vmatmul.mubr.f32.gmra.mrb[0].mxu0 %v3967
  %v4171 = vpop.f32.mrb[0].mxu0
  %v4172 = vadd.f32 0.0, %v4171
  %v4173 = vpop.f32.mrb[0].mxu0
  %4174 = vmatprep.mubr.f32.mxu0 0.0
  %4175 = vmatmul.mubr.f32.gmra.mrb[0].mxu0 %v3970
  %v4176 = vpop.f32.mrb[0].mxu0
  %v4177 = vadd.f32 0.0, %v4176
  %v4178 = vpop.f32.mrb[0].mxu0
  %4179 = vmatprep.mubr.f32.mxu0 0.0
  %4180 = vmatmul.mubr.f32.gmra.mrb[0].mxu0 %v3973
  %v4181 = vpop.f32.mrb[0].mxu0
  %v4182 = vadd.f32 0.0, %v4181
  %v4183 = vpop.f32.mrb[0].mxu0
  %4184 = vmatprep.mubr.f32.mxu0 0.0
  %4185 = vmatmul.mubr.f32.gmra.mrb[0].mxu0 %v3976
  %v4186 = vpop.f32.mrb[0].mxu0
  %v4187 = vadd.f32 0.0, %v4186
  %v4188 = vpop.f32.mrb[0].mxu0
  %4189 = vmatprep.mubr.f32.mxu0 0.0
  %4190 = vmatmul.mubr.f32.gmra.mrb[0].mxu0 %v3979
  %v4191 = vpop.f32.mrb[0].mxu0
  %v4192 = vadd.f32 0.0, %v4191
  %v4193 = vpop.f32.mrb[0].mxu0
  %4194 = vmatprep.mubr.f32.mxu0 0.0
  %4195 = vmatmul.mubr.f32.gmra.mrb[0].mxu0 %v3982
  %v4196 = vpop.f32.mrb[0].mxu0
  %v4197 = vadd.f32 0.0, %v4196
  %v4198 = vpop.f32.mrb[0].mxu0
  %4199 = vmatprep.mubr.f32.mxu0 0.0
  %4200 = vmatmul.mubr.f32.gmra.mrb[0].mxu0 %v3985
  %v4201 = vpop.f32.mrb[0].mxu0
  %v4202 = vadd.f32 0.0, %v4201
  %v4203 = vpop.f32.mrb[0].mxu0
  %4204 = vmatprep.mubr.f32.mxu0 0.0
  %4205 = vmatmul.mubr.f32.gmra.mrb[0].mxu0 %v3988
  %v4206 = vpop.f32.mrb[0].mxu0
  %v4207 = vadd.f32 0.0, %v4206
  %v4208 = vpop.f32.mrb[0].mxu0
  %4209 = vmatprep.mubr.f32.mxu0 0.0
  %4210 = vmatmul.mubr.f32.gmra.mrb[0].mxu0 %v3991
  %v4211 = vpop.f32.mrb[0].mxu0
  %v4212 = vadd.f32 0.0, %v4211
  %v4213 = vpop.f32.mrb[0].mxu0
  %4214 = vmatprep.mubr.f32.mxu0 0.0
  %4215 = vmatmul.mubr.f32.gmra.mrb[0].mxu0 %v3994
  %v4216 = vpop.f32.mrb[0].mxu0
  %v4217 = vadd.f32 0.0, %v4216
  %v4218 = vpop.f32.mrb[0].mxu0
  %4219 = vmatprep.mubr.f32.mxu0 0.0
  %4220 = vmatmul.mubr.f32.gmra.mrb[0].mxu0 %v3997
  %v4221 = vpop.f32.mrb[0].mxu0
  %v4222 = vadd.f32 0.0, %v4221
  %v4223 = vpop.f32.mrb[0].mxu0
  %4224 = vmatprep.mubr.f32.mxu0 0.0
  %4225 = vmatmul.mubr.f32.gmra.mrb[0].mxu0 %v4000
  %v4226 = vpop.f32.mrb[0].mxu0
  %v4227 = vadd.f32 0.0, %v4226
  %v4228 = vpop.f32.mrb[0].mxu0
  %4229 = vmatprep.mubr.f32.mxu0 0.0
  %4230 = vmatmul.mubr.f32.gmra.mrb[0].mxu0 %v4003
  %v4231 = vpop.f32.mrb[0].mxu0
  %v4232 = vadd.f32 0.0, %v4231
  %v4233 = vpop.f32.mrb[0].mxu0
  %4234 = vdwg.mxu0
  %v4235 = vadd.f32 %v3639, %v4072
  %v4236 = vadd.f32 %v3640, %v4077
  %v4237 = vadd.f32 %v3641, %v4082
  %v4238 = vadd.f32 %v3642, %v4087
  %v4239 = vadd.f32 %v3643, %v4092
  %v4240 = vadd.f32 %v3644, %v4097
  %v4241 = vadd.f32 %v3645, %v4102
  %v4242 = vadd.f32 %v3646, %v4107
  %v4243 = vadd.f32 %v3647, %v4112
  %v4244 = vadd.f32 %v3648, %v4117
  %v4245 = vadd.f32 %v3649, %v4122
  %v4246 = vadd.f32 %v3650, %v4127
  %v4247 = vadd.f32 %v3651, %v4132
  %v4248 = vadd.f32 %v3652, %v4137
  %v4249 = vadd.f32 %v3653, %v4142
  %v4250 = vadd.f32 %v3654, %v4147
  %v4251 = vadd.f32 %v3655, %v4152
  %v4252 = vadd.f32 %v3656, %v4157
  %v4253 = vadd.f32 %v3657, %v4162
  %v4254 = vadd.f32 %v3658, %v4167
  %v4255 = vadd.f32 %v3659, %v4172
  %v4256 = vadd.f32 %v3660, %v4177
  %v4257 = vadd.f32 %v3661, %v4182
  %v4258 = vadd.f32 %v3662, %v4187
  %v4259 = vadd.f32 %v3663, %v4192
  %v4260 = vadd.f32 %v3664, %v4197
  %v4261 = vadd.f32 %v3665, %v4202
  %v4262 = vadd.f32 %v3666, %v4207
  %v4263 = vadd.f32 %v3667, %v4212
  %v4264 = vadd.f32 %v3668, %v4217
  %v4265 = vadd.f32 %v3669, %v4222
  %v4266 = vadd.f32 %v3670, %v4227
  %v4267 = vadd.f32 %v3671, %v4232
  %4268 = vset.pattern.permute.xlu0 7
  %4269 = vperm.xlu0 %4268, %v89
  %v4270 = vpop.permute.xlu0 %4269
  %4272 = vset.pattern.permute.xlu0 7
  %4273 = vperm.xlu0 %4272, %v90
  %v4274 = vpop.permute.xlu0 %4273
  %4276 = vset.pattern.permute.xlu0 7
  %4277 = vperm.xlu0 %4276, %v91
  %v4278 = vpop.permute.xlu0 %4277
  %4280 = vset.pattern.permute.xlu0 7
  %4281 = vperm.xlu0 %4280, %v92
  %v4282 = vpop.permute.xlu0 %4281
  %4284 = vset.pattern.permute.xlu0 7
  %4285 = vperm.xlu0 %4284, %v93
  %v4286 = vpop.permute.xlu0 %4285
  %4288 = vset.pattern.permute.xlu0 7
  %4289 = vperm.xlu0 %4288, %v94
  %v4290 = vpop.permute.xlu0 %4289
  %4292 = vset.pattern.permute.xlu0 7
  %4293 = vperm.xlu0 %4292, %v95
  %v4294 = vpop.permute.xlu0 %4293
  %4296 = vset.pattern.permute.xlu0 7
  %4297 = vperm.xlu0 %4296, %v96
  %v4298 = vpop.permute.xlu0 %4297
  %4300 = vset.pattern.permute.xlu0 7
  %4301 = vperm.xlu0 %4300, %v97
  %v4302 = vpop.permute.xlu0 %4301
  %4304 = vset.pattern.permute.xlu0 7
  %4305 = vperm.xlu0 %4304, %v98
  %v4306 = vpop.permute.xlu0 %4305
  %4308 = vset.pattern.permute.xlu0 7
  %4309 = vperm.xlu0 %4308, %v99
  %v4310 = vpop.permute.xlu0 %4309
  %4312 = vset.pattern.permute.xlu0 7
  %4313 = vperm.xlu0 %4312, %v100
  %v4314 = vpop.permute.xlu0 %4313
  %4316 = vset.pattern.permute.xlu0 7
  %4317 = vperm.xlu0 %4316, %v101
  %v4318 = vpop.permute.xlu0 %4317
  %4320 = vset.pattern.permute.xlu0 7
  %4321 = vperm.xlu0 %4320, %v102
  %v4322 = vpop.permute.xlu0 %4321
  %4324 = vset.pattern.permute.xlu0 7
  %4325 = vperm.xlu0 %4324, %v103
  %v4326 = vpop.permute.xlu0 %4325
  %4328 = vset.pattern.permute.xlu0 7
  %4329 = vperm.xlu0 %4328, %v104
  %v4330 = vpop.permute.xlu0 %4329
  %4332 = vset.pattern.permute.xlu0 7
  %4333 = vperm.xlu0 %4332, %v105
  %v4334 = vpop.permute.xlu0 %4333
  %4336 = vset.pattern.permute.xlu0 7
  %4337 = vperm.xlu0 %4336, %v106
  %v4338 = vpop.permute.xlu0 %4337
  %4340 = vset.pattern.permute.xlu0 7
  %4341 = vperm.xlu0 %4340, %v107
  %v4342 = vpop.permute.xlu0 %4341
  %4344 = vset.pattern.permute.xlu0 7
  %4345 = vperm.xlu0 %4344, %v108
  %v4346 = vpop.permute.xlu0 %4345
  %4348 = vset.pattern.permute.xlu0 7
  %4349 = vperm.xlu0 %4348, %v109
  %v4350 = vpop.permute.xlu0 %4349
  %4352 = vset.pattern.permute.xlu0 7
  %4353 = vperm.xlu0 %4352, %v110
  %v4354 = vpop.permute.xlu0 %4353
  %4356 = vset.pattern.permute.xlu0 7
  %4357 = vperm.xlu0 %4356, %v111
  %v4358 = vpop.permute.xlu0 %4357
  %4360 = vset.pattern.permute.xlu0 7
  %4361 = vperm.xlu0 %4360, %v112
  %v4362 = vpop.permute.xlu0 %4361
  %4364 = vset.pattern.permute.xlu0 7
  %4365 = vperm.xlu0 %4364, %v113
  %v4366 = vpop.permute.xlu0 %4365
  %4368 = vset.pattern.permute.xlu0 7
  %4369 = vperm.xlu0 %4368, %v114
  %v4370 = vpop.permute.xlu0 %4369
  %4372 = vset.pattern.permute.xlu0 7
  %4373 = vperm.xlu0 %4372, %v115
  %v4374 = vpop.permute.xlu0 %4373
  %4376 = vset.pattern.permute.xlu0 7
  %4377 = vperm.xlu0 %4376, %v116
  %v4378 = vpop.permute.xlu0 %4377
  %4380 = vset.pattern.permute.xlu0 7
  %4381 = vperm.xlu0 %4380, %v117
  %v4382 = vpop.permute.xlu0 %4381
  %4384 = vset.pattern.permute.xlu0 7
  %4385 = vperm.xlu0 %4384, %v118
  %v4386 = vpop.permute.xlu0 %4385
  %4388 = vset.pattern.permute.xlu0 7
  %4389 = vperm.xlu0 %4388, %v119
  %v4390 = vpop.permute.xlu0 %4389
  %4392 = vset.pattern.permute.xlu0 7
  %4393 = vperm.xlu0 %4392, %v120
  %v4394 = vpop.permute.xlu0 %4393
  %4396 = vset.pattern.permute.xlu0 7
  %4397 = vperm.xlu0 %4396, %v121
  %v4398 = vpop.permute.xlu0 %4397
  %v4400 = vmul.f32 %v4270, %v290
  %v4401 = vmul.f32 %v4274, %v290
  %v4402 = vmul.f32 %v4278, %v290
  %v4403 = vmul.f32 %v4282, %v290
  %v4404 = vmul.f32 %v4286, %v290
  %v4405 = vmul.f32 %v4290, %v290
  %v4406 = vmul.f32 %v4294, %v290
  %v4407 = vmul.f32 %v4298, %v290
  %v4408 = vmul.f32 %v4302, %v290
  %v4409 = vmul.f32 %v4306, %v290
  %v4410 = vmul.f32 %v4310, %v290
  %v4411 = vmul.f32 %v4314, %v290
  %v4412 = vmul.f32 %v4318, %v290
  %v4413 = vmul.f32 %v4322, %v290
  %v4414 = vmul.f32 %v4326, %v290
  %v4415 = vmul.f32 %v4330, %v290
  %v4416 = vmul.f32 %v4334, %v290
  %v4417 = vmul.f32 %v4338, %v290
  %v4418 = vmul.f32 %v4342, %v290
  %v4419 = vmul.f32 %v4346, %v290
  %v4420 = vmul.f32 %v4350, %v290
  %v4421 = vmul.f32 %v4354, %v290
  %v4422 = vmul.f32 %v4358, %v290
  %v4423 = vmul.f32 %v4362, %v290
  %v4424 = vmul.f32 %v4366, %v290
  %v4425 = vmul.f32 %v4370, %v290
  %v4426 = vmul.f32 %v4374, %v290
  %v4427 = vmul.f32 %v4378, %v290
  %v4428 = vmul.f32 %v4382, %v290
  %v4429 = vmul.f32 %v4386, %v290
  %v4430 = vmul.f32 %v4390, %v290
  %v4431 = vmul.f32 %v4394, %v290
  %v4432 = vmul.f32 %v4398, %v290
  %v4433 = vadd.f32 %v4400, %v327
  %v4434 = vadd.f32 %v4401, %v327
  %v4435 = vadd.f32 %v4402, %v327
  %v4436 = vadd.f32 %v4403, %v327
  %v4437 = vadd.f32 %v4404, %v327
  %v4438 = vadd.f32 %v4405, %v327
  %v4439 = vadd.f32 %v4406, %v327
  %v4440 = vadd.f32 %v4407, %v327
  %v4441 = vadd.f32 %v4408, %v327
  %v4442 = vadd.f32 %v4409, %v327
  %v4443 = vadd.f32 %v4410, %v327
  %v4444 = vadd.f32 %v4411, %v327
  %v4445 = vadd.f32 %v4412, %v327
  %v4446 = vadd.f32 %v4413, %v327
  %v4447 = vadd.f32 %v4414, %v327
  %v4448 = vadd.f32 %v4415, %v327
  %v4449 = vadd.f32 %v4416, %v327
  %v4450 = vadd.f32 %v4417, %v327
  %v4451 = vadd.f32 %v4418, %v327
  %v4452 = vadd.f32 %v4419, %v327
  %v4453 = vadd.f32 %v4420, %v327
  %v4454 = vadd.f32 %v4421, %v327
  %v4455 = vadd.f32 %v4422, %v327
  %v4456 = vadd.f32 %v4423, %v327
  %v4457 = vadd.f32 %v4424, %v327
  %v4458 = vadd.f32 %v4425, %v327
  %v4459 = vadd.f32 %v4426, %v327
  %v4460 = vadd.f32 %v4427, %v327
  %v4461 = vadd.f32 %v4428, %v327
  %v4462 = vadd.f32 %v4429, %v327
  %v4463 = vadd.f32 %v4430, %v327
  %v4464 = vadd.f32 %v4431, %v327
  %v4465 = vadd.f32 %v4432, %v327
  %v4466 = vmax.f32 %v4433, 0.0
  %v4467 = vmax.f32 %v4434, 0.0
  %v4468 = vmax.f32 %v4435, 0.0
  %v4469 = vmax.f32 %v4436, 0.0
  %v4470 = vmax.f32 %v4437, 0.0
  %v4471 = vmax.f32 %v4438, 0.0
  %v4472 = vmax.f32 %v4439, 0.0
  %v4473 = vmax.f32 %v4440, 0.0
  %v4474 = vmax.f32 %v4441, 0.0
  %v4475 = vmax.f32 %v4442, 0.0
  %v4476 = vmax.f32 %v4443, 0.0
  %v4477 = vmax.f32 %v4444, 0.0
  %v4478 = vmax.f32 %v4445, 0.0
  %v4479 = vmax.f32 %v4446, 0.0
  %v4480 = vmax.f32 %v4447, 0.0
  %v4481 = vmax.f32 %v4448, 0.0
  %v4482 = vmax.f32 %v4449, 0.0
  %v4483 = vmax.f32 %v4450, 0.0
  %v4484 = vmax.f32 %v4451, 0.0
  %v4485 = vmax.f32 %v4452, 0.0
  %v4486 = vmax.f32 %v4453, 0.0
  %v4487 = vmax.f32 %v4454, 0.0
  %v4488 = vmax.f32 %v4455, 0.0
  %v4489 = vmax.f32 %v4456, 0.0
  %v4490 = vmax.f32 %v4457, 0.0
  %v4491 = vmax.f32 %v4458, 0.0
  %v4492 = vmax.f32 %v4459, 0.0
  %v4493 = vmax.f32 %v4460, 0.0
  %v4494 = vmax.f32 %v4461, 0.0
  %v4495 = vmax.f32 %v4462, 0.0
  %v4496 = vmax.f32 %v4463, 0.0
  %v4497 = vmax.f32 %v4464, 0.0
  %v4498 = vmax.f32 %v4465, 0.0
  %s4499 = scalar_lea.vmem %s3, 112
  %v4500 = vld [vmem:[%s4499] sm:$0xff]
  %v4501 = vld [vmem:[%s4499 + $0x8] sm:$0xff]
  %v4503 = vsel %vm30, %v4466, 0
  %v4506 = vsel %vm30, %v4467, 0
  %v4509 = vsel %vm30, %v4468, 0
  %v4512 = vsel %vm30, %v4469, 0
  %v4515 = vsel %vm30, %v4470, 0
  %v4518 = vsel %vm30, %v4471, 0
  %v4521 = vsel %vm30, %v4472, 0
  %v4524 = vsel %vm30, %v4473, 0
  %v4527 = vsel %vm30, %v4474, 0
  %v4530 = vsel %vm30, %v4475, 0
  %v4533 = vsel %vm30, %v4476, 0
  %v4536 = vsel %vm30, %v4477, 0
  %v4539 = vsel %vm30, %v4478, 0
  %v4542 = vsel %vm30, %v4479, 0
  %v4545 = vsel %vm30, %v4480, 0
  %v4548 = vsel %vm30, %v4481, 0
  %v4551 = vsel %vm30, %v4482, 0
  %v4554 = vsel %vm30, %v4483, 0
  %v4557 = vsel %vm30, %v4484, 0
  %v4560 = vsel %vm30, %v4485, 0
  %v4563 = vsel %vm30, %v4486, 0
  %v4566 = vsel %vm30, %v4487, 0
  %v4569 = vsel %vm30, %v4488, 0
  %v4572 = vsel %vm30, %v4489, 0
  %v4575 = vsel %vm30, %v4490, 0
  %v4578 = vsel %vm30, %v4491, 0
  %v4581 = vsel %vm30, %v4492, 0
  %v4584 = vsel %vm30, %v4493, 0
  %v4587 = vsel %vm30, %v4494, 0
  %v4590 = vsel %vm30, %v4495, 0
  %v4593 = vsel %vm30, %v4496, 0
  %v4596 = vsel %vm30, %v4497, 0
  %v4599 = vsel %vm30, %v4498, 0
  %4601 = vmatprep.subr.mxu0 0.0
  %4602 = vmatpush1.msra.mxu0 %v4500
  %4603 = vmatprep.subr.mxu0 0.0
  %4604 = vmatpush1.msra.mxu0 %v4501
  %4605 = vmatprep.subr.mxu0 0.0
  %4606 = vmatpush1.msra.mxu0 0.0
  %4607 = vmatprep.subr.mxu0 0.0
  %4608 = vmatpush1.msra.mxu0 0.0
  %4609 = vmatprep.subr.mxu0 0.0
  %4610 = vmatpush1.msra.mxu0 0.0
  %4611 = vmatprep.subr.mxu0 0.0
  %4612 = vmatpush1.msra.mxu0 0.0
  %4613 = vmatprep.subr.mxu0 0.0
  %4614 = vmatpush1.msra.mxu0 0.0
  %4615 = vmatprep.subr.mxu0 0.0
  %4616 = vmatpush1.msra.mxu0 0.0
  %4617 = vmatprep.subr.mxu0 0.0
  %4618 = vmatpush1.msra.mxu0 0.0
  %4619 = vmatprep.subr.mxu0 0.0
  %4620 = vmatpush1.msra.mxu0 0.0
  %4621 = vmatprep.subr.mxu0 0.0
  %4622 = vmatpush1.msra.mxu0 0.0
  %4623 = vmatprep.subr.mxu0 0.0
  %4624 = vmatpush1.msra.mxu0 0.0
  %4625 = vmatprep.subr.mxu0 0.0
  %4626 = vmatpush1.msra.mxu0 0.0
  %4627 = vmatprep.subr.mxu0 0.0
  %4628 = vmatpush1.msra.mxu0 0.0
  %4629 = vmatprep.subr.mxu0 0.0
  %4630 = vmatpush1.msra.mxu0 0.0
  %4631 = vmatprep.subr.mxu0 0.0
  %4632 = vmatpush1.msra.mxu0 0.0
  %4633 = vmatprep.subr.mxu0 0.0
  %4634 = vmatpush1.msra.mxu0 0.0
  %4635 = vmatprep.subr.mxu0 0.0
  %4636 = vmatpush1.msra.mxu0 0.0
  %4637 = vmatprep.subr.mxu0 0.0
  %4638 = vmatpush1.msra.mxu0 0.0
  %4639 = vmatprep.subr.mxu0 0.0
  %4640 = vmatpush1.msra.mxu0 0.0
  %4641 = vmatprep.subr.mxu0 0.0
  %4642 = vmatpush1.msra.mxu0 0.0
  %4643 = vmatprep.subr.mxu0 0.0
  %4644 = vmatpush1.msra.mxu0 0.0
  %4645 = vmatprep.subr.mxu0 0.0
  %4646 = vmatpush1.msra.mxu0 0.0
  %4647 = vmatprep.subr.mxu0 0.0
  %4648 = vmatpush1.msra.mxu0 0.0
  %4649 = vmatprep.subr.mxu0 0.0
  %4650 = vmatpush1.msra.mxu0 0.0
  %4651 = vmatprep.subr.mxu0 0.0
  %4652 = vmatpush1.msra.mxu0 0.0
  %4653 = vmatprep.subr.mxu0 0.0
  %4654 = vmatpush1.msra.mxu0 0.0
  %4655 = vmatprep.subr.mxu0 0.0
  %4656 = vmatpush1.msra.mxu0 0.0
  %4657 = vmatprep.subr.mxu0 0.0
  %4658 = vmatpush1.msra.mxu0 0.0
  %4659 = vmatprep.subr.mxu0 0.0
  %4660 = vmatpush1.msra.mxu0 0.0
  %4661 = vmatprep.subr.mxu0 0.0
  %4662 = vmatpush1.msra.mxu0 0.0
  %4663 = vmatprep.subr.mxu0 0.0
  %4664 = vmatpush1.msra.mxu0 0.0
  %4665 = vmatprep.mubr.f32.mxu0 0.0
  %4666 = vmatmul.mubr.f32.gmra.mrb[0].mxu0 %v4503
  %v4667 = vpop.f32.mrb[0].mxu0
  %v4668 = vadd.f32 0.0, %v4667
  %v4669 = vpop.f32.mrb[0].mxu0
  %4670 = vmatprep.mubr.f32.mxu0 0.0
  %4671 = vmatmul.mubr.f32.gmra.mrb[0].mxu0 %v4506
  %v4672 = vpop.f32.mrb[0].mxu0
  %v4673 = vadd.f32 0.0, %v4672
  %v4674 = vpop.f32.mrb[0].mxu0
  %4675 = vmatprep.mubr.f32.mxu0 0.0
  %4676 = vmatmul.mubr.f32.gmra.mrb[0].mxu0 %v4509
  %v4677 = vpop.f32.mrb[0].mxu0
  %v4678 = vadd.f32 0.0, %v4677
  %v4679 = vpop.f32.mrb[0].mxu0
  %4680 = vmatprep.mubr.f32.mxu0 0.0
  %4681 = vmatmul.mubr.f32.gmra.mrb[0].mxu0 %v4512
  %v4682 = vpop.f32.mrb[0].mxu0
  %v4683 = vadd.f32 0.0, %v4682
  %v4684 = vpop.f32.mrb[0].mxu0
  %4685 = vmatprep.mubr.f32.mxu0 0.0
  %4686 = vmatmul.mubr.f32.gmra.mrb[0].mxu0 %v4515
  %v4687 = vpop.f32.mrb[0].mxu0
  %v4688 = vadd.f32 0.0, %v4687
  %v4689 = vpop.f32.mrb[0].mxu0
  %4690 = vmatprep.mubr.f32.mxu0 0.0
  %4691 = vmatmul.mubr.f32.gmra.mrb[0].mxu0 %v4518
  %v4692 = vpop.f32.mrb[0].mxu0
  %v4693 = vadd.f32 0.0, %v4692
  %v4694 = vpop.f32.mrb[0].mxu0
  %4695 = vmatprep.mubr.f32.mxu0 0.0
  %4696 = vmatmul.mubr.f32.gmra.mrb[0].mxu0 %v4521
  %v4697 = vpop.f32.mrb[0].mxu0
  %v4698 = vadd.f32 0.0, %v4697
  %v4699 = vpop.f32.mrb[0].mxu0
  %4700 = vmatprep.mubr.f32.mxu0 0.0
  %4701 = vmatmul.mubr.f32.gmra.mrb[0].mxu0 %v4524
  %v4702 = vpop.f32.mrb[0].mxu0
  %v4703 = vadd.f32 0.0, %v4702
  %v4704 = vpop.f32.mrb[0].mxu0
  %4705 = vmatprep.mubr.f32.mxu0 0.0
  %4706 = vmatmul.mubr.f32.gmra.mrb[0].mxu0 %v4527
  %v4707 = vpop.f32.mrb[0].mxu0
  %v4708 = vadd.f32 0.0, %v4707
  %v4709 = vpop.f32.mrb[0].mxu0
  %4710 = vmatprep.mubr.f32.mxu0 0.0
  %4711 = vmatmul.mubr.f32.gmra.mrb[0].mxu0 %v4530
  %v4712 = vpop.f32.mrb[0].mxu0
  %v4713 = vadd.f32 0.0, %v4712
  %v4714 = vpop.f32.mrb[0].mxu0
  %4715 = vmatprep.mubr.f32.mxu0 0.0
  %4716 = vmatmul.mubr.f32.gmra.mrb[0].mxu0 %v4533
  %v4717 = vpop.f32.mrb[0].mxu0
  %v4718 = vadd.f32 0.0, %v4717
  %v4719 = vpop.f32.mrb[0].mxu0
  %4720 = vmatprep.mubr.f32.mxu0 0.0
  %4721 = vmatmul.mubr.f32.gmra.mrb[0].mxu0 %v4536
  %v4722 = vpop.f32.mrb[0].mxu0
  %v4723 = vadd.f32 0.0, %v4722
  %v4724 = vpop.f32.mrb[0].mxu0
  %4725 = vmatprep.mubr.f32.mxu0 0.0
  %4726 = vmatmul.mubr.f32.gmra.mrb[0].mxu0 %v4539
  %v4727 = vpop.f32.mrb[0].mxu0
  %v4728 = vadd.f32 0.0, %v4727
  %v4729 = vpop.f32.mrb[0].mxu0
  %4730 = vmatprep.mubr.f32.mxu0 0.0
  %4731 = vmatmul.mubr.f32.gmra.mrb[0].mxu0 %v4542
  %v4732 = vpop.f32.mrb[0].mxu0
  %v4733 = vadd.f32 0.0, %v4732
  %v4734 = vpop.f32.mrb[0].mxu0
  %4735 = vmatprep.mubr.f32.mxu0 0.0
  %4736 = vmatmul.mubr.f32.gmra.mrb[0].mxu0 %v4545
  %v4737 = vpop.f32.mrb[0].mxu0
  %v4738 = vadd.f32 0.0, %v4737
  %v4739 = vpop.f32.mrb[0].mxu0
  %4740 = vmatprep.mubr.f32.mxu0 0.0
  %4741 = vmatmul.mubr.f32.gmra.mrb[0].mxu0 %v4548
  %v4742 = vpop.f32.mrb[0].mxu0
  %v4743 = vadd.f32 0.0, %v4742
  %v4744 = vpop.f32.mrb[0].mxu0
  %4745 = vmatprep.mubr.f32.mxu0 0.0
  %4746 = vmatmul.mubr.f32.gmra.mrb[0].mxu0 %v4551
  %v4747 = vpop.f32.mrb[0].mxu0
  %v4748 = vadd.f32 0.0, %v4747
  %v4749 = vpop.f32.mrb[0].mxu0
  %4750 = vmatprep.mubr.f32.mxu0 0.0
  %4751 = vmatmul.mubr.f32.gmra.mrb[0].mxu0 %v4554
  %v4752 = vpop.f32.mrb[0].mxu0
  %v4753 = vadd.f32 0.0, %v4752
  %v4754 = vpop.f32.mrb[0].mxu0
  %4755 = vmatprep.mubr.f32.mxu0 0.0
  %4756 = vmatmul.mubr.f32.gmra.mrb[0].mxu0 %v4557
  %v4757 = vpop.f32.mrb[0].mxu0
  %v4758 = vadd.f32 0.0, %v4757
  %v4759 = vpop.f32.mrb[0].mxu0
  %4760 = vmatprep.mubr.f32.mxu0 0.0
  %4761 = vmatmul.mubr.f32.gmra.mrb[0].mxu0 %v4560
  %v4762 = vpop.f32.mrb[0].mxu0
  %v4763 = vadd.f32 0.0, %v4762
  %v4764 = vpop.f32.mrb[0].mxu0
  %4765 = vmatprep.mubr.f32.mxu0 0.0
  %4766 = vmatmul.mubr.f32.gmra.mrb[0].mxu0 %v4563
  %v4767 = vpop.f32.mrb[0].mxu0
  %v4768 = vadd.f32 0.0, %v4767
  %v4769 = vpop.f32.mrb[0].mxu0
  %4770 = vmatprep.mubr.f32.mxu0 0.0
  %4771 = vmatmul.mubr.f32.gmra.mrb[0].mxu0 %v4566
  %v4772 = vpop.f32.mrb[0].mxu0
  %v4773 = vadd.f32 0.0, %v4772
  %v4774 = vpop.f32.mrb[0].mxu0
  %4775 = vmatprep.mubr.f32.mxu0 0.0
  %4776 = vmatmul.mubr.f32.gmra.mrb[0].mxu0 %v4569
  %v4777 = vpop.f32.mrb[0].mxu0
  %v4778 = vadd.f32 0.0, %v4777
  %v4779 = vpop.f32.mrb[0].mxu0
  %4780 = vmatprep.mubr.f32.mxu0 0.0
  %4781 = vmatmul.mubr.f32.gmra.mrb[0].mxu0 %v4572
  %v4782 = vpop.f32.mrb[0].mxu0
  %v4783 = vadd.f32 0.0, %v4782
  %v4784 = vpop.f32.mrb[0].mxu0
  %4785 = vmatprep.mubr.f32.mxu0 0.0
  %4786 = vmatmul.mubr.f32.gmra.mrb[0].mxu0 %v4575
  %v4787 = vpop.f32.mrb[0].mxu0
  %v4788 = vadd.f32 0.0, %v4787
  %v4789 = vpop.f32.mrb[0].mxu0
  %4790 = vmatprep.mubr.f32.mxu0 0.0
  %4791 = vmatmul.mubr.f32.gmra.mrb[0].mxu0 %v4578
  %v4792 = vpop.f32.mrb[0].mxu0
  %v4793 = vadd.f32 0.0, %v4792
  %v4794 = vpop.f32.mrb[0].mxu0
  %4795 = vmatprep.mubr.f32.mxu0 0.0
  %4796 = vmatmul.mubr.f32.gmra.mrb[0].mxu0 %v4581
  %v4797 = vpop.f32.mrb[0].mxu0
  %v4798 = vadd.f32 0.0, %v4797
  %v4799 = vpop.f32.mrb[0].mxu0
  %4800 = vmatprep.mubr.f32.mxu0 0.0
  %4801 = vmatmul.mubr.f32.gmra.mrb[0].mxu0 %v4584
  %v4802 = vpop.f32.mrb[0].mxu0
  %v4803 = vadd.f32 0.0, %v4802
  %v4804 = vpop.f32.mrb[0].mxu0
  %4805 = vmatprep.mubr.f32.mxu0 0.0
  %4806 = vmatmul.mubr.f32.gmra.mrb[0].mxu0 %v4587
  %v4807 = vpop.f32.mrb[0].mxu0
  %v4808 = vadd.f32 0.0, %v4807
  %v4809 = vpop.f32.mrb[0].mxu0
  %4810 = vmatprep.mubr.f32.mxu0 0.0
  %4811 = vmatmul.mubr.f32.gmra.mrb[0].mxu0 %v4590
  %v4812 = vpop.f32.mrb[0].mxu0
  %v4813 = vadd.f32 0.0, %v4812
  %v4814 = vpop.f32.mrb[0].mxu0
  %4815 = vmatprep.mubr.f32.mxu0 0.0
  %4816 = vmatmul.mubr.f32.gmra.mrb[0].mxu0 %v4593
  %v4817 = vpop.f32.mrb[0].mxu0
  %v4818 = vadd.f32 0.0, %v4817
  %v4819 = vpop.f32.mrb[0].mxu0
  %4820 = vmatprep.mubr.f32.mxu0 0.0
  %4821 = vmatmul.mubr.f32.gmra.mrb[0].mxu0 %v4596
  %v4822 = vpop.f32.mrb[0].mxu0
  %v4823 = vadd.f32 0.0, %v4822
  %v4824 = vpop.f32.mrb[0].mxu0
  %4825 = vmatprep.mubr.f32.mxu0 0.0
  %4826 = vmatmul.mubr.f32.gmra.mrb[0].mxu0 %v4599
  %v4827 = vpop.f32.mrb[0].mxu0
  %v4828 = vadd.f32 0.0, %v4827
  %v4829 = vpop.f32.mrb[0].mxu0
  %4830 = vdwg.mxu0
  %v4831 = vadd.f32 %v4235, %v4668
  %v4832 = vadd.f32 %v4236, %v4673
  %v4833 = vadd.f32 %v4237, %v4678
  %v4834 = vadd.f32 %v4238, %v4683
  %v4835 = vadd.f32 %v4239, %v4688
  %v4836 = vadd.f32 %v4240, %v4693
  %v4837 = vadd.f32 %v4241, %v4698
  %v4838 = vadd.f32 %v4242, %v4703
  %v4839 = vadd.f32 %v4243, %v4708
  %v4840 = vadd.f32 %v4244, %v4713
  %v4841 = vadd.f32 %v4245, %v4718
  %v4842 = vadd.f32 %v4246, %v4723
  %v4843 = vadd.f32 %v4247, %v4728
  %v4844 = vadd.f32 %v4248, %v4733
  %v4845 = vadd.f32 %v4249, %v4738
  %v4846 = vadd.f32 %v4250, %v4743
  %v4847 = vadd.f32 %v4251, %v4748
  %v4848 = vadd.f32 %v4252, %v4753
  %v4849 = vadd.f32 %v4253, %v4758
  %v4850 = vadd.f32 %v4254, %v4763
  %v4851 = vadd.f32 %v4255, %v4768
  %v4852 = vadd.f32 %v4256, %v4773
  %v4853 = vadd.f32 %v4257, %v4778
  %v4854 = vadd.f32 %v4258, %v4783
  %v4855 = vadd.f32 %v4259, %v4788
  %v4856 = vadd.f32 %v4260, %v4793
  %v4857 = vadd.f32 %v4261, %v4798
  %v4858 = vadd.f32 %v4262, %v4803
  %v4859 = vadd.f32 %v4263, %v4808
  %v4860 = vadd.f32 %v4264, %v4813
  %v4861 = vadd.f32 %v4265, %v4818
  %v4862 = vadd.f32 %v4266, %v4823
  %v4863 = vadd.f32 %v4267, %v4828
  %4864 = vset.pattern.permute.xlu0 8
  %4865 = vperm.xlu0 %4864, %v89
  %v4866 = vpop.permute.xlu0 %4865
  %4868 = vset.pattern.permute.xlu0 8
  %4869 = vperm.xlu0 %4868, %v90
  %v4870 = vpop.permute.xlu0 %4869
  %4872 = vset.pattern.permute.xlu0 8
  %4873 = vperm.xlu0 %4872, %v91
  %v4874 = vpop.permute.xlu0 %4873
  %4876 = vset.pattern.permute.xlu0 8
  %4877 = vperm.xlu0 %4876, %v92
  %v4878 = vpop.permute.xlu0 %4877
  %4880 = vset.pattern.permute.xlu0 8
  %4881 = vperm.xlu0 %4880, %v93
  %v4882 = vpop.permute.xlu0 %4881
  %4884 = vset.pattern.permute.xlu0 8
  %4885 = vperm.xlu0 %4884, %v94
  %v4886 = vpop.permute.xlu0 %4885
  %4888 = vset.pattern.permute.xlu0 8
  %4889 = vperm.xlu0 %4888, %v95
  %v4890 = vpop.permute.xlu0 %4889
  %4892 = vset.pattern.permute.xlu0 8
  %4893 = vperm.xlu0 %4892, %v96
  %v4894 = vpop.permute.xlu0 %4893
  %4896 = vset.pattern.permute.xlu0 8
  %4897 = vperm.xlu0 %4896, %v97
  %v4898 = vpop.permute.xlu0 %4897
  %4900 = vset.pattern.permute.xlu0 8
  %4901 = vperm.xlu0 %4900, %v98
  %v4902 = vpop.permute.xlu0 %4901
  %4904 = vset.pattern.permute.xlu0 8
  %4905 = vperm.xlu0 %4904, %v99
  %v4906 = vpop.permute.xlu0 %4905
  %4908 = vset.pattern.permute.xlu0 8
  %4909 = vperm.xlu0 %4908, %v100
  %v4910 = vpop.permute.xlu0 %4909
  %4912 = vset.pattern.permute.xlu0 8
  %4913 = vperm.xlu0 %4912, %v101
  %v4914 = vpop.permute.xlu0 %4913
  %4916 = vset.pattern.permute.xlu0 8
  %4917 = vperm.xlu0 %4916, %v102
  %v4918 = vpop.permute.xlu0 %4917
  %4920 = vset.pattern.permute.xlu0 8
  %4921 = vperm.xlu0 %4920, %v103
  %v4922 = vpop.permute.xlu0 %4921
  %4924 = vset.pattern.permute.xlu0 8
  %4925 = vperm.xlu0 %4924, %v104
  %v4926 = vpop.permute.xlu0 %4925
  %4928 = vset.pattern.permute.xlu0 8
  %4929 = vperm.xlu0 %4928, %v105
  %v4930 = vpop.permute.xlu0 %4929
  %4932 = vset.pattern.permute.xlu0 8
  %4933 = vperm.xlu0 %4932, %v106
  %v4934 = vpop.permute.xlu0 %4933
  %4936 = vset.pattern.permute.xlu0 8
  %4937 = vperm.xlu0 %4936, %v107
  %v4938 = vpop.permute.xlu0 %4937
  %4940 = vset.pattern.permute.xlu0 8
  %4941 = vperm.xlu0 %4940, %v108
  %v4942 = vpop.permute.xlu0 %4941
  %4944 = vset.pattern.permute.xlu0 8
  %4945 = vperm.xlu0 %4944, %v109
  %v4946 = vpop.permute.xlu0 %4945
  %4948 = vset.pattern.permute.xlu0 8
  %4949 = vperm.xlu0 %4948, %v110
  %v4950 = vpop.permute.xlu0 %4949
  %4952 = vset.pattern.permute.xlu0 8
  %4953 = vperm.xlu0 %4952, %v111
  %v4954 = vpop.permute.xlu0 %4953
  %4956 = vset.pattern.permute.xlu0 8
  %4957 = vperm.xlu0 %4956, %v112
  %v4958 = vpop.permute.xlu0 %4957
  %4960 = vset.pattern.permute.xlu0 8
  %4961 = vperm.xlu0 %4960, %v113
  %v4962 = vpop.permute.xlu0 %4961
  %4964 = vset.pattern.permute.xlu0 8
  %4965 = vperm.xlu0 %4964, %v114
  %v4966 = vpop.permute.xlu0 %4965
  %4968 = vset.pattern.permute.xlu0 8
  %4969 = vperm.xlu0 %4968, %v115
  %v4970 = vpop.permute.xlu0 %4969
  %4972 = vset.pattern.permute.xlu0 8
  %4973 = vperm.xlu0 %4972, %v116
  %v4974 = vpop.permute.xlu0 %4973
  %4976 = vset.pattern.permute.xlu0 8
  %4977 = vperm.xlu0 %4976, %v117
  %v4978 = vpop.permute.xlu0 %4977
  %4980 = vset.pattern.permute.xlu0 8
  %4981 = vperm.xlu0 %4980, %v118
  %v4982 = vpop.permute.xlu0 %4981
  %4984 = vset.pattern.permute.xlu0 8
  %4985 = vperm.xlu0 %4984, %v119
  %v4986 = vpop.permute.xlu0 %4985
  %4988 = vset.pattern.permute.xlu0 8
  %4989 = vperm.xlu0 %4988, %v120
  %v4990 = vpop.permute.xlu0 %4989
  %4992 = vset.pattern.permute.xlu0 8
  %4993 = vperm.xlu0 %4992, %v121
  %v4994 = vpop.permute.xlu0 %4993
  %v4996 = vmul.f32 %v4866, %v290
  %v4997 = vmul.f32 %v4870, %v290
  %v4998 = vmul.f32 %v4874, %v290
  %v4999 = vmul.f32 %v4878, %v290
  %v5000 = vmul.f32 %v4882, %v290
  %v5001 = vmul.f32 %v4886, %v290
  %v5002 = vmul.f32 %v4890, %v290
  %v5003 = vmul.f32 %v4894, %v290
  %v5004 = vmul.f32 %v4898, %v290
  %v5005 = vmul.f32 %v4902, %v290
  %v5006 = vmul.f32 %v4906, %v290
  %v5007 = vmul.f32 %v4910, %v290
  %v5008 = vmul.f32 %v4914, %v290
  %v5009 = vmul.f32 %v4918, %v290
  %v5010 = vmul.f32 %v4922, %v290
  %v5011 = vmul.f32 %v4926, %v290
  %v5012 = vmul.f32 %v4930, %v290
  %v5013 = vmul.f32 %v4934, %v290
  %v5014 = vmul.f32 %v4938, %v290
  %v5015 = vmul.f32 %v4942, %v290
  %v5016 = vmul.f32 %v4946, %v290
  %v5017 = vmul.f32 %v4950, %v290
  %v5018 = vmul.f32 %v4954, %v290
  %v5019 = vmul.f32 %v4958, %v290
  %v5020 = vmul.f32 %v4962, %v290
  %v5021 = vmul.f32 %v4966, %v290
  %v5022 = vmul.f32 %v4970, %v290
  %v5023 = vmul.f32 %v4974, %v290
  %v5024 = vmul.f32 %v4978, %v290
  %v5025 = vmul.f32 %v4982, %v290
  %v5026 = vmul.f32 %v4986, %v290
  %v5027 = vmul.f32 %v4990, %v290
  %v5028 = vmul.f32 %v4994, %v290
  %v5029 = vadd.f32 %v4996, %v327
  %v5030 = vadd.f32 %v4997, %v327
  %v5031 = vadd.f32 %v4998, %v327
  %v5032 = vadd.f32 %v4999, %v327
  %v5033 = vadd.f32 %v5000, %v327
  %v5034 = vadd.f32 %v5001, %v327
  %v5035 = vadd.f32 %v5002, %v327
  %v5036 = vadd.f32 %v5003, %v327
  %v5037 = vadd.f32 %v5004, %v327
  %v5038 = vadd.f32 %v5005, %v327
  %v5039 = vadd.f32 %v5006, %v327
  %v5040 = vadd.f32 %v5007, %v327
  %v5041 = vadd.f32 %v5008, %v327
  %v5042 = vadd.f32 %v5009, %v327
  %v5043 = vadd.f32 %v5010, %v327
  %v5044 = vadd.f32 %v5011, %v327
  %v5045 = vadd.f32 %v5012, %v327
  %v5046 = vadd.f32 %v5013, %v327
  %v5047 = vadd.f32 %v5014, %v327
  %v5048 = vadd.f32 %v5015, %v327
  %v5049 = vadd.f32 %v5016, %v327
  %v5050 = vadd.f32 %v5017, %v327
  %v5051 = vadd.f32 %v5018, %v327
  %v5052 = vadd.f32 %v5019, %v327
  %v5053 = vadd.f32 %v5020, %v327
  %v5054 = vadd.f32 %v5021, %v327
  %v5055 = vadd.f32 %v5022, %v327
  %v5056 = vadd.f32 %v5023, %v327
  %v5057 = vadd.f32 %v5024, %v327
  %v5058 = vadd.f32 %v5025, %v327
  %v5059 = vadd.f32 %v5026, %v327
  %v5060 = vadd.f32 %v5027, %v327
  %v5061 = vadd.f32 %v5028, %v327
  %v5062 = vmax.f32 %v5029, 0.0
  %v5063 = vmax.f32 %v5030, 0.0
  %v5064 = vmax.f32 %v5031, 0.0
  %v5065 = vmax.f32 %v5032, 0.0
  %v5066 = vmax.f32 %v5033, 0.0
  %v5067 = vmax.f32 %v5034, 0.0
  %v5068 = vmax.f32 %v5035, 0.0
  %v5069 = vmax.f32 %v5036, 0.0
  %v5070 = vmax.f32 %v5037, 0.0
  %v5071 = vmax.f32 %v5038, 0.0
  %v5072 = vmax.f32 %v5039, 0.0
  %v5073 = vmax.f32 %v5040, 0.0
  %v5074 = vmax.f32 %v5041, 0.0
  %v5075 = vmax.f32 %v5042, 0.0
  %v5076 = vmax.f32 %v5043, 0.0
  %v5077 = vmax.f32 %v5044, 0.0
  %v5078 = vmax.f32 %v5045, 0.0
  %v5079 = vmax.f32 %v5046, 0.0
  %v5080 = vmax.f32 %v5047, 0.0
  %v5081 = vmax.f32 %v5048, 0.0
  %v5082 = vmax.f32 %v5049, 0.0
  %v5083 = vmax.f32 %v5050, 0.0
  %v5084 = vmax.f32 %v5051, 0.0
  %v5085 = vmax.f32 %v5052, 0.0
  %v5086 = vmax.f32 %v5053, 0.0
  %v5087 = vmax.f32 %v5054, 0.0
  %v5088 = vmax.f32 %v5055, 0.0
  %v5089 = vmax.f32 %v5056, 0.0
  %v5090 = vmax.f32 %v5057, 0.0
  %v5091 = vmax.f32 %v5058, 0.0
  %v5092 = vmax.f32 %v5059, 0.0
  %v5093 = vmax.f32 %v5060, 0.0
  %v5094 = vmax.f32 %v5061, 0.0
  %s5095 = scalar_lea.vmem %s3, 128
  %v5096 = vld [vmem:[%s5095] sm:$0xff]
  %v5097 = vld [vmem:[%s5095 + $0x8] sm:$0xff]
  %v5099 = vsel %vm30, %v5062, 0
  %v5102 = vsel %vm30, %v5063, 0
  %v5105 = vsel %vm30, %v5064, 0
  %v5108 = vsel %vm30, %v5065, 0
  %v5111 = vsel %vm30, %v5066, 0
  %v5114 = vsel %vm30, %v5067, 0
  %v5117 = vsel %vm30, %v5068, 0
  %v5120 = vsel %vm30, %v5069, 0
  %v5123 = vsel %vm30, %v5070, 0
  %v5126 = vsel %vm30, %v5071, 0
  %v5129 = vsel %vm30, %v5072, 0
  %v5132 = vsel %vm30, %v5073, 0
  %v5135 = vsel %vm30, %v5074, 0
  %v5138 = vsel %vm30, %v5075, 0
  %v5141 = vsel %vm30, %v5076, 0
  %v5144 = vsel %vm30, %v5077, 0
  %v5147 = vsel %vm30, %v5078, 0
  %v5150 = vsel %vm30, %v5079, 0
  %v5153 = vsel %vm30, %v5080, 0
  %v5156 = vsel %vm30, %v5081, 0
  %v5159 = vsel %vm30, %v5082, 0
  %v5162 = vsel %vm30, %v5083, 0
  %v5165 = vsel %vm30, %v5084, 0
  %v5168 = vsel %vm30, %v5085, 0
  %v5171 = vsel %vm30, %v5086, 0
  %v5174 = vsel %vm30, %v5087, 0
  %v5177 = vsel %vm30, %v5088, 0
  %v5180 = vsel %vm30, %v5089, 0
  %v5183 = vsel %vm30, %v5090, 0
  %v5186 = vsel %vm30, %v5091, 0
  %v5189 = vsel %vm30, %v5092, 0
  %v5192 = vsel %vm30, %v5093, 0
  %v5195 = vsel %vm30, %v5094, 0
  %5197 = vmatprep.subr.mxu0 0.0
  %5198 = vmatpush1.msra.mxu0 %v5096
  %5199 = vmatprep.subr.mxu0 0.0
  %5200 = vmatpush1.msra.mxu0 %v5097
  %5201 = vmatprep.subr.mxu0 0.0
  %5202 = vmatpush1.msra.mxu0 0.0
  %5203 = vmatprep.subr.mxu0 0.0
  %5204 = vmatpush1.msra.mxu0 0.0
  %5205 = vmatprep.subr.mxu0 0.0
  %5206 = vmatpush1.msra.mxu0 0.0
  %5207 = vmatprep.subr.mxu0 0.0
  %5208 = vmatpush1.msra.mxu0 0.0
  %5209 = vmatprep.subr.mxu0 0.0
  %5210 = vmatpush1.msra.mxu0 0.0
  %5211 = vmatprep.subr.mxu0 0.0
  %5212 = vmatpush1.msra.mxu0 0.0
  %5213 = vmatprep.subr.mxu0 0.0
  %5214 = vmatpush1.msra.mxu0 0.0
  %5215 = vmatprep.subr.mxu0 0.0
  %5216 = vmatpush1.msra.mxu0 0.0
  %5217 = vmatprep.subr.mxu0 0.0
  %5218 = vmatpush1.msra.mxu0 0.0
  %5219 = vmatprep.subr.mxu0 0.0
  %5220 = vmatpush1.msra.mxu0 0.0
  %5221 = vmatprep.subr.mxu0 0.0
  %5222 = vmatpush1.msra.mxu0 0.0
  %5223 = vmatprep.subr.mxu0 0.0
  %5224 = vmatpush1.msra.mxu0 0.0
  %5225 = vmatprep.subr.mxu0 0.0
  %5226 = vmatpush1.msra.mxu0 0.0
  %5227 = vmatprep.subr.mxu0 0.0
  %5228 = vmatpush1.msra.mxu0 0.0
  %5229 = vmatprep.subr.mxu0 0.0
  %5230 = vmatpush1.msra.mxu0 0.0
  %5231 = vmatprep.subr.mxu0 0.0
  %5232 = vmatpush1.msra.mxu0 0.0
  %5233 = vmatprep.subr.mxu0 0.0
  %5234 = vmatpush1.msra.mxu0 0.0
  %5235 = vmatprep.subr.mxu0 0.0
  %5236 = vmatpush1.msra.mxu0 0.0
  %5237 = vmatprep.subr.mxu0 0.0
  %5238 = vmatpush1.msra.mxu0 0.0
  %5239 = vmatprep.subr.mxu0 0.0
  %5240 = vmatpush1.msra.mxu0 0.0
  %5241 = vmatprep.subr.mxu0 0.0
  %5242 = vmatpush1.msra.mxu0 0.0
  %5243 = vmatprep.subr.mxu0 0.0
  %5244 = vmatpush1.msra.mxu0 0.0
  %5245 = vmatprep.subr.mxu0 0.0
  %5246 = vmatpush1.msra.mxu0 0.0
  %5247 = vmatprep.subr.mxu0 0.0
  %5248 = vmatpush1.msra.mxu0 0.0
  %5249 = vmatprep.subr.mxu0 0.0
  %5250 = vmatpush1.msra.mxu0 0.0
  %5251 = vmatprep.subr.mxu0 0.0
  %5252 = vmatpush1.msra.mxu0 0.0
  %5253 = vmatprep.subr.mxu0 0.0
  %5254 = vmatpush1.msra.mxu0 0.0
  %5255 = vmatprep.subr.mxu0 0.0
  %5256 = vmatpush1.msra.mxu0 0.0
  %5257 = vmatprep.subr.mxu0 0.0
  %5258 = vmatpush1.msra.mxu0 0.0
  %5259 = vmatprep.subr.mxu0 0.0
  %5260 = vmatpush1.msra.mxu0 0.0
  %5261 = vmatprep.mubr.f32.mxu0 0.0
  %5262 = vmatmul.mubr.f32.gmra.mrb[0].mxu0 %v5099
  %v5263 = vpop.f32.mrb[0].mxu0
  %v5264 = vadd.f32 0.0, %v5263
  %v5265 = vpop.f32.mrb[0].mxu0
  %5266 = vmatprep.mubr.f32.mxu0 0.0
  %5267 = vmatmul.mubr.f32.gmra.mrb[0].mxu0 %v5102
  %v5268 = vpop.f32.mrb[0].mxu0
  %v5269 = vadd.f32 0.0, %v5268
  %v5270 = vpop.f32.mrb[0].mxu0
  %5271 = vmatprep.mubr.f32.mxu0 0.0
  %5272 = vmatmul.mubr.f32.gmra.mrb[0].mxu0 %v5105
  %v5273 = vpop.f32.mrb[0].mxu0
  %v5274 = vadd.f32 0.0, %v5273
  %v5275 = vpop.f32.mrb[0].mxu0
  %5276 = vmatprep.mubr.f32.mxu0 0.0
  %5277 = vmatmul.mubr.f32.gmra.mrb[0].mxu0 %v5108
  %v5278 = vpop.f32.mrb[0].mxu0
  %v5279 = vadd.f32 0.0, %v5278
  %v5280 = vpop.f32.mrb[0].mxu0
  %5281 = vmatprep.mubr.f32.mxu0 0.0
  %5282 = vmatmul.mubr.f32.gmra.mrb[0].mxu0 %v5111
  %v5283 = vpop.f32.mrb[0].mxu0
  %v5284 = vadd.f32 0.0, %v5283
  %v5285 = vpop.f32.mrb[0].mxu0
  %5286 = vmatprep.mubr.f32.mxu0 0.0
  %5287 = vmatmul.mubr.f32.gmra.mrb[0].mxu0 %v5114
  %v5288 = vpop.f32.mrb[0].mxu0
  %v5289 = vadd.f32 0.0, %v5288
  %v5290 = vpop.f32.mrb[0].mxu0
  %5291 = vmatprep.mubr.f32.mxu0 0.0
  %5292 = vmatmul.mubr.f32.gmra.mrb[0].mxu0 %v5117
  %v5293 = vpop.f32.mrb[0].mxu0
  %v5294 = vadd.f32 0.0, %v5293
  %v5295 = vpop.f32.mrb[0].mxu0
  %5296 = vmatprep.mubr.f32.mxu0 0.0
  %5297 = vmatmul.mubr.f32.gmra.mrb[0].mxu0 %v5120
  %v5298 = vpop.f32.mrb[0].mxu0
  %v5299 = vadd.f32 0.0, %v5298
  %v5300 = vpop.f32.mrb[0].mxu0
  %5301 = vmatprep.mubr.f32.mxu0 0.0
  %5302 = vmatmul.mubr.f32.gmra.mrb[0].mxu0 %v5123
  %v5303 = vpop.f32.mrb[0].mxu0
  %v5304 = vadd.f32 0.0, %v5303
  %v5305 = vpop.f32.mrb[0].mxu0
  %5306 = vmatprep.mubr.f32.mxu0 0.0
  %5307 = vmatmul.mubr.f32.gmra.mrb[0].mxu0 %v5126
  %v5308 = vpop.f32.mrb[0].mxu0
  %v5309 = vadd.f32 0.0, %v5308
  %v5310 = vpop.f32.mrb[0].mxu0
  %5311 = vmatprep.mubr.f32.mxu0 0.0
  %5312 = vmatmul.mubr.f32.gmra.mrb[0].mxu0 %v5129
  %v5313 = vpop.f32.mrb[0].mxu0
  %v5314 = vadd.f32 0.0, %v5313
  %v5315 = vpop.f32.mrb[0].mxu0
  %5316 = vmatprep.mubr.f32.mxu0 0.0
  %5317 = vmatmul.mubr.f32.gmra.mrb[0].mxu0 %v5132
  %v5318 = vpop.f32.mrb[0].mxu0
  %v5319 = vadd.f32 0.0, %v5318
  %v5320 = vpop.f32.mrb[0].mxu0
  %5321 = vmatprep.mubr.f32.mxu0 0.0
  %5322 = vmatmul.mubr.f32.gmra.mrb[0].mxu0 %v5135
  %v5323 = vpop.f32.mrb[0].mxu0
  %v5324 = vadd.f32 0.0, %v5323
  %v5325 = vpop.f32.mrb[0].mxu0
  %5326 = vmatprep.mubr.f32.mxu0 0.0
  %5327 = vmatmul.mubr.f32.gmra.mrb[0].mxu0 %v5138
  %v5328 = vpop.f32.mrb[0].mxu0
  %v5329 = vadd.f32 0.0, %v5328
  %v5330 = vpop.f32.mrb[0].mxu0
  %5331 = vmatprep.mubr.f32.mxu0 0.0
  %5332 = vmatmul.mubr.f32.gmra.mrb[0].mxu0 %v5141
  %v5333 = vpop.f32.mrb[0].mxu0
  %v5334 = vadd.f32 0.0, %v5333
  %v5335 = vpop.f32.mrb[0].mxu0
  %5336 = vmatprep.mubr.f32.mxu0 0.0
  %5337 = vmatmul.mubr.f32.gmra.mrb[0].mxu0 %v5144
  %v5338 = vpop.f32.mrb[0].mxu0
  %v5339 = vadd.f32 0.0, %v5338
  %v5340 = vpop.f32.mrb[0].mxu0
  %5341 = vmatprep.mubr.f32.mxu0 0.0
  %5342 = vmatmul.mubr.f32.gmra.mrb[0].mxu0 %v5147
  %v5343 = vpop.f32.mrb[0].mxu0
  %v5344 = vadd.f32 0.0, %v5343
  %v5345 = vpop.f32.mrb[0].mxu0
  %5346 = vmatprep.mubr.f32.mxu0 0.0
  %5347 = vmatmul.mubr.f32.gmra.mrb[0].mxu0 %v5150
  %v5348 = vpop.f32.mrb[0].mxu0
  %v5349 = vadd.f32 0.0, %v5348
  %v5350 = vpop.f32.mrb[0].mxu0
  %5351 = vmatprep.mubr.f32.mxu0 0.0
  %5352 = vmatmul.mubr.f32.gmra.mrb[0].mxu0 %v5153
  %v5353 = vpop.f32.mrb[0].mxu0
  %v5354 = vadd.f32 0.0, %v5353
  %v5355 = vpop.f32.mrb[0].mxu0
  %5356 = vmatprep.mubr.f32.mxu0 0.0
  %5357 = vmatmul.mubr.f32.gmra.mrb[0].mxu0 %v5156
  %v5358 = vpop.f32.mrb[0].mxu0
  %v5359 = vadd.f32 0.0, %v5358
  %v5360 = vpop.f32.mrb[0].mxu0
  %5361 = vmatprep.mubr.f32.mxu0 0.0
  %5362 = vmatmul.mubr.f32.gmra.mrb[0].mxu0 %v5159
  %v5363 = vpop.f32.mrb[0].mxu0
  %v5364 = vadd.f32 0.0, %v5363
  %v5365 = vpop.f32.mrb[0].mxu0
  %5366 = vmatprep.mubr.f32.mxu0 0.0
  %5367 = vmatmul.mubr.f32.gmra.mrb[0].mxu0 %v5162
  %v5368 = vpop.f32.mrb[0].mxu0
  %v5369 = vadd.f32 0.0, %v5368
  %v5370 = vpop.f32.mrb[0].mxu0
  %5371 = vmatprep.mubr.f32.mxu0 0.0
  %5372 = vmatmul.mubr.f32.gmra.mrb[0].mxu0 %v5165
  %v5373 = vpop.f32.mrb[0].mxu0
  %v5374 = vadd.f32 0.0, %v5373
  %v5375 = vpop.f32.mrb[0].mxu0
  %5376 = vmatprep.mubr.f32.mxu0 0.0
  %5377 = vmatmul.mubr.f32.gmra.mrb[0].mxu0 %v5168
  %v5378 = vpop.f32.mrb[0].mxu0
  %v5379 = vadd.f32 0.0, %v5378
  %v5380 = vpop.f32.mrb[0].mxu0
  %5381 = vmatprep.mubr.f32.mxu0 0.0
  %5382 = vmatmul.mubr.f32.gmra.mrb[0].mxu0 %v5171
  %v5383 = vpop.f32.mrb[0].mxu0
  %v5384 = vadd.f32 0.0, %v5383
  %v5385 = vpop.f32.mrb[0].mxu0
  %5386 = vmatprep.mubr.f32.mxu0 0.0
  %5387 = vmatmul.mubr.f32.gmra.mrb[0].mxu0 %v5174
  %v5388 = vpop.f32.mrb[0].mxu0
  %v5389 = vadd.f32 0.0, %v5388
  %v5390 = vpop.f32.mrb[0].mxu0
  %5391 = vmatprep.mubr.f32.mxu0 0.0
  %5392 = vmatmul.mubr.f32.gmra.mrb[0].mxu0 %v5177
  %v5393 = vpop.f32.mrb[0].mxu0
  %v5394 = vadd.f32 0.0, %v5393
  %v5395 = vpop.f32.mrb[0].mxu0
  %5396 = vmatprep.mubr.f32.mxu0 0.0
  %5397 = vmatmul.mubr.f32.gmra.mrb[0].mxu0 %v5180
  %v5398 = vpop.f32.mrb[0].mxu0
  %v5399 = vadd.f32 0.0, %v5398
  %v5400 = vpop.f32.mrb[0].mxu0
  %5401 = vmatprep.mubr.f32.mxu0 0.0
  %5402 = vmatmul.mubr.f32.gmra.mrb[0].mxu0 %v5183
  %v5403 = vpop.f32.mrb[0].mxu0
  %v5404 = vadd.f32 0.0, %v5403
  %v5405 = vpop.f32.mrb[0].mxu0
  %5406 = vmatprep.mubr.f32.mxu0 0.0
  %5407 = vmatmul.mubr.f32.gmra.mrb[0].mxu0 %v5186
  %v5408 = vpop.f32.mrb[0].mxu0
  %v5409 = vadd.f32 0.0, %v5408
  %v5410 = vpop.f32.mrb[0].mxu0
  %5411 = vmatprep.mubr.f32.mxu0 0.0
  %5412 = vmatmul.mubr.f32.gmra.mrb[0].mxu0 %v5189
  %v5413 = vpop.f32.mrb[0].mxu0
  %v5414 = vadd.f32 0.0, %v5413
  %v5415 = vpop.f32.mrb[0].mxu0
  %5416 = vmatprep.mubr.f32.mxu0 0.0
  %5417 = vmatmul.mubr.f32.gmra.mrb[0].mxu0 %v5192
  %v5418 = vpop.f32.mrb[0].mxu0
  %v5419 = vadd.f32 0.0, %v5418
  %v5420 = vpop.f32.mrb[0].mxu0
  %5421 = vmatprep.mubr.f32.mxu0 0.0
  %5422 = vmatmul.mubr.f32.gmra.mrb[0].mxu0 %v5195
  %v5423 = vpop.f32.mrb[0].mxu0
  %v5424 = vadd.f32 0.0, %v5423
  %v5425 = vpop.f32.mrb[0].mxu0
  %5426 = vdwg.mxu0
  %v5427 = vadd.f32 %v4831, %v5264
  %v5428 = vadd.f32 %v4832, %v5269
  %v5429 = vadd.f32 %v4833, %v5274
  %v5430 = vadd.f32 %v4834, %v5279
  %v5431 = vadd.f32 %v4835, %v5284
  %v5432 = vadd.f32 %v4836, %v5289
  %v5433 = vadd.f32 %v4837, %v5294
  %v5434 = vadd.f32 %v4838, %v5299
  %v5435 = vadd.f32 %v4839, %v5304
  %v5436 = vadd.f32 %v4840, %v5309
  %v5437 = vadd.f32 %v4841, %v5314
  %v5438 = vadd.f32 %v4842, %v5319
  %v5439 = vadd.f32 %v4843, %v5324
  %v5440 = vadd.f32 %v4844, %v5329
  %v5441 = vadd.f32 %v4845, %v5334
  %v5442 = vadd.f32 %v4846, %v5339
  %v5443 = vadd.f32 %v4847, %v5344
  %v5444 = vadd.f32 %v4848, %v5349
  %v5445 = vadd.f32 %v4849, %v5354
  %v5446 = vadd.f32 %v4850, %v5359
  %v5447 = vadd.f32 %v4851, %v5364
  %v5448 = vadd.f32 %v4852, %v5369
  %v5449 = vadd.f32 %v4853, %v5374
  %v5450 = vadd.f32 %v4854, %v5379
  %v5451 = vadd.f32 %v4855, %v5384
  %v5452 = vadd.f32 %v4856, %v5389
  %v5453 = vadd.f32 %v4857, %v5394
  %v5454 = vadd.f32 %v4858, %v5399
  %v5455 = vadd.f32 %v4859, %v5404
  %v5456 = vadd.f32 %v4860, %v5409
  %v5457 = vadd.f32 %v4861, %v5414
  %v5458 = vadd.f32 %v4862, %v5419
  %v5459 = vadd.f32 %v4863, %v5424
  %vm5460 = vcmask 261120
  %v5461 = vsel %vm5460, %v5427, 0.0
  %v5462 = vsel %vm5460, %v5428, 0.0
  %v5463 = vadd.f32 %v5461, %v5462
  %v5464 = vsel %vm5460, %v5429, 0.0
  %v5465 = vadd.f32 %v5463, %v5464
  %v5466 = vsel %vm5460, %v5430, 0.0
  %v5467 = vadd.f32 %v5465, %v5466
  %v5468 = vsel %vm5460, %v5431, 0.0
  %v5469 = vadd.f32 %v5467, %v5468
  %v5470 = vsel %vm5460, %v5432, 0.0
  %v5471 = vadd.f32 %v5469, %v5470
  %v5472 = vsel %vm5460, %v5433, 0.0
  %v5473 = vadd.f32 %v5471, %v5472
  %v5474 = vsel %vm5460, %v5434, 0.0
  %v5475 = vadd.f32 %v5473, %v5474
  %v5476 = vsel %vm5460, %v5435, 0.0
  %v5477 = vadd.f32 %v5475, %v5476
  %v5478 = vsel %vm5460, %v5436, 0.0
  %v5479 = vadd.f32 %v5477, %v5478
  %v5480 = vsel %vm5460, %v5437, 0.0
  %v5481 = vadd.f32 %v5479, %v5480
  %v5482 = vsel %vm5460, %v5438, 0.0
  %v5483 = vadd.f32 %v5481, %v5482
  %vm5484 = vcmask 254976
  %v5485 = vsel %vm5484, %v5439, 0.0
  %v5486 = vadd.f32 %v5483, %v5485
  %v5487 = vrot.slane %v5486, 4
  %v5488 = vadd.f32 %v5486, %v5487
  %v5489 = vrot.slane %v5488, 2
  %v5490 = vadd.f32 %v5488, %v5489
  %v5491 = vrot.slane %v5490, 1
  %v5492 = vadd.f32 %v5490, %v5491
  %v5493 = vrcp.pop 98.0
  %v5494 = vmul.f32 %v5492, %v5493
  %v5495 = vmul.f32 %v5427, %v5427
  %v5496 = vmul.f32 %v5428, %v5428
  %v5497 = vmul.f32 %v5429, %v5429
  %v5498 = vmul.f32 %v5430, %v5430
  %v5499 = vmul.f32 %v5431, %v5431
  %v5500 = vmul.f32 %v5432, %v5432
  %v5501 = vmul.f32 %v5433, %v5433
  %v5502 = vmul.f32 %v5434, %v5434
  %v5503 = vmul.f32 %v5435, %v5435
  %v5504 = vmul.f32 %v5436, %v5436
  %v5505 = vmul.f32 %v5437, %v5437
  %v5506 = vmul.f32 %v5438, %v5438
  %v5507 = vmul.f32 %v5439, %v5439
  %v5508 = vsel %vm5460, %v5495, 0.0
  %v5509 = vsel %vm5460, %v5496, 0.0
  %v5510 = vadd.f32 %v5508, %v5509
  %v5511 = vsel %vm5460, %v5497, 0.0
  %v5512 = vadd.f32 %v5510, %v5511
  %v5513 = vsel %vm5460, %v5498, 0.0
  %v5514 = vadd.f32 %v5512, %v5513
  %v5515 = vsel %vm5460, %v5499, 0.0
  %v5516 = vadd.f32 %v5514, %v5515
  %v5517 = vsel %vm5460, %v5500, 0.0
  %v5518 = vadd.f32 %v5516, %v5517
  %v5519 = vsel %vm5460, %v5501, 0.0
  %v5520 = vadd.f32 %v5518, %v5519
  %v5521 = vsel %vm5460, %v5502, 0.0
  %v5522 = vadd.f32 %v5520, %v5521
  %v5523 = vsel %vm5460, %v5503, 0.0
  %v5524 = vadd.f32 %v5522, %v5523
  %v5525 = vsel %vm5460, %v5504, 0.0
  %v5526 = vadd.f32 %v5524, %v5525
  %v5527 = vsel %vm5460, %v5505, 0.0
  %v5528 = vadd.f32 %v5526, %v5527
  %v5529 = vsel %vm5460, %v5506, 0.0
  %v5530 = vadd.f32 %v5528, %v5529
  %v5531 = vsel %vm5484, %v5507, 0.0
  %v5532 = vadd.f32 %v5530, %v5531
  %v5533 = vrot.slane %v5532, 4
  %v5534 = vadd.f32 %v5532, %v5533
  %v5535 = vrot.slane %v5534, 2
  %v5536 = vadd.f32 %v5534, %v5535
  %v5537 = vrot.slane %v5536, 1
  %v5538 = vadd.f32 %v5536, %v5537
  %v5539 = vmul.f32 %v5538, %v5493
  %v5540 = vmul.f32 %v5494, %v5494
  %v5541 = vsub.f32 %v5539, %v5540
  %v5542 = vld [vmem:[%s4] sm:$0x3]
  %v5543 = vsub.f32 %v5439, %v5494
  %v5544 = vsub.f32 %v5440, %v5494
  %v5545 = vsub.f32 %v5441, %v5494
  %v5546 = vsub.f32 %v5442, %v5494
  %v5547 = vsub.f32 %v5443, %v5494
  %v5548 = vsub.f32 %v5444, %v5494
  %v5549 = vsub.f32 %v5445, %v5494
  %v5550 = vsub.f32 %v5446, %v5494
  %v5551 = vsub.f32 %v5447, %v5494
  %v5552 = vsub.f32 %v5448, %v5494
  %v5553 = vsub.f32 %v5449, %v5494
  %v5554 = vsub.f32 %v5450, %v5494
  %v5555 = vsub.f32 %v5451, %v5494
  %v5556 = vsub.f32 %v5452, %v5494
  %v5557 = vsub.f32 %v5453, %v5494
  %v5558 = vsub.f32 %v5454, %v5494
  %v5559 = vsub.f32 %v5455, %v5494
  %v5560 = vsub.f32 %v5456, %v5494
  %v5561 = vsub.f32 %v5457, %v5494
  %v5562 = vsub.f32 %v5458, %v5494
  %v5563 = vsub.f32 %v5459, %v5494
  %v5564 = vadd.f32 %v5541, 1e-05
  %v5565 = vrsqrt.pop %v5564
  %v5566 = vmul.f32 %v5543, %v5565
  %v5567 = vmul.f32 %v5544, %v5565
  %v5568 = vmul.f32 %v5545, %v5565
  %v5569 = vmul.f32 %v5546, %v5565
  %v5570 = vmul.f32 %v5547, %v5565
  %v5571 = vmul.f32 %v5548, %v5565
  %v5572 = vmul.f32 %v5549, %v5565
  %v5573 = vmul.f32 %v5550, %v5565
  %v5574 = vmul.f32 %v5551, %v5565
  %v5575 = vmul.f32 %v5552, %v5565
  %v5576 = vmul.f32 %v5553, %v5565
  %v5577 = vmul.f32 %v5554, %v5565
  %v5578 = vmul.f32 %v5555, %v5565
  %v5579 = vmul.f32 %v5556, %v5565
  %v5580 = vmul.f32 %v5557, %v5565
  %v5581 = vmul.f32 %v5558, %v5565
  %v5582 = vmul.f32 %v5559, %v5565
  %v5583 = vmul.f32 %v5560, %v5565
  %v5584 = vmul.f32 %v5561, %v5565
  %v5585 = vmul.f32 %v5562, %v5565
  %v5586 = vmul.f32 %v5563, %v5565
  %v5587 = vlaneseq
  %v5588 = vshrl.u32 %v5587, 7
  %v5589 = vsub.s32 0, %v5588
  %v5590 = vrot.slane %v5542, %v5589
  %v5591 = vmul.f32 %v5566, %v5590
  %v5592 = vmul.f32 %v5567, %v5590
  %v5593 = vmul.f32 %v5568, %v5590
  %v5594 = vmul.f32 %v5569, %v5590
  %v5595 = vmul.f32 %v5570, %v5590
  %v5596 = vmul.f32 %v5571, %v5590
  %v5597 = vmul.f32 %v5572, %v5590
  %v5598 = vmul.f32 %v5573, %v5590
  %v5599 = vmul.f32 %v5574, %v5590
  %v5600 = vmul.f32 %v5575, %v5590
  %v5601 = vmul.f32 %v5576, %v5590
  %v5602 = vmul.f32 %v5577, %v5590
  %v5603 = vmul.f32 %v5578, %v5590
  %v5604 = vmul.f32 %v5579, %v5590
  %v5605 = vmul.f32 %v5580, %v5590
  %v5606 = vmul.f32 %v5581, %v5590
  %v5607 = vmul.f32 %v5582, %v5590
  %v5608 = vmul.f32 %v5583, %v5590
  %v5609 = vmul.f32 %v5584, %v5590
  %v5610 = vmul.f32 %v5585, %v5590
  %v5611 = vmul.f32 %v5586, %v5590
  %v5612 = vlaneseq
  %v5613 = vshrl.u32 %v5612, 7
  %v5614 = vsub.s32 1, %v5613
  %v5615 = vrot.slane %v5542, %v5614
  %v5616 = vadd.f32 %v5591, %v5615
  %v5617 = vadd.f32 %v5592, %v5615
  %v5618 = vadd.f32 %v5593, %v5615
  %v5619 = vadd.f32 %v5594, %v5615
  %v5620 = vadd.f32 %v5595, %v5615
  %v5621 = vadd.f32 %v5596, %v5615
  %v5622 = vadd.f32 %v5597, %v5615
  %v5623 = vadd.f32 %v5598, %v5615
  %v5624 = vadd.f32 %v5599, %v5615
  %v5625 = vadd.f32 %v5600, %v5615
  %v5626 = vadd.f32 %v5601, %v5615
  %v5627 = vadd.f32 %v5602, %v5615
  %v5628 = vadd.f32 %v5603, %v5615
  %v5629 = vadd.f32 %v5604, %v5615
  %v5630 = vadd.f32 %v5605, %v5615
  %v5631 = vadd.f32 %v5606, %v5615
  %v5632 = vadd.f32 %v5607, %v5615
  %v5633 = vadd.f32 %v5608, %v5615
  %v5634 = vadd.f32 %v5609, %v5615
  %v5635 = vadd.f32 %v5610, %v5615
  %v5636 = vadd.f32 %v5611, %v5615
  %v5637 = vmax.f32 %v5616, 0.0
  %v5638 = vmax.f32 %v5617, 0.0
  %v5639 = vmax.f32 %v5618, 0.0
  %v5640 = vmax.f32 %v5619, 0.0
  %v5641 = vmax.f32 %v5620, 0.0
  %v5642 = vmax.f32 %v5621, 0.0
  %v5643 = vmax.f32 %v5622, 0.0
  %v5644 = vmax.f32 %v5623, 0.0
  %v5645 = vmax.f32 %v5624, 0.0
  %v5646 = vmax.f32 %v5625, 0.0
  %v5647 = vmax.f32 %v5626, 0.0
  %v5648 = vmax.f32 %v5627, 0.0
  %v5649 = vmax.f32 %v5628, 0.0
  %v5650 = vmax.f32 %v5629, 0.0
  %v5651 = vmax.f32 %v5630, 0.0
  %v5652 = vmax.f32 %v5631, 0.0
  %v5653 = vmax.f32 %v5632, 0.0
  %v5654 = vmax.f32 %v5633, 0.0
  %v5655 = vmax.f32 %v5634, 0.0
  %v5656 = vmax.f32 %v5635, 0.0
  %v5657 = vmax.f32 %v5636, 0.0
  %v5658 = vld [vmem:[%s5] sm:$0xff]
  %v5659 = vld [vmem:[%s5 + $0x8] sm:$0xff]
  %v5660 = vld [vmem:[%s5 + $0x10] sm:$0xff]
  %v5661 = vld [vmem:[%s5 + $0x18] sm:$0xff]
  %s5662 = scalar_lea.vmem %s5, 32
  %v5663 = vld [vmem:[%s5662] sm:$0xff]
  %v5664 = vld [vmem:[%s5662 + $0x8] sm:$0xff]
  %v5665 = vld [vmem:[%s5662 + $0x10] sm:$0xff]
  %v5666 = vld [vmem:[%s5662 + $0x18] sm:$0xff]
  %vm5670 = vcmask 1043456
  %v5671 = vrot.slane %v5639, 4
  %v5672 = vrot.slane %v5640, 4
  %v5673 = vsel %vm5670, %v5671, %v5672
  %v5674 = vrot.slane %v5641, 4
  %v5675 = vsel %vm5670, %v5672, %v5674
  %v5676 = vsel %vm5460, %v5673, 0
  %v5678 = vsel %vm5460, %v5675, 0
  %v5680 = vsel %vm5460, %v5674, 0
  %5682 = vmatprep.subr.mxu0 0.0
  %5683 = vmatpush1.msra.mxu0 %v5663
  %5684 = vmatprep.subr.mxu0 0.0
  %5685 = vmatpush1.msra.mxu0 %v5664
  %5686 = vmatprep.subr.mxu0 0.0
  %5687 = vmatpush1.msra.mxu0 %v5665
  %5688 = vmatprep.subr.mxu0 0.0
  %5689 = vmatpush1.msra.mxu0 %v5666
  %5690 = vmatprep.subr.mxu0 0.0
  %5691 = vmatpush1.msra.mxu0 0.0
  %5692 = vmatprep.subr.mxu0 0.0
  %5693 = vmatpush1.msra.mxu0 0.0
  %5694 = vmatprep.subr.mxu0 0.0
  %5695 = vmatpush1.msra.mxu0 0.0
  %5696 = vmatprep.subr.mxu0 0.0
  %5697 = vmatpush1.msra.mxu0 0.0
  %5698 = vmatprep.subr.mxu0 0.0
  %5699 = vmatpush1.msra.mxu0 0.0
  %5700 = vmatprep.subr.mxu0 0.0
  %5701 = vmatpush1.msra.mxu0 0.0
  %5702 = vmatprep.subr.mxu0 0.0
  %5703 = vmatpush1.msra.mxu0 0.0
  %5704 = vmatprep.subr.mxu0 0.0
  %5705 = vmatpush1.msra.mxu0 0.0
  %5706 = vmatprep.subr.mxu0 0.0
  %5707 = vmatpush1.msra.mxu0 0.0
  %5708 = vmatprep.subr.mxu0 0.0
  %5709 = vmatpush1.msra.mxu0 0.0
  %5710 = vmatprep.subr.mxu0 0.0
  %5711 = vmatpush1.msra.mxu0 0.0
  %5712 = vmatprep.subr.mxu0 0.0
  %5713 = vmatpush1.msra.mxu0 0.0
  %5714 = vmatprep.subr.mxu0 0.0
  %5715 = vmatpush1.msra.mxu0 0.0
  %5716 = vmatprep.subr.mxu0 0.0
  %5717 = vmatpush1.msra.mxu0 0.0
  %5718 = vmatprep.subr.mxu0 0.0
  %5719 = vmatpush1.msra.mxu0 0.0
  %5720 = vmatprep.subr.mxu0 0.0
  %5721 = vmatpush1.msra.mxu0 0.0
  %5722 = vmatprep.subr.mxu0 0.0
  %5723 = vmatpush1.msra.mxu0 0.0
  %5724 = vmatprep.subr.mxu0 0.0
  %5725 = vmatpush1.msra.mxu0 0.0
  %5726 = vmatprep.subr.mxu0 0.0
  %5727 = vmatpush1.msra.mxu0 0.0
  %5728 = vmatprep.subr.mxu0 0.0
  %5729 = vmatpush1.msra.mxu0 0.0
  %5730 = vmatprep.subr.mxu0 0.0
  %5731 = vmatpush1.msra.mxu0 0.0
  %5732 = vmatprep.subr.mxu0 0.0
  %5733 = vmatpush1.msra.mxu0 0.0
  %5734 = vmatprep.subr.mxu0 0.0
  %5735 = vmatpush1.msra.mxu0 0.0
  %5736 = vmatprep.subr.mxu0 0.0
  %5737 = vmatpush1.msra.mxu0 0.0
  %5738 = vmatprep.subr.mxu0 0.0
  %5739 = vmatpush1.msra.mxu0 0.0
  %5740 = vmatprep.subr.mxu0 0.0
  %5741 = vmatpush1.msra.mxu0 0.0
  %5742 = vmatprep.subr.mxu0 0.0
  %5743 = vmatpush1.msra.mxu0 0.0
  %5744 = vmatprep.subr.mxu0 0.0
  %5745 = vmatpush1.msra.mxu0 0.0
  %5746 = vmatprep.mubr.f32.mxu0 0.0
  %5747 = vmatmul.mubr.f32.gmra.mrb[0].mxu0 %v5676
  %v5748 = vpop.f32.mrb[0].mxu0
  %v5749 = vadd.f32 0.0, %v5748
  %v5750 = vpop.f32.mrb[0].mxu0
  %5751 = vmatprep.mubr.f32.mxu0 0.0
  %5752 = vmatmul.mubr.f32.gmra.mrb[0].mxu0 %v5678
  %v5753 = vpop.f32.mrb[0].mxu0
  %v5754 = vadd.f32 0.0, %v5753
  %v5755 = vpop.f32.mrb[0].mxu0
  %5756 = vmatprep.mubr.f32.mxu0 0.0
  %5757 = vmatmul.mubr.f32.gmra.mrb[0].mxu0 %v5680
  %v5758 = vpop.f32.mrb[0].mxu0
  %v5759 = vadd.f32 0.0, %v5758
  %v5760 = vpop.f32.mrb[0].mxu0
  %5761 = vdwg.mxu0
  %vm5764 = vcmask 1045504
  %v5765 = vrot.slane %v5637, 2
  %v5766 = vrot.slane %v5638, 2
  %v5767 = vsel %vm5764, %v5765, %v5766
  %v5768 = vrot.slane %v5639, 2
  %v5769 = vsel %vm5764, %v5766, %v5768
  %v5770 = vsel %vm5460, %v5767, 0
  %v5772 = vsel %vm5460, %v5769, 0
  %v5774 = vsel %vm5460, %v5768, 0
  %5776 = vmatprep.subr.mxu0 0.0
  %5777 = vmatpush1.msra.mxu0 %v5658
  %5778 = vmatprep.subr.mxu0 0.0
  %5779 = vmatpush1.msra.mxu0 %v5659
  %5780 = vmatprep.subr.mxu0 0.0
  %5781 = vmatpush1.msra.mxu0 %v5660
  %5782 = vmatprep.subr.mxu0 0.0
  %5783 = vmatpush1.msra.mxu0 %v5661
  %5784 = vmatprep.subr.mxu0 0.0
  %5785 = vmatpush1.msra.mxu0 0.0
  %5786 = vmatprep.subr.mxu0 0.0
  %5787 = vmatpush1.msra.mxu0 0.0
  %5788 = vmatprep.subr.mxu0 0.0
  %5789 = vmatpush1.msra.mxu0 0.0
  %5790 = vmatprep.subr.mxu0 0.0
  %5791 = vmatpush1.msra.mxu0 0.0
  %5792 = vmatprep.subr.mxu0 0.0
  %5793 = vmatpush1.msra.mxu0 0.0
  %5794 = vmatprep.subr.mxu0 0.0
  %5795 = vmatpush1.msra.mxu0 0.0
  %5796 = vmatprep.subr.mxu0 0.0
  %5797 = vmatpush1.msra.mxu0 0.0
  %5798 = vmatprep.subr.mxu0 0.0
  %5799 = vmatpush1.msra.mxu0 0.0
  %5800 = vmatprep.subr.mxu0 0.0
  %5801 = vmatpush1.msra.mxu0 0.0
  %5802 = vmatprep.subr.mxu0 0.0
  %5803 = vmatpush1.msra.mxu0 0.0
  %5804 = vmatprep.subr.mxu0 0.0
  %5805 = vmatpush1.msra.mxu0 0.0
  %5806 = vmatprep.subr.mxu0 0.0
  %5807 = vmatpush1.msra.mxu0 0.0
  %5808 = vmatprep.subr.mxu0 0.0
  %5809 = vmatpush1.msra.mxu0 0.0
  %5810 = vmatprep.subr.mxu0 0.0
  %5811 = vmatpush1.msra.mxu0 0.0
  %5812 = vmatprep.subr.mxu0 0.0
  %5813 = vmatpush1.msra.mxu0 0.0
  %5814 = vmatprep.subr.mxu0 0.0
  %5815 = vmatpush1.msra.mxu0 0.0
  %5816 = vmatprep.subr.mxu0 0.0
  %5817 = vmatpush1.msra.mxu0 0.0
  %5818 = vmatprep.subr.mxu0 0.0
  %5819 = vmatpush1.msra.mxu0 0.0
  %5820 = vmatprep.subr.mxu0 0.0
  %5821 = vmatpush1.msra.mxu0 0.0
  %5822 = vmatprep.subr.mxu0 0.0
  %5823 = vmatpush1.msra.mxu0 0.0
  %5824 = vmatprep.subr.mxu0 0.0
  %5825 = vmatpush1.msra.mxu0 0.0
  %5826 = vmatprep.subr.mxu0 0.0
  %5827 = vmatpush1.msra.mxu0 0.0
  %5828 = vmatprep.subr.mxu0 0.0
  %5829 = vmatpush1.msra.mxu0 0.0
  %5830 = vmatprep.subr.mxu0 0.0
  %5831 = vmatpush1.msra.mxu0 0.0
  %5832 = vmatprep.subr.mxu0 0.0
  %5833 = vmatpush1.msra.mxu0 0.0
  %5834 = vmatprep.subr.mxu0 0.0
  %5835 = vmatpush1.msra.mxu0 0.0
  %5836 = vmatprep.subr.mxu0 0.0
  %5837 = vmatpush1.msra.mxu0 0.0
  %5838 = vmatprep.subr.mxu0 0.0
  %5839 = vmatpush1.msra.mxu0 0.0
  %5840 = vmatprep.mubr.f32.mxu0 0.0
  %5841 = vmatmul.mubr.f32.gmra.mrb[0].mxu0 %v5770
  %v5842 = vpop.f32.mrb[0].mxu0
  %v5843 = vadd.f32 %v5749, %v5842
  %v5844 = vpop.f32.mrb[0].mxu0
  %5845 = vmatprep.mubr.f32.mxu0 0.0
  %5846 = vmatmul.mubr.f32.gmra.mrb[0].mxu0 %v5772
  %v5847 = vpop.f32.mrb[0].mxu0
  %v5848 = vadd.f32 %v5754, %v5847
  %v5849 = vpop.f32.mrb[0].mxu0
  %5850 = vmatprep.mubr.f32.mxu0 0.0
  %5851 = vmatmul.mubr.f32.gmra.mrb[0].mxu0 %v5774
  %v5852 = vpop.f32.mrb[0].mxu0
  %v5853 = vadd.f32 %v5759, %v5852
  %v5854 = vpop.f32.mrb[0].mxu0
  %5855 = vdwg.mxu0
  %s5856 = scalar_lea.vmem %s5, 64
  %v5857 = vld [vmem:[%s5856] sm:$0xff]
  %v5858 = vld [vmem:[%s5856 + $0x8] sm:$0xff]
  %v5859 = vld [vmem:[%s5856 + $0x10] sm:$0xff]
  %v5860 = vld [vmem:[%s5856 + $0x18] sm:$0xff]
  %vm5863 = vcmask 1041408
  %v5864 = vrot.slane %v5641, 6
  %v5865 = vrot.slane %v5642, 6
  %v5866 = vsel %vm5863, %v5864, %v5865
  %v5867 = vrot.slane %v5643, 6
  %v5868 = vsel %vm5863, %v5865, %v5867
  %v5869 = vsel %vm5460, %v5866, 0
  %v5871 = vsel %vm5460, %v5868, 0
  %v5873 = vsel %vm5460, %v5867, 0
  %5875 = vmatprep.subr.mxu0 0.0
  %5876 = vmatpush1.msra.mxu0 %v5857
  %5877 = vmatprep.subr.mxu0 0.0
  %5878 = vmatpush1.msra.mxu0 %v5858
  %5879 = vmatprep.subr.mxu0 0.0
  %5880 = vmatpush1.msra.mxu0 %v5859
  %5881 = vmatprep.subr.mxu0 0.0
  %5882 = vmatpush1.msra.mxu0 %v5860
  %5883 = vmatprep.subr.mxu0 0.0
  %5884 = vmatpush1.msra.mxu0 0.0
  %5885 = vmatprep.subr.mxu0 0.0
  %5886 = vmatpush1.msra.mxu0 0.0
  %5887 = vmatprep.subr.mxu0 0.0
  %5888 = vmatpush1.msra.mxu0 0.0
  %5889 = vmatprep.subr.mxu0 0.0
  %5890 = vmatpush1.msra.mxu0 0.0
  %5891 = vmatprep.subr.mxu0 0.0
  %5892 = vmatpush1.msra.mxu0 0.0
  %5893 = vmatprep.subr.mxu0 0.0
  %5894 = vmatpush1.msra.mxu0 0.0
  %5895 = vmatprep.subr.mxu0 0.0
  %5896 = vmatpush1.msra.mxu0 0.0
  %5897 = vmatprep.subr.mxu0 0.0
  %5898 = vmatpush1.msra.mxu0 0.0
  %5899 = vmatprep.subr.mxu0 0.0
  %5900 = vmatpush1.msra.mxu0 0.0
  %5901 = vmatprep.subr.mxu0 0.0
  %5902 = vmatpush1.msra.mxu0 0.0
  %5903 = vmatprep.subr.mxu0 0.0
  %5904 = vmatpush1.msra.mxu0 0.0
  %5905 = vmatprep.subr.mxu0 0.0
  %5906 = vmatpush1.msra.mxu0 0.0
  %5907 = vmatprep.subr.mxu0 0.0
  %5908 = vmatpush1.msra.mxu0 0.0
  %5909 = vmatprep.subr.mxu0 0.0
  %5910 = vmatpush1.msra.mxu0 0.0
  %5911 = vmatprep.subr.mxu0 0.0
  %5912 = vmatpush1.msra.mxu0 0.0
  %5913 = vmatprep.subr.mxu0 0.0
  %5914 = vmatpush1.msra.mxu0 0.0
  %5915 = vmatprep.subr.mxu0 0.0
  %5916 = vmatpush1.msra.mxu0 0.0
  %5917 = vmatprep.subr.mxu0 0.0
  %5918 = vmatpush1.msra.mxu0 0.0
  %5919 = vmatprep.subr.mxu0 0.0
  %5920 = vmatpush1.msra.mxu0 0.0
  %5921 = vmatprep.subr.mxu0 0.0
  %5922 = vmatpush1.msra.mxu0 0.0
  %5923 = vmatprep.subr.mxu0 0.0
  %5924 = vmatpush1.msra.mxu0 0.0
  %5925 = vmatprep.subr.mxu0 0.0
  %5926 = vmatpush1.msra.mxu0 0.0
  %5927 = vmatprep.subr.mxu0 0.0
  %5928 = vmatpush1.msra.mxu0 0.0
  %5929 = vmatprep.subr.mxu0 0.0
  %5930 = vmatpush1.msra.mxu0 0.0
  %5931 = vmatprep.subr.mxu0 0.0
  %5932 = vmatpush1.msra.mxu0 0.0
  %5933 = vmatprep.subr.mxu0 0.0
  %5934 = vmatpush1.msra.mxu0 0.0
  %5935 = vmatprep.subr.mxu0 0.0
  %5936 = vmatpush1.msra.mxu0 0.0
  %5937 = vmatprep.subr.mxu0 0.0
  %5938 = vmatpush1.msra.mxu0 0.0
  %5939 = vmatprep.mubr.f32.mxu0 0.0
  %5940 = vmatmul.mubr.f32.gmra.mrb[0].mxu0 %v5869
  %v5941 = vpop.f32.mrb[0].mxu0
  %v5942 = vadd.f32 0.0, %v5941
  %v5943 = vpop.f32.mrb[0].mxu0
  %5944 = vmatprep.mubr.f32.mxu0 0.0
  %5945 = vmatmul.mubr.f32.gmra.mrb[0].mxu0 %v5871
  %v5946 = vpop.f32.mrb[0].mxu0
  %v5947 = vadd.f32 0.0, %v5946
  %v5948 = vpop.f32.mrb[0].mxu0
  %5949 = vmatprep.mubr.f32.mxu0 0.0
  %5950 = vmatmul.mubr.f32.gmra.mrb[0].mxu0 %v5873
  %v5951 = vpop.f32.mrb[0].mxu0
  %v5952 = vadd.f32 0.0, %v5951
  %v5953 = vpop.f32.mrb[0].mxu0
  %5954 = vdwg.mxu0
  %v5955 = vadd.f32 %v5843, %v5942
  %v5956 = vadd.f32 %v5848, %v5947
  %v5957 = vadd.f32 %v5853, %v5952
  %s5958 = scalar_lea.vmem %s5, 96
  %v5959 = vld [vmem:[%s5958] sm:$0xff]
  %v5960 = vld [vmem:[%s5958 + $0x8] sm:$0xff]
  %v5961 = vld [vmem:[%s5958 + $0x10] sm:$0xff]
  %v5962 = vld [vmem:[%s5958 + $0x18] sm:$0xff]
  %v5964 = vsel %vm5460, %v5644, 0
  %v5967 = vsel %vm5460, %v5645, 0
  %v5970 = vsel %vm5460, %v5646, 0
  %5972 = vmatprep.subr.mxu0 0.0
  %5973 = vmatpush1.msra.mxu0 %v5959
  %5974 = vmatprep.subr.mxu0 0.0
  %5975 = vmatpush1.msra.mxu0 %v5960
  %5976 = vmatprep.subr.mxu0 0.0
  %5977 = vmatpush1.msra.mxu0 %v5961
  %5978 = vmatprep.subr.mxu0 0.0
  %5979 = vmatpush1.msra.mxu0 %v5962
  %5980 = vmatprep.subr.mxu0 0.0
  %5981 = vmatpush1.msra.mxu0 0.0
  %5982 = vmatprep.subr.mxu0 0.0
  %5983 = vmatpush1.msra.mxu0 0.0
  %5984 = vmatprep.subr.mxu0 0.0
  %5985 = vmatpush1.msra.mxu0 0.0
  %5986 = vmatprep.subr.mxu0 0.0
  %5987 = vmatpush1.msra.mxu0 0.0
  %5988 = vmatprep.subr.mxu0 0.0
  %5989 = vmatpush1.msra.mxu0 0.0
  %5990 = vmatprep.subr.mxu0 0.0
  %5991 = vmatpush1.msra.mxu0 0.0
  %5992 = vmatprep.subr.mxu0 0.0
  %5993 = vmatpush1.msra.mxu0 0.0
  %5994 = vmatprep.subr.mxu0 0.0
  %5995 = vmatpush1.msra.mxu0 0.0
  %5996 = vmatprep.subr.mxu0 0.0
  %5997 = vmatpush1.msra.mxu0 0.0
  %5998 = vmatprep.subr.mxu0 0.0
  %5999 = vmatpush1.msra.mxu0 0.0
  %6000 = vmatprep.subr.mxu0 0.0
  %6001 = vmatpush1.msra.mxu0 0.0
  %6002 = vmatprep.subr.mxu0 0.0
  %6003 = vmatpush1.msra.mxu0 0.0
  %6004 = vmatprep.subr.mxu0 0.0
  %6005 = vmatpush1.msra.mxu0 0.0
  %6006 = vmatprep.subr.mxu0 0.0
  %6007 = vmatpush1.msra.mxu0 0.0
  %6008 = vmatprep.subr.mxu0 0.0
  %6009 = vmatpush1.msra.mxu0 0.0
  %6010 = vmatprep.subr.mxu0 0.0
  %6011 = vmatpush1.msra.mxu0 0.0
  %6012 = vmatprep.subr.mxu0 0.0
  %6013 = vmatpush1.msra.mxu0 0.0
  %6014 = vmatprep.subr.mxu0 0.0
  %6015 = vmatpush1.msra.mxu0 0.0
  %6016 = vmatprep.subr.mxu0 0.0
  %6017 = vmatpush1.msra.mxu0 0.0
  %6018 = vmatprep.subr.mxu0 0.0
  %6019 = vmatpush1.msra.mxu0 0.0
  %6020 = vmatprep.subr.mxu0 0.0
  %6021 = vmatpush1.msra.mxu0 0.0
  %6022 = vmatprep.subr.mxu0 0.0
  %6023 = vmatpush1.msra.mxu0 0.0
  %6024 = vmatprep.subr.mxu0 0.0
  %6025 = vmatpush1.msra.mxu0 0.0
  %6026 = vmatprep.subr.mxu0 0.0
  %6027 = vmatpush1.msra.mxu0 0.0
  %6028 = vmatprep.subr.mxu0 0.0
  %6029 = vmatpush1.msra.mxu0 0.0
  %6030 = vmatprep.subr.mxu0 0.0
  %6031 = vmatpush1.msra.mxu0 0.0
  %6032 = vmatprep.subr.mxu0 0.0
  %6033 = vmatpush1.msra.mxu0 0.0
  %6034 = vmatprep.subr.mxu0 0.0
  %6035 = vmatpush1.msra.mxu0 0.0
  %6036 = vmatprep.mubr.f32.mxu0 0.0
  %6037 = vmatmul.mubr.f32.gmra.mrb[0].mxu0 %v5964
  %v6038 = vpop.f32.mrb[0].mxu0
  %v6039 = vadd.f32 0.0, %v6038
  %v6040 = vpop.f32.mrb[0].mxu0
  %6041 = vmatprep.mubr.f32.mxu0 0.0
  %6042 = vmatmul.mubr.f32.gmra.mrb[0].mxu0 %v5967
  %v6043 = vpop.f32.mrb[0].mxu0
  %v6044 = vadd.f32 0.0, %v6043
  %v6045 = vpop.f32.mrb[0].mxu0
  %6046 = vmatprep.mubr.f32.mxu0 0.0
  %6047 = vmatmul.mubr.f32.gmra.mrb[0].mxu0 %v5970
  %v6048 = vpop.f32.mrb[0].mxu0
  %v6049 = vadd.f32 0.0, %v6048
  %v6050 = vpop.f32.mrb[0].mxu0
  %6051 = vdwg.mxu0
  %v6052 = vadd.f32 %v5955, %v6039
  %v6053 = vadd.f32 %v5956, %v6044
  %v6054 = vadd.f32 %v5957, %v6049
  %s6055 = scalar_lea.vmem %s5, 128
  %v6056 = vld [vmem:[%s6055] sm:$0xff]
  %v6057 = vld [vmem:[%s6055 + $0x8] sm:$0xff]
  %v6058 = vld [vmem:[%s6055 + $0x10] sm:$0xff]
  %v6059 = vld [vmem:[%s6055 + $0x18] sm:$0xff]
  %v6062 = vrot.slane %v5646, 2
  %v6063 = vrot.slane %v5647, 2
  %v6064 = vsel %vm5764, %v6062, %v6063
  %v6065 = vrot.slane %v5648, 2
  %v6066 = vsel %vm5764, %v6063, %v6065
  %v6067 = vsel %vm5460, %v6064, 0
  %v6069 = vsel %vm5460, %v6066, 0
  %v6071 = vsel %vm5460, %v6065, 0
  %6073 = vmatprep.subr.mxu0 0.0
  %6074 = vmatpush1.msra.mxu0 %v6056
  %6075 = vmatprep.subr.mxu0 0.0
  %6076 = vmatpush1.msra.mxu0 %v6057
  %6077 = vmatprep.subr.mxu0 0.0
  %6078 = vmatpush1.msra.mxu0 %v6058
  %6079 = vmatprep.subr.mxu0 0.0
  %6080 = vmatpush1.msra.mxu0 %v6059
  %6081 = vmatprep.subr.mxu0 0.0
  %6082 = vmatpush1.msra.mxu0 0.0
  %6083 = vmatprep.subr.mxu0 0.0
  %6084 = vmatpush1.msra.mxu0 0.0
  %6085 = vmatprep.subr.mxu0 0.0
  %6086 = vmatpush1.msra.mxu0 0.0
  %6087 = vmatprep.subr.mxu0 0.0
  %6088 = vmatpush1.msra.mxu0 0.0
  %6089 = vmatprep.subr.mxu0 0.0
  %6090 = vmatpush1.msra.mxu0 0.0
  %6091 = vmatprep.subr.mxu0 0.0
  %6092 = vmatpush1.msra.mxu0 0.0
  %6093 = vmatprep.subr.mxu0 0.0
  %6094 = vmatpush1.msra.mxu0 0.0
  %6095 = vmatprep.subr.mxu0 0.0
  %6096 = vmatpush1.msra.mxu0 0.0
  %6097 = vmatprep.subr.mxu0 0.0
  %6098 = vmatpush1.msra.mxu0 0.0
  %6099 = vmatprep.subr.mxu0 0.0
  %6100 = vmatpush1.msra.mxu0 0.0
  %6101 = vmatprep.subr.mxu0 0.0
  %6102 = vmatpush1.msra.mxu0 0.0
  %6103 = vmatprep.subr.mxu0 0.0
  %6104 = vmatpush1.msra.mxu0 0.0
  %6105 = vmatprep.subr.mxu0 0.0
  %6106 = vmatpush1.msra.mxu0 0.0
  %6107 = vmatprep.subr.mxu0 0.0
  %6108 = vmatpush1.msra.mxu0 0.0
  %6109 = vmatprep.subr.mxu0 0.0
  %6110 = vmatpush1.msra.mxu0 0.0
  %6111 = vmatprep.subr.mxu0 0.0
  %6112 = vmatpush1.msra.mxu0 0.0
  %6113 = vmatprep.subr.mxu0 0.0
  %6114 = vmatpush1.msra.mxu0 0.0
  %6115 = vmatprep.subr.mxu0 0.0
  %6116 = vmatpush1.msra.mxu0 0.0
  %6117 = vmatprep.subr.mxu0 0.0
  %6118 = vmatpush1.msra.mxu0 0.0
  %6119 = vmatprep.subr.mxu0 0.0
  %6120 = vmatpush1.msra.mxu0 0.0
  %6121 = vmatprep.subr.mxu0 0.0
  %6122 = vmatpush1.msra.mxu0 0.0
  %6123 = vmatprep.subr.mxu0 0.0
  %6124 = vmatpush1.msra.mxu0 0.0
  %6125 = vmatprep.subr.mxu0 0.0
  %6126 = vmatpush1.msra.mxu0 0.0
  %6127 = vmatprep.subr.mxu0 0.0
  %6128 = vmatpush1.msra.mxu0 0.0
  %6129 = vmatprep.subr.mxu0 0.0
  %6130 = vmatpush1.msra.mxu0 0.0
  %6131 = vmatprep.subr.mxu0 0.0
  %6132 = vmatpush1.msra.mxu0 0.0
  %6133 = vmatprep.subr.mxu0 0.0
  %6134 = vmatpush1.msra.mxu0 0.0
  %6135 = vmatprep.subr.mxu0 0.0
  %6136 = vmatpush1.msra.mxu0 0.0
  %6137 = vmatprep.mubr.f32.mxu0 0.0
  %6138 = vmatmul.mubr.f32.gmra.mrb[0].mxu0 %v6067
  %v6139 = vpop.f32.mrb[0].mxu0
  %v6140 = vadd.f32 0.0, %v6139
  %v6141 = vpop.f32.mrb[0].mxu0
  %6142 = vmatprep.mubr.f32.mxu0 0.0
  %6143 = vmatmul.mubr.f32.gmra.mrb[0].mxu0 %v6069
  %v6144 = vpop.f32.mrb[0].mxu0
  %v6145 = vadd.f32 0.0, %v6144
  %v6146 = vpop.f32.mrb[0].mxu0
  %6147 = vmatprep.mubr.f32.mxu0 0.0
  %6148 = vmatmul.mubr.f32.gmra.mrb[0].mxu0 %v6071
  %v6149 = vpop.f32.mrb[0].mxu0
  %v6150 = vadd.f32 0.0, %v6149
  %v6151 = vpop.f32.mrb[0].mxu0
  %6152 = vdwg.mxu0
  %v6153 = vadd.f32 %v6052, %v6140
  %v6154 = vadd.f32 %v6053, %v6145
  %v6155 = vadd.f32 %v6054, %v6150
  %s6156 = scalar_lea.vmem %s5, 160
  %v6157 = vld [vmem:[%s6156] sm:$0xff]
  %v6158 = vld [vmem:[%s6156 + $0x8] sm:$0xff]
  %v6159 = vld [vmem:[%s6156 + $0x10] sm:$0xff]
  %v6160 = vld [vmem:[%s6156 + $0x18] sm:$0xff]
  %v6163 = vrot.slane %v5648, 4
  %v6164 = vrot.slane %v5649, 4
  %v6165 = vsel %vm5670, %v6163, %v6164
  %v6166 = vrot.slane %v5650, 4
  %v6167 = vsel %vm5670, %v6164, %v6166
  %v6168 = vsel %vm5460, %v6165, 0
  %v6170 = vsel %vm5460, %v6167, 0
  %v6172 = vsel %vm5460, %v6166, 0
  %6174 = vmatprep.subr.mxu0 0.0
  %6175 = vmatpush1.msra.mxu0 %v6157
  %6176 = vmatprep.subr.mxu0 0.0
  %6177 = vmatpush1.msra.mxu0 %v6158
  %6178 = vmatprep.subr.mxu0 0.0
  %6179 = vmatpush1.msra.mxu0 %v6159
  %6180 = vmatprep.subr.mxu0 0.0
  %6181 = vmatpush1.msra.mxu0 %v6160
  %6182 = vmatprep.subr.mxu0 0.0
  %6183 = vmatpush1.msra.mxu0 0.0
  %6184 = vmatprep.subr.mxu0 0.0
  %6185 = vmatpush1.msra.mxu0 0.0
  %6186 = vmatprep.subr.mxu0 0.0
  %6187 = vmatpush1.msra.mxu0 0.0
  %6188 = vmatprep.subr.mxu0 0.0
  %6189 = vmatpush1.msra.mxu0 0.0
  %6190 = vmatprep.subr.mxu0 0.0
  %6191 = vmatpush1.msra.mxu0 0.0
  %6192 = vmatprep.subr.mxu0 0.0
  %6193 = vmatpush1.msra.mxu0 0.0
  %6194 = vmatprep.subr.mxu0 0.0
  %6195 = vmatpush1.msra.mxu0 0.0
  %6196 = vmatprep.subr.mxu0 0.0
  %6197 = vmatpush1.msra.mxu0 0.0
  %6198 = vmatprep.subr.mxu0 0.0
  %6199 = vmatpush1.msra.mxu0 0.0
  %6200 = vmatprep.subr.mxu0 0.0
  %6201 = vmatpush1.msra.mxu0 0.0
  %6202 = vmatprep.subr.mxu0 0.0
  %6203 = vmatpush1.msra.mxu0 0.0
  %6204 = vmatprep.subr.mxu0 0.0
  %6205 = vmatpush1.msra.mxu0 0.0
  %6206 = vmatprep.subr.mxu0 0.0
  %6207 = vmatpush1.msra.mxu0 0.0
  %6208 = vmatprep.subr.mxu0 0.0
  %6209 = vmatpush1.msra.mxu0 0.0
  %6210 = vmatprep.subr.mxu0 0.0
  %6211 = vmatpush1.msra.mxu0 0.0
  %6212 = vmatprep.subr.mxu0 0.0
  %6213 = vmatpush1.msra.mxu0 0.0
  %6214 = vmatprep.subr.mxu0 0.0
  %6215 = vmatpush1.msra.mxu0 0.0
  %6216 = vmatprep.subr.mxu0 0.0
  %6217 = vmatpush1.msra.mxu0 0.0
  %6218 = vmatprep.subr.mxu0 0.0
  %6219 = vmatpush1.msra.mxu0 0.0
  %6220 = vmatprep.subr.mxu0 0.0
  %6221 = vmatpush1.msra.mxu0 0.0
  %6222 = vmatprep.subr.mxu0 0.0
  %6223 = vmatpush1.msra.mxu0 0.0
  %6224 = vmatprep.subr.mxu0 0.0
  %6225 = vmatpush1.msra.mxu0 0.0
  %6226 = vmatprep.subr.mxu0 0.0
  %6227 = vmatpush1.msra.mxu0 0.0
  %6228 = vmatprep.subr.mxu0 0.0
  %6229 = vmatpush1.msra.mxu0 0.0
  %6230 = vmatprep.subr.mxu0 0.0
  %6231 = vmatpush1.msra.mxu0 0.0
  %6232 = vmatprep.subr.mxu0 0.0
  %6233 = vmatpush1.msra.mxu0 0.0
  %6234 = vmatprep.subr.mxu0 0.0
  %6235 = vmatpush1.msra.mxu0 0.0
  %6236 = vmatprep.subr.mxu0 0.0
  %6237 = vmatpush1.msra.mxu0 0.0
  %6238 = vmatprep.mubr.f32.mxu0 0.0
  %6239 = vmatmul.mubr.f32.gmra.mrb[0].mxu0 %v6168
  %v6240 = vpop.f32.mrb[0].mxu0
  %v6241 = vadd.f32 0.0, %v6240
  %v6242 = vpop.f32.mrb[0].mxu0
  %6243 = vmatprep.mubr.f32.mxu0 0.0
  %6244 = vmatmul.mubr.f32.gmra.mrb[0].mxu0 %v6170
  %v6245 = vpop.f32.mrb[0].mxu0
  %v6246 = vadd.f32 0.0, %v6245
  %v6247 = vpop.f32.mrb[0].mxu0
  %6248 = vmatprep.mubr.f32.mxu0 0.0
  %6249 = vmatmul.mubr.f32.gmra.mrb[0].mxu0 %v6172
  %v6250 = vpop.f32.mrb[0].mxu0
  %v6251 = vadd.f32 0.0, %v6250
  %v6252 = vpop.f32.mrb[0].mxu0
  %6253 = vdwg.mxu0
  %v6254 = vadd.f32 %v6153, %v6241
  %v6255 = vadd.f32 %v6154, %v6246
  %v6256 = vadd.f32 %v6155, %v6251
  %s6257 = scalar_lea.vmem %s5, 192
  %v6258 = vld [vmem:[%s6257] sm:$0xff]
  %v6259 = vld [vmem:[%s6257 + $0x8] sm:$0xff]
  %v6260 = vld [vmem:[%s6257 + $0x10] sm:$0xff]
  %v6261 = vld [vmem:[%s6257 + $0x18] sm:$0xff]
  %v6264 = vrot.slane %v5650, 6
  %v6265 = vrot.slane %v5651, 6
  %v6266 = vsel %vm5863, %v6264, %v6265
  %v6267 = vrot.slane %v5652, 6
  %v6268 = vsel %vm5863, %v6265, %v6267
  %v6269 = vsel %vm5460, %v6266, 0
  %v6271 = vsel %vm5460, %v6268, 0
  %v6273 = vsel %vm5460, %v6267, 0
  %6275 = vmatprep.subr.mxu0 0.0
  %6276 = vmatpush1.msra.mxu0 %v6258
  %6277 = vmatprep.subr.mxu0 0.0
  %6278 = vmatpush1.msra.mxu0 %v6259
  %6279 = vmatprep.subr.mxu0 0.0
  %6280 = vmatpush1.msra.mxu0 %v6260
  %6281 = vmatprep.subr.mxu0 0.0
  %6282 = vmatpush1.msra.mxu0 %v6261
  %6283 = vmatprep.subr.mxu0 0.0
  %6284 = vmatpush1.msra.mxu0 0.0
  %6285 = vmatprep.subr.mxu0 0.0
  %6286 = vmatpush1.msra.mxu0 0.0
  %6287 = vmatprep.subr.mxu0 0.0
  %6288 = vmatpush1.msra.mxu0 0.0
  %6289 = vmatprep.subr.mxu0 0.0
  %6290 = vmatpush1.msra.mxu0 0.0
  %6291 = vmatprep.subr.mxu0 0.0
  %6292 = vmatpush1.msra.mxu0 0.0
  %6293 = vmatprep.subr.mxu0 0.0
  %6294 = vmatpush1.msra.mxu0 0.0
  %6295 = vmatprep.subr.mxu0 0.0
  %6296 = vmatpush1.msra.mxu0 0.0
  %6297 = vmatprep.subr.mxu0 0.0
  %6298 = vmatpush1.msra.mxu0 0.0
  %6299 = vmatprep.subr.mxu0 0.0
  %6300 = vmatpush1.msra.mxu0 0.0
  %6301 = vmatprep.subr.mxu0 0.0
  %6302 = vmatpush1.msra.mxu0 0.0
  %6303 = vmatprep.subr.mxu0 0.0
  %6304 = vmatpush1.msra.mxu0 0.0
  %6305 = vmatprep.subr.mxu0 0.0
  %6306 = vmatpush1.msra.mxu0 0.0
  %6307 = vmatprep.subr.mxu0 0.0
  %6308 = vmatpush1.msra.mxu0 0.0
  %6309 = vmatprep.subr.mxu0 0.0
  %6310 = vmatpush1.msra.mxu0 0.0
  %6311 = vmatprep.subr.mxu0 0.0
  %6312 = vmatpush1.msra.mxu0 0.0
  %6313 = vmatprep.subr.mxu0 0.0
  %6314 = vmatpush1.msra.mxu0 0.0
  %6315 = vmatprep.subr.mxu0 0.0
  %6316 = vmatpush1.msra.mxu0 0.0
  %6317 = vmatprep.subr.mxu0 0.0
  %6318 = vmatpush1.msra.mxu0 0.0
  %6319 = vmatprep.subr.mxu0 0.0
  %6320 = vmatpush1.msra.mxu0 0.0
  %6321 = vmatprep.subr.mxu0 0.0
  %6322 = vmatpush1.msra.mxu0 0.0
  %6323 = vmatprep.subr.mxu0 0.0
  %6324 = vmatpush1.msra.mxu0 0.0
  %6325 = vmatprep.subr.mxu0 0.0
  %6326 = vmatpush1.msra.mxu0 0.0
  %6327 = vmatprep.subr.mxu0 0.0
  %6328 = vmatpush1.msra.mxu0 0.0
  %6329 = vmatprep.subr.mxu0 0.0
  %6330 = vmatpush1.msra.mxu0 0.0
  %6331 = vmatprep.subr.mxu0 0.0
  %6332 = vmatpush1.msra.mxu0 0.0
  %6333 = vmatprep.subr.mxu0 0.0
  %6334 = vmatpush1.msra.mxu0 0.0
  %6335 = vmatprep.subr.mxu0 0.0
  %6336 = vmatpush1.msra.mxu0 0.0
  %6337 = vmatprep.subr.mxu0 0.0
  %6338 = vmatpush1.msra.mxu0 0.0
  %6339 = vmatprep.mubr.f32.mxu0 0.0
  %6340 = vmatmul.mubr.f32.gmra.mrb[0].mxu0 %v6269
  %v6341 = vpop.f32.mrb[0].mxu0
  %v6342 = vadd.f32 0.0, %v6341
  %v6343 = vpop.f32.mrb[0].mxu0
  %6344 = vmatprep.mubr.f32.mxu0 0.0
  %6345 = vmatmul.mubr.f32.gmra.mrb[0].mxu0 %v6271
  %v6346 = vpop.f32.mrb[0].mxu0
  %v6347 = vadd.f32 0.0, %v6346
  %v6348 = vpop.f32.mrb[0].mxu0
  %6349 = vmatprep.mubr.f32.mxu0 0.0
  %6350 = vmatmul.mubr.f32.gmra.mrb[0].mxu0 %v6273
  %v6351 = vpop.f32.mrb[0].mxu0
  %v6352 = vadd.f32 0.0, %v6351
  %v6353 = vpop.f32.mrb[0].mxu0
  %6354 = vdwg.mxu0
  %v6355 = vadd.f32 %v6254, %v6342
  %v6356 = vadd.f32 %v6255, %v6347
  %v6357 = vadd.f32 %v6256, %v6352
  %s6358 = scalar_lea.vmem %s5, 224
  %v6359 = vld [vmem:[%s6358] sm:$0xff]
  %v6360 = vld [vmem:[%s6358 + $0x8] sm:$0xff]
  %v6361 = vld [vmem:[%s6358 + $0x10] sm:$0xff]
  %v6362 = vld [vmem:[%s6358 + $0x18] sm:$0xff]
  %v6364 = vsel %vm5460, %v5653, 0
  %v6367 = vsel %vm5460, %v5654, 0
  %v6370 = vsel %vm5460, %v5655, 0
  %6372 = vmatprep.subr.mxu0 0.0
  %6373 = vmatpush1.msra.mxu0 %v6359
  %6374 = vmatprep.subr.mxu0 0.0
  %6375 = vmatpush1.msra.mxu0 %v6360
  %6376 = vmatprep.subr.mxu0 0.0
  %6377 = vmatpush1.msra.mxu0 %v6361
  %6378 = vmatprep.subr.mxu0 0.0
  %6379 = vmatpush1.msra.mxu0 %v6362
  %6380 = vmatprep.subr.mxu0 0.0
  %6381 = vmatpush1.msra.mxu0 0.0
  %6382 = vmatprep.subr.mxu0 0.0
  %6383 = vmatpush1.msra.mxu0 0.0
  %6384 = vmatprep.subr.mxu0 0.0
  %6385 = vmatpush1.msra.mxu0 0.0
  %6386 = vmatprep.subr.mxu0 0.0
  %6387 = vmatpush1.msra.mxu0 0.0
  %6388 = vmatprep.subr.mxu0 0.0
  %6389 = vmatpush1.msra.mxu0 0.0
  %6390 = vmatprep.subr.mxu0 0.0
  %6391 = vmatpush1.msra.mxu0 0.0
  %6392 = vmatprep.subr.mxu0 0.0
  %6393 = vmatpush1.msra.mxu0 0.0
  %6394 = vmatprep.subr.mxu0 0.0
  %6395 = vmatpush1.msra.mxu0 0.0
  %6396 = vmatprep.subr.mxu0 0.0
  %6397 = vmatpush1.msra.mxu0 0.0
  %6398 = vmatprep.subr.mxu0 0.0
  %6399 = vmatpush1.msra.mxu0 0.0
  %6400 = vmatprep.subr.mxu0 0.0
  %6401 = vmatpush1.msra.mxu0 0.0
  %6402 = vmatprep.subr.mxu0 0.0
  %6403 = vmatpush1.msra.mxu0 0.0
  %6404 = vmatprep.subr.mxu0 0.0
  %6405 = vmatpush1.msra.mxu0 0.0
  %6406 = vmatprep.subr.mxu0 0.0
  %6407 = vmatpush1.msra.mxu0 0.0
  %6408 = vmatprep.subr.mxu0 0.0
  %6409 = vmatpush1.msra.mxu0 0.0
  %6410 = vmatprep.subr.mxu0 0.0
  %6411 = vmatpush1.msra.mxu0 0.0
  %6412 = vmatprep.subr.mxu0 0.0
  %6413 = vmatpush1.msra.mxu0 0.0
  %6414 = vmatprep.subr.mxu0 0.0
  %6415 = vmatpush1.msra.mxu0 0.0
  %6416 = vmatprep.subr.mxu0 0.0
  %6417 = vmatpush1.msra.mxu0 0.0
  %6418 = vmatprep.subr.mxu0 0.0
  %6419 = vmatpush1.msra.mxu0 0.0
  %6420 = vmatprep.subr.mxu0 0.0
  %6421 = vmatpush1.msra.mxu0 0.0
  %6422 = vmatprep.subr.mxu0 0.0
  %6423 = vmatpush1.msra.mxu0 0.0
  %6424 = vmatprep.subr.mxu0 0.0
  %6425 = vmatpush1.msra.mxu0 0.0
  %6426 = vmatprep.subr.mxu0 0.0
  %6427 = vmatpush1.msra.mxu0 0.0
  %6428 = vmatprep.subr.mxu0 0.0
  %6429 = vmatpush1.msra.mxu0 0.0
  %6430 = vmatprep.subr.mxu0 0.0
  %6431 = vmatpush1.msra.mxu0 0.0
  %6432 = vmatprep.subr.mxu0 0.0
  %6433 = vmatpush1.msra.mxu0 0.0
  %6434 = vmatprep.subr.mxu0 0.0
  %6435 = vmatpush1.msra.mxu0 0.0
  %6436 = vmatprep.mubr.f32.mxu0 0.0
  %6437 = vmatmul.mubr.f32.gmra.mrb[0].mxu0 %v6364
  %v6438 = vpop.f32.mrb[0].mxu0
  %v6439 = vadd.f32 0.0, %v6438
  %v6440 = vpop.f32.mrb[0].mxu0
  %6441 = vmatprep.mubr.f32.mxu0 0.0
  %6442 = vmatmul.mubr.f32.gmra.mrb[0].mxu0 %v6367
  %v6443 = vpop.f32.mrb[0].mxu0
  %v6444 = vadd.f32 0.0, %v6443
  %v6445 = vpop.f32.mrb[0].mxu0
  %6446 = vmatprep.mubr.f32.mxu0 0.0
  %6447 = vmatmul.mubr.f32.gmra.mrb[0].mxu0 %v6370
  %v6448 = vpop.f32.mrb[0].mxu0
  %v6449 = vadd.f32 0.0, %v6448
  %v6450 = vpop.f32.mrb[0].mxu0
  %6451 = vdwg.mxu0
  %v6452 = vadd.f32 %v6355, %v6439
  %v6453 = vadd.f32 %v6356, %v6444
  %v6454 = vadd.f32 %v6357, %v6449
  %s6455 = scalar_lea.vmem %s5, 256
  %v6456 = vld [vmem:[%s6455] sm:$0xff]
  %v6457 = vld [vmem:[%s6455 + $0x8] sm:$0xff]
  %v6458 = vld [vmem:[%s6455 + $0x10] sm:$0xff]
  %v6459 = vld [vmem:[%s6455 + $0x18] sm:$0xff]
  %v6462 = vrot.slane %v5655, 2
  %v6463 = vrot.slane %v5656, 2
  %v6464 = vsel %vm5764, %v6462, %v6463
  %v6465 = vrot.slane %v5657, 2
  %v6466 = vsel %vm5764, %v6463, %v6465
  %v6467 = vsel %vm5460, %v6464, 0
  %v6469 = vsel %vm5460, %v6466, 0
  %v6471 = vsel %vm5460, %v6465, 0
  %6473 = vmatprep.subr.mxu0 0.0
  %6474 = vmatpush1.msra.mxu0 %v6456
  %6475 = vmatprep.subr.mxu0 0.0
  %6476 = vmatpush1.msra.mxu0 %v6457
  %6477 = vmatprep.subr.mxu0 0.0
  %6478 = vmatpush1.msra.mxu0 %v6458
  %6479 = vmatprep.subr.mxu0 0.0
  %6480 = vmatpush1.msra.mxu0 %v6459
  %6481 = vmatprep.subr.mxu0 0.0
  %6482 = vmatpush1.msra.mxu0 0.0
  %6483 = vmatprep.subr.mxu0 0.0
  %6484 = vmatpush1.msra.mxu0 0.0
  %6485 = vmatprep.subr.mxu0 0.0
  %6486 = vmatpush1.msra.mxu0 0.0
  %6487 = vmatprep.subr.mxu0 0.0
  %6488 = vmatpush1.msra.mxu0 0.0
  %6489 = vmatprep.subr.mxu0 0.0
  %6490 = vmatpush1.msra.mxu0 0.0
  %6491 = vmatprep.subr.mxu0 0.0
  %6492 = vmatpush1.msra.mxu0 0.0
  %6493 = vmatprep.subr.mxu0 0.0
  %6494 = vmatpush1.msra.mxu0 0.0
  %6495 = vmatprep.subr.mxu0 0.0
  %6496 = vmatpush1.msra.mxu0 0.0
  %6497 = vmatprep.subr.mxu0 0.0
  %6498 = vmatpush1.msra.mxu0 0.0
  %6499 = vmatprep.subr.mxu0 0.0
  %6500 = vmatpush1.msra.mxu0 0.0
  %6501 = vmatprep.subr.mxu0 0.0
  %6502 = vmatpush1.msra.mxu0 0.0
  %6503 = vmatprep.subr.mxu0 0.0
  %6504 = vmatpush1.msra.mxu0 0.0
  %6505 = vmatprep.subr.mxu0 0.0
  %6506 = vmatpush1.msra.mxu0 0.0
  %6507 = vmatprep.subr.mxu0 0.0
  %6508 = vmatpush1.msra.mxu0 0.0
  %6509 = vmatprep.subr.mxu0 0.0
  %6510 = vmatpush1.msra.mxu0 0.0
  %6511 = vmatprep.subr.mxu0 0.0
  %6512 = vmatpush1.msra.mxu0 0.0
  %6513 = vmatprep.subr.mxu0 0.0
  %6514 = vmatpush1.msra.mxu0 0.0
  %6515 = vmatprep.subr.mxu0 0.0
  %6516 = vmatpush1.msra.mxu0 0.0
  %6517 = vmatprep.subr.mxu0 0.0
  %6518 = vmatpush1.msra.mxu0 0.0
  %6519 = vmatprep.subr.mxu0 0.0
  %6520 = vmatpush1.msra.mxu0 0.0
  %6521 = vmatprep.subr.mxu0 0.0
  %6522 = vmatpush1.msra.mxu0 0.0
  %6523 = vmatprep.subr.mxu0 0.0
  %6524 = vmatpush1.msra.mxu0 0.0
  %6525 = vmatprep.subr.mxu0 0.0
  %6526 = vmatpush1.msra.mxu0 0.0
  %6527 = vmatprep.subr.mxu0 0.0
  %6528 = vmatpush1.msra.mxu0 0.0
  %6529 = vmatprep.subr.mxu0 0.0
  %6530 = vmatpush1.msra.mxu0 0.0
  %6531 = vmatprep.subr.mxu0 0.0
  %6532 = vmatpush1.msra.mxu0 0.0
  %6533 = vmatprep.subr.mxu0 0.0
  %6534 = vmatpush1.msra.mxu0 0.0
  %6535 = vmatprep.subr.mxu0 0.0
  %6536 = vmatpush1.msra.mxu0 0.0
  %6537 = vmatprep.mubr.f32.mxu0 0.0
  %6538 = vmatmul.mubr.f32.gmra.mrb[0].mxu0 %v6467
  %v6539 = vpop.f32.mrb[0].mxu0
  %v6540 = vadd.f32 0.0, %v6539
  %v6541 = vpop.f32.mrb[0].mxu0
  %6542 = vmatprep.mubr.f32.mxu0 0.0
  %6543 = vmatmul.mubr.f32.gmra.mrb[0].mxu0 %v6469
  %v6544 = vpop.f32.mrb[0].mxu0
  %v6545 = vadd.f32 0.0, %v6544
  %v6546 = vpop.f32.mrb[0].mxu0
  %6547 = vmatprep.mubr.f32.mxu0 0.0
  %6548 = vmatmul.mubr.f32.gmra.mrb[0].mxu0 %v6471
  %v6549 = vpop.f32.mrb[0].mxu0
  %v6550 = vadd.f32 0.0, %v6549
  %v6551 = vpop.f32.mrb[0].mxu0
  %6552 = vdwg.mxu0
  %v6553 = vadd.f32 %v6452, %v6540
  %v6554 = vadd.f32 %v6453, %v6545
  %v6555 = vadd.f32 %v6454, %v6550
  %vm6556 = vcmask 523264
  %v6557 = vsel %vm6556, %v6553, 0.0
  %v6558 = vsel %vm6556, %v6554, 0.0
  %v6559 = vadd.f32 %v6557, %v6558
  %vm6560 = vcmask 517120
  %v6561 = vsel %vm6560, %v6555, 0.0
  %v6562 = vadd.f32 %v6559, %v6561
  %v6563 = vrot.slane %v6562, 4
  %v6564 = vadd.f32 %v6562, %v6563
  %v6565 = vrot.slane %v6564, 2
  %v6566 = vadd.f32 %v6564, %v6565
  %v6567 = vrot.slane %v6566, 1
  %v6568 = vadd.f32 %v6566, %v6567
  %v6569 = vrcp.pop 18.0
  %v6570 = vmul.f32 %v6568, %v6569
  %v6571 = vmul.f32 %v6553, %v6553
  %v6572 = vmul.f32 %v6554, %v6554
  %v6573 = vmul.f32 %v6555, %v6555
  %v6574 = vsel %vm6556, %v6571, 0.0
  %v6575 = vsel %vm6556, %v6572, 0.0
  %v6576 = vadd.f32 %v6574, %v6575
  %v6577 = vsel %vm6560, %v6573, 0.0
  %v6578 = vadd.f32 %v6576, %v6577
  %v6579 = vrot.slane %v6578, 4
  %v6580 = vadd.f32 %v6578, %v6579
  %v6581 = vrot.slane %v6580, 2
  %v6582 = vadd.f32 %v6580, %v6581
  %v6583 = vrot.slane %v6582, 1
  %v6584 = vadd.f32 %v6582, %v6583
  %v6585 = vmul.f32 %v6584, %v6569
  %v6586 = vmul.f32 %v6570, %v6570
  %v6587 = vsub.f32 %v6585, %v6586
  %v6588 = vld [vmem:[%s6] sm:$0x3]
  %v6589 = vsub.f32 %v6553, %v6570
  %v6590 = vsub.f32 %v6554, %v6570
  %v6591 = vsub.f32 %v6555, %v6570
  %v6592 = vadd.f32 %v6587, 1e-05
  %v6593 = vrsqrt.pop %v6592
  %v6594 = vmul.f32 %v6589, %v6593
  %v6595 = vmul.f32 %v6590, %v6593
  %v6596 = vmul.f32 %v6591, %v6593
  %v6597 = vlaneseq
  %v6598 = vshrl.u32 %v6597, 7
  %v6599 = vsub.s32 0, %v6598
  %v6600 = vrot.slane %v6588, %v6599
  %v6601 = vmul.f32 %v6594, %v6600
  %v6602 = vmul.f32 %v6595, %v6600
  %v6603 = vmul.f32 %v6596, %v6600
  %v6604 = vlaneseq
  %v6605 = vshrl.u32 %v6604, 7
  %v6606 = vsub.s32 1, %v6605
  %v6607 = vrot.slane %v6588, %v6606
  %v6608 = vadd.f32 %v6601, %v6607
  %v6609 = vadd.f32 %v6602, %v6607
  %v6610 = vadd.f32 %v6603, %v6607
  %v6611 = vmax.f32 %v6608, 0.0
  %v6612 = vmax.f32 %v6609, 0.0
  %v6613 = vmax.f32 %v6610, 0.0
  %6614 = vst.msk [vmem:[%s7] sm:$0xff] %vm6556, %v6611
  %6615 = vst.msk [vmem:[%s7 + $0x8] sm:$0xff] %vm6556, %v6612
  %6616 = vst.msk [vmem:[%s7 + $0x10] sm:$0x3] %vm6560, %v6613
  // Predicated region
  $region30: #{encoder_forward.1} parent=0 // pred_check
    _
  $region31: #{encoder_forward.1} parent=0 // pred_check_branch
    %6618 = sbr.rel (0) target = $region33
  $region32: #{encoder_forward.1} parent=0 // pred_region
    _
  $region33: #{encoder_forward.1} parent=0 // pred_fallthru
    _
  // Predicated region
  $region34: #{encoder_forward.1} parent=0 // pred_check
    _
  $region35: #{encoder_forward.1} parent=0 // pred_check_branch
    %6620 = sbr.rel (0) target = $region37
  $region36: #{encoder_forward.1} parent=0 // pred_region
    _
  $region37: #{encoder_forward.1} parent=0 // pred_fallthru
    _

</llo_original>
